<compile_context>
chip_gen: v5e
topology: v5e:2x2
jax: 0.10.0
libtpu: 0.0.40
codegen_flags: <defaults>
</compile_context>

<pallas_src>
import functools

import jax
import jax.numpy as jnp
from jax import lax
from jax.experimental import pallas as pl
from jax.experimental.pallas import tpu as pltpu

LN_EPS = 1e-5  # nn.LayerNorm default eps


# ---------------------------------------------------------------------------
# In-kernel helpers (f32 math)
# ---------------------------------------------------------------------------
def _layernorm(x, gamma, beta):
    # x: (N, D), gamma/beta: (1, D); biased variance (matches nn.LayerNorm)
    mu = jnp.mean(x, axis=-1, keepdims=True)
    xc = x - mu
    var = jnp.mean(xc * xc, axis=-1, keepdims=True)
    return xc * lax.rsqrt(var + LN_EPS) * gamma + beta


def _gelu_tanh(x):
    # tanh-approximate GELU: 0.5*x*(1+tanh(sqrt(2/pi)*(x+0.044715*x^3)))
    c = 0.7978845608028654
    return 0.5 * x * (1.0 + jnp.tanh(c * (x + 0.044715 * x * x * x)))


# ---------------------------------------------------------------------------
# Fused per-layer kernel:
#   y   = x + to_out( Attention( LayerNorm(x) ) )
#   out = y + W2 @ GELU( W1 @ LayerNorm(y) + b1 ) + b2
# ---------------------------------------------------------------------------
def layer_kernel(x_ref, ag_ref, ab_ref, wqkv_ref, wo_ref, bo_ref,
                 fg_ref, fb_ref, w1_ref, b1_ref, w2_ref, b2_ref,
                 o_ref, q_scr, k_scr, v_scr, ctx_scr, *, heads, dim_head):
    f32 = jnp.float32
    mx = q_scr.dtype                      # matmul feed dtype (bf16 by default)
    inner = heads * dim_head
    scale = dim_head ** -0.5

    x = x_ref[0].astype(f32)                                          # (N, D)

    # ----------------- Attention sub-block -----------------
    xn = _layernorm(x, ag_ref[...].astype(f32), ab_ref[...].astype(f32))
    # single dense QKV projection (contract D, 3*H*Dh output lanes), bf16 MXU
    qkv = jnp.dot(xn.astype(mx), wqkv_ref[...],
                  preferred_element_type=f32)                         # (N, 3*inner) f32

    # stage q/k/v head-major (H, N, Dh) into VMEM scratch; fold 1/sqrt(Dh)
    # into q (O(N*inner) muls instead of O(H*N^2)).
    for h in range(heads):
        lo = h * dim_head
        q_scr[h] = (qkv[:, lo:lo + dim_head] * scale).astype(mx)
        k_scr[h] = qkv[:, inner + lo:inner + lo + dim_head].astype(mx)
        v_scr[h] = qkv[:, 2 * inner + lo:2 * inner + lo + dim_head].astype(mx)

    # head-batched attention matmuls (leading batch dim lowers cleanly)
    s = jnp.einsum('hqd,hkd->hqk', q_scr[...], k_scr[...],
                   preferred_element_type=f32)                        # (H, N, N) f32
    m = jnp.max(s, axis=-1, keepdims=True)
    e = jnp.exp(s - m)
    p = e * pl.reciprocal(jnp.sum(e, axis=-1, keepdims=True), approx=True)
    ctx = jnp.einsum('hqk,hkd->hqd', p.astype(mx), v_scr[...],
                     preferred_element_type=f32)                      # (H, N, Dh) f32

    # dense output projection: stage ctx -> (N, inner) scratch, ONE matmul
    # against row-major Wo (contraction depth = inner, no concatenate).
    for h in range(heads):
        ctx_scr[:, h * dim_head:(h + 1) * dim_head] = ctx[h].astype(mx)
    attn_out = jnp.dot(ctx_scr[...], wo_ref[...], preferred_element_type=f32)
    y = x + attn_out + bo_ref[...].astype(f32)                        # residual (f32)

    # ----------------- FeedForward sub-block -----------------
    yn = _layernorm(y, fg_ref[...].astype(f32), fb_ref[...].astype(f32))
    hid = jnp.dot(yn.astype(mx), w1_ref[...],
                  preferred_element_type=f32) + b1_ref[...].astype(f32)
    hid = _gelu_tanh(hid)
    z = jnp.dot(hid.astype(mx), w2_ref[...],
                preferred_element_type=f32) + b2_ref[...].astype(f32)
    o_ref[0] = (y + z).astype(o_ref.dtype)                            # residual


# ---------------------------------------------------------------------------
# Wrappers
# ---------------------------------------------------------------------------
def _const_spec(shape):
    # grid-constant operand: constant index_map + single-buffered pipeline
    # (no point double-buffering weights that are DMA'd once).
    n = len(shape)
    return pl.BlockSpec(shape, lambda b, _n=n: (0,) * _n,
                        pipeline_mode=pl.Buffered(1))


def _vmem_limit_bytes(default=48 * 1024 * 1024):
    # generation-aware scoped-VMEM ceiling: ~7/8 of physical capacity
    # (~112 MiB on v5e/v6e, ~56 MiB on v7x); safe fallback if query fails.
    try:
        cap = getattr(pltpu.get_tpu_info(), "vmem_capacity_bytes", None)
        if cap:
            return int(cap) * 7 // 8
    except Exception:
        pass
    return default


def transformer_layer(x, attn_p, ffn_p, *, heads, dim_head,
                      matmul_dtype=jnp.bfloat16):
    B, N, D = x.shape
    inner = heads * dim_head
    mlp = ffn_p["w1"].shape[1]

    # weights feed the MXU in bf16 (no-op cast if already stored bf16);
    # LN params / biases stay f32 (added to f32 values in-kernel).
    wqkv = attn_p["wqkv"].astype(matmul_dtype)
    wo = attn_p["wo"].astype(matmul_dtype)
    w1 = ffn_p["w1"].astype(matmul_dtype)
    w2 = ffn_p["w2"].astype(matmul_dtype)

    kernel = functools.partial(layer_kernel, heads=heads, dim_head=dim_head)
    return pl.pallas_call(
        kernel,
        out_shape=jax.ShapeDtypeStruct((B, N, D), x.dtype),
        grid=(B,),
        in_specs=[
            pl.BlockSpec((1, N, D), lambda b: (b, 0, 0)),     # x (pipelined)
            _const_spec((1, D)),                              # attn LN gamma
            _const_spec((1, D)),                              # attn LN beta
            _const_spec((D, 3 * inner)),                      # W_qkv
            _const_spec((inner, D)),                          # W_out (row-major)
            _const_spec((1, D)),                              # b_out
            _const_spec((1, D)),                              # ffn LN gamma
            _const_spec((1, D)),                              # ffn LN beta
            _const_spec((D, mlp)),                            # W1
            _const_spec((1, mlp)),                            # b1
            _const_spec((mlp, D)),                            # W2
            _const_spec((1, D)),                              # b2
        ],
        out_specs=pl.BlockSpec((1, N, D), lambda b: (b, 0, 0)),
        scratch_shapes=[
            pltpu.VMEM((heads, N, dim_head), matmul_dtype),   # q (head-major)
            pltpu.VMEM((heads, N, dim_head), matmul_dtype),   # k
            pltpu.VMEM((heads, N, dim_head), matmul_dtype),   # v
            pltpu.VMEM((N, inner), matmul_dtype),             # staged ctx
        ],
        compiler_params=pltpu.CompilerParams(
            dimension_semantics=("parallel",),
            vmem_limit_bytes=_vmem_limit_bytes(),
        ),
    )(x, attn_p["ln_g"], attn_p["ln_b"], wqkv, wo, attn_p["bo"],
      ffn_p["ln_g"], ffn_p["ln_b"], w1, ffn_p["b1"], w2, ffn_p["b2"])


def transformer_forward(x, params, *, heads, dim_head,
                        matmul_dtype=jnp.bfloat16):
    # Mirrors: for attn, ff in self.layers: x = attn(x); x = ff(x)
    for layer in params:
        x = transformer_layer(x, layer["attn"], layer["ffn"],
                              heads=heads, dim_head=dim_head,
                              matmul_dtype=matmul_dtype)
    return x


# ---------------------------------------------------------------------------
# Deterministic parameter construction (synthetic, not a checkpoint load)
# ---------------------------------------------------------------------------
def init_params(key, *, dim, depth, heads, dim_head, mlp_dim,
                dtype=jnp.float32, matmul_dtype=jnp.bfloat16):
    inner = heads * dim_head
    project_out = not (heads == 1 and dim_head == dim)
    params = []
    for _ in range(depth):
        key, k1, k2, k3, k4, k5, k6 = jax.random.split(key, 7)
        if project_out:
            wo = (jax.random.normal(k2, (inner, dim)) * 0.02).astype(matmul_dtype)
            bo = (jax.random.normal(k3, (1, dim)) * 0.02).astype(dtype)
        else:
            # Attention.to_out is nn.Identity() in this configuration
            wo = jnp.eye(inner, dim, dtype=matmul_dtype)
            bo = jnp.zeros((1, dim), dtype)
        attn = {
            "ln_g": jnp.ones((1, dim), dtype),
            "ln_b": jnp.zeros((1, dim), dtype),
            "wqkv": (jax.random.normal(k1, (dim, 3 * inner)) * 0.02).astype(matmul_dtype),
            "wo":   wo,
            "bo":   bo,
        }
        ffn = {
            "ln_g": jnp.ones((1, dim), dtype),
            "ln_b": jnp.zeros((1, dim), dtype),
            "w1": (jax.random.normal(k4, (dim, mlp_dim)) * 0.02).astype(matmul_dtype),
            "b1": (jax.random.normal(k5, (1, mlp_dim)) * 0.02).astype(dtype),
            "w2": (jax.random.normal(k6, (mlp_dim, dim)) * 0.02).astype(matmul_dtype),
            "b2": jnp.zeros((1, dim), dtype),
        }
        params.append({"attn": attn, "ffn": ffn})
    return params


if __name__ == "__main__":
    # Small shapes consistent with Transformer(dim, depth, heads, dim_head, mlp_dim).
    # D = 128 keeps the output lane-dense (v5e single-vst-slot friendliness).
    B, N = 2, 8
    dim, depth, heads, dim_head, mlp_dim = 128, 2, 4, 32, 256

    key = jax.random.PRNGKey(0)
    key, kx = jax.random.split(key)
    x = jax.random.normal(kx, (B, N, dim), dtype=jnp.float32)

    params = init_params(key, dim=dim, depth=depth, heads=heads,
                         dim_head=dim_head, mlp_dim=mlp_dim)

    fwd = jax.jit(functools.partial(transformer_forward,
                                    heads=heads, dim_head=dim_head))
    out = fwd(x, params)
    jax.block_until_ready(out)

    assert out.shape == (B, N, dim) and out.dtype == jnp.float32
    assert bool(jnp.all(jnp.isfinite(out)))
    print("KERNEL_OK")
</pallas_src>

<mosaic_0001>
module attributes {stable_mosaic.version = 11 : i64} {
  func.func @layer_kernel(%arg0: i32, %arg1: memref<1x8x128xf32, #tpu.memory_space<vmem>>, %arg2: memref<1x128xf32, #tpu.memory_space<vmem>>, %arg3: memref<1x128xf32, #tpu.memory_space<vmem>>, %arg4: memref<128x384xbf16, #tpu.memory_space<vmem>>, %arg5: memref<128x128xbf16, #tpu.memory_space<vmem>>, %arg6: memref<1x128xf32, #tpu.memory_space<vmem>>, %arg7: memref<1x128xf32, #tpu.memory_space<vmem>>, %arg8: memref<1x128xf32, #tpu.memory_space<vmem>>, %arg9: memref<128x256xbf16, #tpu.memory_space<vmem>>, %arg10: memref<1x256xf32, #tpu.memory_space<vmem>>, %arg11: memref<256x128xbf16, #tpu.memory_space<vmem>>, %arg12: memref<1x128xf32, #tpu.memory_space<vmem>>, %arg13: memref<1x8x128xf32, #tpu.memory_space<vmem>>, %arg14: memref<4x8x32xbf16, #tpu.memory_space<vmem>>, %arg15: memref<4x8x32xbf16, #tpu.memory_space<vmem>>, %arg16: memref<4x8x32xbf16, #tpu.memory_space<vmem>>, %arg17: memref<8x128xbf16, #tpu.memory_space<vmem>>) attributes {dimension_semantics = [#tpu.dimension_semantics<parallel>], iteration_bounds = array<i64: 2>, scalar_prefetch = 0 : i64, scratch_operands = 4 : i64, tpu.core_type = #tpu.core_type<tc>, window_params = [{transform_indices = @transform_0, window_bounds = array<i64: 1, 8, 128>}, {pipeline_mode = #tpu.pipeline_mode<synchronous>, transform_indices = @transform_1, window_bounds = array<i64: 1, 128>}, {pipeline_mode = #tpu.pipeline_mode<synchronous>, transform_indices = @transform_2, window_bounds = array<i64: 1, 128>}, {pipeline_mode = #tpu.pipeline_mode<synchronous>, transform_indices = @transform_3, window_bounds = array<i64: 128, 384>}, {pipeline_mode = #tpu.pipeline_mode<synchronous>, transform_indices = @transform_4, window_bounds = array<i64: 128, 128>}, {pipeline_mode = #tpu.pipeline_mode<synchronous>, transform_indices = @transform_5, window_bounds = array<i64: 1, 128>}, {pipeline_mode = #tpu.pipeline_mode<synchronous>, transform_indices = @transform_6, window_bounds = array<i64: 1, 128>}, {pipeline_mode = #tpu.pipeline_mode<synchronous>, transform_indices = @transform_7, window_bounds = array<i64: 1, 128>}, {pipeline_mode = #tpu.pipeline_mode<synchronous>, transform_indices = @transform_8, window_bounds = array<i64: 128, 256>}, {pipeline_mode = #tpu.pipeline_mode<synchronous>, transform_indices = @transform_9, window_bounds = array<i64: 1, 256>}, {pipeline_mode = #tpu.pipeline_mode<synchronous>, transform_indices = @transform_10, window_bounds = array<i64: 256, 128>}, {pipeline_mode = #tpu.pipeline_mode<synchronous>, transform_indices = @transform_11, window_bounds = array<i64: 1, 128>}, {transform_indices = @transform_12, window_bounds = array<i64: 1, 8, 128>}]} {
    %c0 = arith.constant 0 : index
    %c0_0 = arith.constant 0 : index
    %c0_1 = arith.constant 0 : index
    %0 = vector.load %arg1[%c0, %c0_0, %c0_1] : memref<1x8x128xf32, #tpu.memory_space<vmem>>, vector<1x8x128xf32>
    %1 = vector.shape_cast %0 : vector<1x8x128xf32> to vector<8x128xf32>
    %c0_2 = arith.constant 0 : index
    %c0_3 = arith.constant 0 : index
    %2 = vector.load %arg2[%c0_2, %c0_3] : memref<1x128xf32, #tpu.memory_space<vmem>>, vector<1x128xf32>
    %c0_4 = arith.constant 0 : index
    %c0_5 = arith.constant 0 : index
    %3 = vector.load %arg3[%c0_4, %c0_5] : memref<1x128xf32, #tpu.memory_space<vmem>>, vector<1x128xf32>
    %cst = arith.constant dense<0.000000e+00> : vector<8xf32>
    %4 = vector.multi_reduction <add>, %1, %cst [1] : vector<8x128xf32> to vector<8xf32>
    %5 = vector.shape_cast %4 : vector<8xf32> to vector<8x1xf32>
    %cst_6 = arith.constant 1.280000e+02 : f32
    %6 = vector.broadcast %cst_6 : f32 to vector<8x1xf32>
    %7 = arith.divf %5, %6 : vector<8x1xf32>
    %8 = vector.broadcast %7 : vector<8x1xf32> to vector<8x128xf32>
    %9 = arith.subf %1, %8 : vector<8x128xf32>
    %10 = arith.mulf %9, %9 : vector<8x128xf32>
    %cst_7 = arith.constant dense<0.000000e+00> : vector<8xf32>
    %11 = vector.multi_reduction <add>, %10, %cst_7 [1] : vector<8x128xf32> to vector<8xf32>
    %12 = vector.shape_cast %11 : vector<8xf32> to vector<8x1xf32>
    %cst_8 = arith.constant 1.280000e+02 : f32
    %13 = vector.broadcast %cst_8 : f32 to vector<8x1xf32>
    %14 = arith.divf %12, %13 : vector<8x1xf32>
    %cst_9 = arith.constant 9.99999974E-6 : f32
    %15 = vector.broadcast %cst_9 : f32 to vector<8x1xf32>
    %16 = arith.addf %14, %15 : vector<8x1xf32>
    %17 = math.rsqrt %16 : vector<8x1xf32>
    %18 = vector.broadcast %17 : vector<8x1xf32> to vector<8x128xf32>
    %19 = arith.mulf %9, %18 : vector<8x128xf32>
    %20 = vector.broadcast %2 : vector<1x128xf32> to vector<8x128xf32>
    %21 = arith.mulf %19, %20 : vector<8x128xf32>
    %22 = vector.broadcast %3 : vector<1x128xf32> to vector<8x128xf32>
    %23 = arith.addf %21, %22 : vector<8x128xf32>
    %24 = arith.truncf %23 : vector<8x128xf32> to vector<8x128xbf16>
    %c0_10 = arith.constant 0 : index
    %c0_11 = arith.constant 0 : index
    %25 = vector.load %arg4[%c0_10, %c0_11] : memref<128x384xbf16, #tpu.memory_space<vmem>>, vector<128x384xbf16>
    %cst_12 = arith.constant dense<0.000000e+00> : vector<8x384xf32>
    %26 = tpu.matmul %24, %25, %cst_12 {dimension_numbers = #tpu.dot_dimension_numbers<[1], [0], [0], [1], [0, 0, 1, 1], [], []>} : vector<8x128xbf16>, vector<128x384xbf16>, vector<8x384xf32> -> vector<8x384xf32>
    %27 = vector.extract_strided_slice %26 {offsets = [0, 0], sizes = [8, 32], strides = [1, 1]} : vector<8x384xf32> to vector<8x32xf32>
    %cst_13 = arith.constant 0.176776692 : f32
    %28 = vector.broadcast %cst_13 : f32 to vector<8x32xf32>
    %29 = arith.mulf %27, %28 : vector<8x32xf32>
    %30 = arith.truncf %29 : vector<8x32xf32> to vector<8x32xbf16>
    %c0_14 = arith.constant 0 : index
    %c0_15 = arith.constant 0 : index
    %c0_16 = arith.constant 0 : index
    %31 = vector.load %arg14[%c0_14, %c0_15, %c0_16] : memref<4x8x32xbf16, #tpu.memory_space<vmem>>, vector<1x8x32xbf16>
    %32 = vector.shape_cast %31 : vector<1x8x32xbf16> to vector<8x32xbf16>
    %33 = vector.shape_cast %30 : vector<8x32xbf16> to vector<1x8x32xbf16>
    tpu.vector_store %arg14[%c0_14, %c0_15, %c0_16], %33 {strides = array<i32>} : memref<4x8x32xbf16, #tpu.memory_space<vmem>>, vector<1x8x32xbf16>,
    %34 = vector.extract_strided_slice %26 {offsets = [0, 128], sizes = [8, 32], strides = [1, 1]} : vector<8x384xf32> to vector<8x32xf32>
    %35 = arith.truncf %34 : vector<8x32xf32> to vector<8x32xbf16>
    %c0_17 = arith.constant 0 : index
    %c0_18 = arith.constant 0 : index
    %c0_19 = arith.constant 0 : index
    %36 = vector.load %arg15[%c0_17, %c0_18, %c0_19] : memref<4x8x32xbf16, #tpu.memory_space<vmem>>, vector<1x8x32xbf16>
    %37 = vector.shape_cast %36 : vector<1x8x32xbf16> to vector<8x32xbf16>
    %38 = vector.shape_cast %35 : vector<8x32xbf16> to vector<1x8x32xbf16>
    tpu.vector_store %arg15[%c0_17, %c0_18, %c0_19], %38 {strides = array<i32>} : memref<4x8x32xbf16, #tpu.memory_space<vmem>>, vector<1x8x32xbf16>,
    %39 = vector.extract_strided_slice %26 {offsets = [0, 256], sizes = [8, 32], strides = [1, 1]} : vector<8x384xf32> to vector<8x32xf32>
    %40 = arith.truncf %39 : vector<8x32xf32> to vector<8x32xbf16>
    %c0_20 = arith.constant 0 : index
    %c0_21 = arith.constant 0 : index
    %c0_22 = arith.constant 0 : index
    %41 = vector.load %arg16[%c0_20, %c0_21, %c0_22] : memref<4x8x32xbf16, #tpu.memory_space<vmem>>, vector<1x8x32xbf16>
    %42 = vector.shape_cast %41 : vector<1x8x32xbf16> to vector<8x32xbf16>
    %43 = vector.shape_cast %40 : vector<8x32xbf16> to vector<1x8x32xbf16>
    tpu.vector_store %arg16[%c0_20, %c0_21, %c0_22], %43 {strides = array<i32>} : memref<4x8x32xbf16, #tpu.memory_space<vmem>>, vector<1x8x32xbf16>,
    %44 = vector.extract_strided_slice %26 {offsets = [0, 32], sizes = [8, 32], strides = [1, 1]} : vector<8x384xf32> to vector<8x32xf32>
    %cst_23 = arith.constant 0.176776692 : f32
    %45 = vector.broadcast %cst_23 : f32 to vector<8x32xf32>
    %46 = arith.mulf %44, %45 : vector<8x32xf32>
    %47 = arith.truncf %46 : vector<8x32xf32> to vector<8x32xbf16>
    %c1 = arith.constant 1 : index
    %c0_24 = arith.constant 0 : index
    %c0_25 = arith.constant 0 : index
    %48 = vector.load %arg14[%c1, %c0_24, %c0_25] : memref<4x8x32xbf16, #tpu.memory_space<vmem>>, vector<1x8x32xbf16>
    %49 = vector.shape_cast %48 : vector<1x8x32xbf16> to vector<8x32xbf16>
    %50 = vector.shape_cast %47 : vector<8x32xbf16> to vector<1x8x32xbf16>
    tpu.vector_store %arg14[%c1, %c0_24, %c0_25], %50 {strides = array<i32>} : memref<4x8x32xbf16, #tpu.memory_space<vmem>>, vector<1x8x32xbf16>,
    %51 = vector.extract_strided_slice %26 {offsets = [0, 160], sizes = [8, 32], strides = [1, 1]} : vector<8x384xf32> to vector<8x32xf32>
    %52 = arith.truncf %51 : vector<8x32xf32> to vector<8x32xbf16>
    %c1_26 = arith.constant 1 : index
    %c0_27 = arith.constant 0 : index
    %c0_28 = arith.constant 0 : index
    %53 = vector.load %arg15[%c1_26, %c0_27, %c0_28] : memref<4x8x32xbf16, #tpu.memory_space<vmem>>, vector<1x8x32xbf16>
    %54 = vector.shape_cast %53 : vector<1x8x32xbf16> to vector<8x32xbf16>
    %55 = vector.shape_cast %52 : vector<8x32xbf16> to vector<1x8x32xbf16>
    tpu.vector_store %arg15[%c1_26, %c0_27, %c0_28], %55 {strides = array<i32>} : memref<4x8x32xbf16, #tpu.memory_space<vmem>>, vector<1x8x32xbf16>,
    %56 = vector.extract_strided_slice %26 {offsets = [0, 288], sizes = [8, 32], strides = [1, 1]} : vector<8x384xf32> to vector<8x32xf32>
    %57 = arith.truncf %56 : vector<8x32xf32> to vector<8x32xbf16>
    %c1_29 = arith.constant 1 : index
    %c0_30 = arith.constant 0 : index
    %c0_31 = arith.constant 0 : index
    %58 = vector.load %arg16[%c1_29, %c0_30, %c0_31] : memref<4x8x32xbf16, #tpu.memory_space<vmem>>, vector<1x8x32xbf16>
    %59 = vector.shape_cast %58 : vector<1x8x32xbf16> to vector<8x32xbf16>
    %60 = vector.shape_cast %57 : vector<8x32xbf16> to vector<1x8x32xbf16>
    tpu.vector_store %arg16[%c1_29, %c0_30, %c0_31], %60 {strides = array<i32>} : memref<4x8x32xbf16, #tpu.memory_space<vmem>>, vector<1x8x32xbf16>,
    %61 = vector.extract_strided_slice %26 {offsets = [0, 64], sizes = [8, 32], strides = [1, 1]} : vector<8x384xf32> to vector<8x32xf32>
    %cst_32 = arith.constant 0.176776692 : f32
    %62 = vector.broadcast %cst_32 : f32 to vector<8x32xf32>
    %63 = arith.mulf %61, %62 : vector<8x32xf32>
    %64 = arith.truncf %63 : vector<8x32xf32> to vector<8x32xbf16>
    %c2 = arith.constant 2 : index
    %c0_33 = arith.constant 0 : index
    %c0_34 = arith.constant 0 : index
    %65 = vector.load %arg14[%c2, %c0_33, %c0_34] : memref<4x8x32xbf16, #tpu.memory_space<vmem>>, vector<1x8x32xbf16>
    %66 = vector.shape_cast %65 : vector<1x8x32xbf16> to vector<8x32xbf16>
    %67 = vector.shape_cast %64 : vector<8x32xbf16> to vector<1x8x32xbf16>
    tpu.vector_store %arg14[%c2, %c0_33, %c0_34], %67 {strides = array<i32>} : memref<4x8x32xbf16, #tpu.memory_space<vmem>>, vector<1x8x32xbf16>,
    %68 = vector.extract_strided_slice %26 {offsets = [0, 192], sizes = [8, 32], strides = [1, 1]} : vector<8x384xf32> to vector<8x32xf32>
    %69 = arith.truncf %68 : vector<8x32xf32> to vector<8x32xbf16>
    %c2_35 = arith.constant 2 : index
    %c0_36 = arith.constant 0 : index
    %c0_37 = arith.constant 0 : index
    %70 = vector.load %arg15[%c2_35, %c0_36, %c0_37] : memref<4x8x32xbf16, #tpu.memory_space<vmem>>, vector<1x8x32xbf16>
    %71 = vector.shape_cast %70 : vector<1x8x32xbf16> to vector<8x32xbf16>
    %72 = vector.shape_cast %69 : vector<8x32xbf16> to vector<1x8x32xbf16>
    tpu.vector_store %arg15[%c2_35, %c0_36, %c0_37], %72 {strides = array<i32>} : memref<4x8x32xbf16, #tpu.memory_space<vmem>>, vector<1x8x32xbf16>,
    %73 = vector.extract_strided_slice %26 {offsets = [0, 320], sizes = [8, 32], strides = [1, 1]} : vector<8x384xf32> to vector<8x32xf32>
    %74 = arith.truncf %73 : vector<8x32xf32> to vector<8x32xbf16>
    %c2_38 = arith.constant 2 : index
    %c0_39 = arith.constant 0 : index
    %c0_40 = arith.constant 0 : index
    %75 = vector.load %arg16[%c2_38, %c0_39, %c0_40] : memref<4x8x32xbf16, #tpu.memory_space<vmem>>, vector<1x8x32xbf16>
    %76 = vector.shape_cast %75 : vector<1x8x32xbf16> to vector<8x32xbf16>
    %77 = vector.shape_cast %74 : vector<8x32xbf16> to vector<1x8x32xbf16>
    tpu.vector_store %arg16[%c2_38, %c0_39, %c0_40], %77 {strides = array<i32>} : memref<4x8x32xbf16, #tpu.memory_space<vmem>>, vector<1x8x32xbf16>,
    %78 = vector.extract_strided_slice %26 {offsets = [0, 96], sizes = [8, 32], strides = [1, 1]} : vector<8x384xf32> to vector<8x32xf32>
    %cst_41 = arith.constant 0.176776692 : f32
    %79 = vector.broadcast %cst_41 : f32 to vector<8x32xf32>
    %80 = arith.mulf %78, %79 : vector<8x32xf32>
    %81 = arith.truncf %80 : vector<8x32xf32> to vector<8x32xbf16>
    %c3 = arith.constant 3 : index
    %c0_42 = arith.constant 0 : index
    %c0_43 = arith.constant 0 : index
    %82 = vector.load %arg14[%c3, %c0_42, %c0_43] : memref<4x8x32xbf16, #tpu.memory_space<vmem>>, vector<1x8x32xbf16>
    %83 = vector.shape_cast %82 : vector<1x8x32xbf16> to vector<8x32xbf16>
    %84 = vector.shape_cast %81 : vector<8x32xbf16> to vector<1x8x32xbf16>
    tpu.vector_store %arg14[%c3, %c0_42, %c0_43], %84 {strides = array<i32>} : memref<4x8x32xbf16, #tpu.memory_space<vmem>>, vector<1x8x32xbf16>,
    %85 = vector.extract_strided_slice %26 {offsets = [0, 224], sizes = [8, 32], strides = [1, 1]} : vector<8x384xf32> to vector<8x32xf32>
    %86 = arith.truncf %85 : vector<8x32xf32> to vector<8x32xbf16>
    %c3_44 = arith.constant 3 : index
    %c0_45 = arith.constant 0 : index
    %c0_46 = arith.constant 0 : index
    %87 = vector.load %arg15[%c3_44, %c0_45, %c0_46] : memref<4x8x32xbf16, #tpu.memory_space<vmem>>, vector<1x8x32xbf16>
    %88 = vector.shape_cast %87 : vector<1x8x32xbf16> to vector<8x32xbf16>
    %89 = vector.shape_cast %86 : vector<8x32xbf16> to vector<1x8x32xbf16>
    tpu.vector_store %arg15[%c3_44, %c0_45, %c0_46], %89 {strides = array<i32>} : memref<4x8x32xbf16, #tpu.memory_space<vmem>>, vector<1x8x32xbf16>,
    %90 = vector.extract_strided_slice %26 {offsets = [0, 352], sizes = [8, 32], strides = [1, 1]} : vector<8x384xf32> to vector<8x32xf32>
    %91 = arith.truncf %90 : vector<8x32xf32> to vector<8x32xbf16>
    %c3_47 = arith.constant 3 : index
    %c0_48 = arith.constant 0 : index
    %c0_49 = arith.constant 0 : index
    %92 = vector.load %arg16[%c3_47, %c0_48, %c0_49] : memref<4x8x32xbf16, #tpu.memory_space<vmem>>, vector<1x8x32xbf16>
    %93 = vector.shape_cast %92 : vector<1x8x32xbf16> to vector<8x32xbf16>
    %94 = vector.shape_cast %91 : vector<8x32xbf16> to vector<1x8x32xbf16>
    tpu.vector_store %arg16[%c3_47, %c0_48, %c0_49], %94 {strides = array<i32>} : memref<4x8x32xbf16, #tpu.memory_space<vmem>>, vector<1x8x32xbf16>,
    %c0_50 = arith.constant 0 : index
    %c0_51 = arith.constant 0 : index
    %c0_52 = arith.constant 0 : index
    %95 = vector.load %arg14[%c0_50, %c0_51, %c0_52] : memref<4x8x32xbf16, #tpu.memory_space<vmem>>, vector<4x8x32xbf16>
    %c0_53 = arith.constant 0 : index
    %c0_54 = arith.constant 0 : index
    %c0_55 = arith.constant 0 : index
    %96 = vector.load %arg15[%c0_53, %c0_54, %c0_55] : memref<4x8x32xbf16, #tpu.memory_space<vmem>>, vector<4x8x32xbf16>
    "tpu.trace_start"() <{level = 10 : i32, message = "hqd,hkd->hqk"}> : () -> ()
    %cst_56 = arith.constant dense<0.000000e+00> : vector<4x8x8xf32>
    %97 = tpu.matmul %95, %96, %cst_56 {dimension_numbers = #tpu.dot_dimension_numbers<[2], [2], [1], [1], [0, 0, 0, 1, 1, 1], [0], [0]>} : vector<4x8x32xbf16>, vector<4x8x32xbf16>, vector<4x8x8xf32> -> vector<4x8x8xf32>
    "tpu.trace_stop"() : () -> ()
    %cst_57 = arith.constant dense<0xFF800000> : vector<4x8xf32>
    %98 = vector.multi_reduction <maximumf>, %97, %cst_57 [2] : vector<4x8x8xf32> to vector<4x8xf32>
    %99 = vector.shape_cast %98 : vector<4x8xf32> to vector<4x8x1xf32>
    %100 = vector.broadcast %99 : vector<4x8x1xf32> to vector<4x8x8xf32>
    %101 = arith.subf %97, %100 : vector<4x8x8xf32>
    %102 = math.exp %101 : vector<4x8x8xf32>
    %cst_58 = arith.constant dense<0.000000e+00> : vector<4x8xf32>
    %103 = vector.multi_reduction <add>, %102, %cst_58 [2] : vector<4x8x8xf32> to vector<4x8xf32>
    %104 = vector.shape_cast %103 : vector<4x8xf32> to vector<4x8x1xf32>
    %105 = tpu.reciprocal %104 {approx = true} : vector<4x8x1xf32> -> vector<4x8x1xf32>
    %106 = vector.broadcast %105 : vector<4x8x1xf32> to vector<4x8x8xf32>
    %107 = arith.mulf %102, %106 : vector<4x8x8xf32>
    %108 = arith.truncf %107 : vector<4x8x8xf32> to vector<4x8x8xbf16>
    %c0_59 = arith.constant 0 : index
    %c0_60 = arith.constant 0 : index
    %c0_61 = arith.constant 0 : index
    %109 = vector.load %arg16[%c0_59, %c0_60, %c0_61] : memref<4x8x32xbf16, #tpu.memory_space<vmem>>, vector<4x8x32xbf16>
    "tpu.trace_start"() <{level = 10 : i32, message = "hqk,hkd->hqd"}> : () -> ()
    %cst_62 = arith.constant dense<0.000000e+00> : vector<4x8x32xf32>
    %110 = tpu.matmul %108, %109, %cst_62 {dimension_numbers = #tpu.dot_dimension_numbers<[2], [1], [1], [2], [0, 0, 0, 1, 1, 2], [0], [0]>} : vector<4x8x8xbf16>, vector<4x8x32xbf16>, vector<4x8x32xf32> -> vector<4x8x32xf32>
    "tpu.trace_stop"() : () -> ()
    %111 = vector.extract_strided_slice %110 {offsets = [0, 0, 0], sizes = [1, 8, 32], strides = [1, 1, 1]} : vector<4x8x32xf32> to vector<1x8x32xf32>
    %112 = vector.shape_cast %111 : vector<1x8x32xf32> to vector<8x32xf32>
    %113 = arith.truncf %112 : vector<8x32xf32> to vector<8x32xbf16>
    %c0_63 = arith.constant 0 : index
    %c0_64 = arith.constant 0 : index
    %114 = vector.load %arg17[%c0_63, %c0_64] : memref<8x128xbf16, #tpu.memory_space<vmem>>, vector<8x32xbf16>
    tpu.vector_store %arg17[%c0_63, %c0_64], %113 {strides = array<i32>} : memref<8x128xbf16, #tpu.memory_space<vmem>>, vector<8x32xbf16>,
    %115 = vector.extract_strided_slice %110 {offsets = [1, 0, 0], sizes = [1, 8, 32], strides = [1, 1, 1]} : vector<4x8x32xf32> to vector<1x8x32xf32>
    %116 = vector.shape_cast %115 : vector<1x8x32xf32> to vector<8x32xf32>
    %117 = arith.truncf %116 : vector<8x32xf32> to vector<8x32xbf16>
    %c0_65 = arith.constant 0 : index
    %c32 = arith.constant 32 : index
    %118 = vector.load %arg17[%c0_65, %c32] : memref<8x128xbf16, #tpu.memory_space<vmem>>, vector<8x32xbf16>
    tpu.vector_store %arg17[%c0_65, %c32], %117 {strides = array<i32>} : memref<8x128xbf16, #tpu.memory_space<vmem>>, vector<8x32xbf16>,
    %119 = vector.extract_strided_slice %110 {offsets = [2, 0, 0], sizes = [1, 8, 32], strides = [1, 1, 1]} : vector<4x8x32xf32> to vector<1x8x32xf32>
    %120 = vector.shape_cast %119 : vector<1x8x32xf32> to vector<8x32xf32>
    %121 = arith.truncf %120 : vector<8x32xf32> to vector<8x32xbf16>
    %c0_66 = arith.constant 0 : index
    %c64 = arith.constant 64 : index
    %122 = vector.load %arg17[%c0_66, %c64] : memref<8x128xbf16, #tpu.memory_space<vmem>>, vector<8x32xbf16>
    tpu.vector_store %arg17[%c0_66, %c64], %121 {strides = array<i32>} : memref<8x128xbf16, #tpu.memory_space<vmem>>, vector<8x32xbf16>,
    %123 = vector.extract_strided_slice %110 {offsets = [3, 0, 0], sizes = [1, 8, 32], strides = [1, 1, 1]} : vector<4x8x32xf32> to vector<1x8x32xf32>
    %124 = vector.shape_cast %123 : vector<1x8x32xf32> to vector<8x32xf32>
    %125 = arith.truncf %124 : vector<8x32xf32> to vector<8x32xbf16>
    %c0_67 = arith.constant 0 : index
    %c96 = arith.constant 96 : index
    %126 = vector.load %arg17[%c0_67, %c96] : memref<8x128xbf16, #tpu.memory_space<vmem>>, vector<8x32xbf16>
    tpu.vector_store %arg17[%c0_67, %c96], %125 {strides = array<i32>} : memref<8x128xbf16, #tpu.memory_space<vmem>>, vector<8x32xbf16>,
    %c0_68 = arith.constant 0 : index
    %c0_69 = arith.constant 0 : index
    %127 = vector.load %arg17[%c0_68, %c0_69] : memref<8x128xbf16, #tpu.memory_space<vmem>>, vector<8x128xbf16>
    %c0_70 = arith.constant 0 : index
    %c0_71 = arith.constant 0 : index
    %128 = vector.load %arg5[%c0_70, %c0_71] : memref<128x128xbf16, #tpu.memory_space<vmem>>, vector<128x128xbf16>
    %cst_72 = arith.constant dense<0.000000e+00> : vector<8x128xf32>
    %129 = tpu.matmul %127, %128, %cst_72 {dimension_numbers = #tpu.dot_dimension_numbers<[1], [0], [0], [1], [0, 0, 1, 1], [], []>} : vector<8x128xbf16>, vector<128x128xbf16>, vector<8x128xf32> -> vector<8x128xf32>
    %130 = arith.addf %1, %129 : vector<8x128xf32>
    %c0_73 = arith.constant 0 : index
    %c0_74 = arith.constant 0 : index
    %131 = vector.load %arg6[%c0_73, %c0_74] : memref<1x128xf32, #tpu.memory_space<vmem>>, vector<1x128xf32>
    %132 = vector.broadcast %131 : vector<1x128xf32> to vector<8x128xf32>
    %133 = arith.addf %130, %132 : vector<8x128xf32>
    %c0_75 = arith.constant 0 : index
    %c0_76 = arith.constant 0 : index
    %134 = vector.load %arg7[%c0_75, %c0_76] : memref<1x128xf32, #tpu.memory_space<vmem>>, vector<1x128xf32>
    %c0_77 = arith.constant 0 : index
    %c0_78 = arith.constant 0 : index
    %135 = vector.load %arg8[%c0_77, %c0_78] : memref<1x128xf32, #tpu.memory_space<vmem>>, vector<1x128xf32>
    %cst_79 = arith.constant dense<0.000000e+00> : vector<8xf32>
    %136 = vector.multi_reduction <add>, %133, %cst_79 [1] : vector<8x128xf32> to vector<8xf32>
    %137 = vector.shape_cast %136 : vector<8xf32> to vector<8x1xf32>
    %cst_80 = arith.constant 1.280000e+02 : f32
    %138 = vector.broadcast %cst_80 : f32 to vector<8x1xf32>
    %139 = arith.divf %137, %138 : vector<8x1xf32>
    %140 = vector.broadcast %139 : vector<8x1xf32> to vector<8x128xf32>
    %141 = arith.subf %133, %140 : vector<8x128xf32>
    %142 = arith.mulf %141, %141 : vector<8x128xf32>
    %cst_81 = arith.constant dense<0.000000e+00> : vector<8xf32>
    %143 = vector.multi_reduction <add>, %142, %cst_81 [1] : vector<8x128xf32> to vector<8xf32>
    %144 = vector.shape_cast %143 : vector<8xf32> to vector<8x1xf32>
    %cst_82 = arith.constant 1.280000e+02 : f32
    %145 = vector.broadcast %cst_82 : f32 to vector<8x1xf32>
    %146 = arith.divf %144, %145 : vector<8x1xf32>
    %cst_83 = arith.constant 9.99999974E-6 : f32
    %147 = vector.broadcast %cst_83 : f32 to vector<8x1xf32>
    %148 = arith.addf %146, %147 : vector<8x1xf32>
    %149 = math.rsqrt %148 : vector<8x1xf32>
    %150 = vector.broadcast %149 : vector<8x1xf32> to vector<8x128xf32>
    %151 = arith.mulf %141, %150 : vector<8x128xf32>
    %152 = vector.broadcast %134 : vector<1x128xf32> to vector<8x128xf32>
    %153 = arith.mulf %151, %152 : vector<8x128xf32>
    %154 = vector.broadcast %135 : vector<1x128xf32> to vector<8x128xf32>
    %155 = arith.addf %153, %154 : vector<8x128xf32>
    %156 = arith.truncf %155 : vector<8x128xf32> to vector<8x128xbf16>
    %c0_84 = arith.constant 0 : index
    %c0_85 = arith.constant 0 : index
    %157 = vector.load %arg9[%c0_84, %c0_85] : memref<128x256xbf16, #tpu.memory_space<vmem>>, vector<128x256xbf16>
    %cst_86 = arith.constant dense<0.000000e+00> : vector<8x256xf32>
    %158 = tpu.matmul %156, %157, %cst_86 {dimension_numbers = #tpu.dot_dimension_numbers<[1], [0], [0], [1], [0, 0, 1, 1], [], []>} : vector<8x128xbf16>, vector<128x256xbf16>, vector<8x256xf32> -> vector<8x256xf32>
    %c0_87 = arith.constant 0 : index
    %c0_88 = arith.constant 0 : index
    %159 = vector.load %arg10[%c0_87, %c0_88] : memref<1x256xf32, #tpu.memory_space<vmem>>, vector<1x256xf32>
    %160 = vector.broadcast %159 : vector<1x256xf32> to vector<8x256xf32>
    %161 = arith.addf %158, %160 : vector<8x256xf32>
    %cst_89 = arith.constant 5.000000e-01 : f32
    %162 = vector.broadcast %cst_89 : f32 to vector<8x256xf32>
    %163 = arith.mulf %162, %161 : vector<8x256xf32>
    %cst_90 = arith.constant 4.471500e-02 : f32
    %164 = vector.broadcast %cst_90 : f32 to vector<8x256xf32>
    %165 = arith.mulf %164, %161 : vector<8x256xf32>
    %166 = arith.mulf %165, %161 : vector<8x256xf32>
    %167 = arith.mulf %166, %161 : vector<8x256xf32>
    %168 = arith.addf %161, %167 : vector<8x256xf32>
    %cst_91 = arith.constant 0.797884583 : f32
    %169 = vector.broadcast %cst_91 : f32 to vector<8x256xf32>
    %170 = arith.mulf %169, %168 : vector<8x256xf32>
    %171 = math.tanh %170 : vector<8x256xf32>
    %cst_92 = arith.constant 1.000000e+00 : f32
    %172 = vector.broadcast %cst_92 : f32 to vector<8x256xf32>
    %173 = arith.addf %172, %171 : vector<8x256xf32>
    %174 = arith.mulf %163, %173 : vector<8x256xf32>
    %175 = arith.truncf %174 : vector<8x256xf32> to vector<8x256xbf16>
    %c0_93 = arith.constant 0 : index
    %c0_94 = arith.constant 0 : index
    %176 = vector.load %arg11[%c0_93, %c0_94] : memref<256x128xbf16, #tpu.memory_space<vmem>>, vector<256x128xbf16>
    %cst_95 = arith.constant dense<0.000000e+00> : vector<8x128xf32>
    %177 = tpu.matmul %175, %176, %cst_95 {dimension_numbers = #tpu.dot_dimension_numbers<[1], [0], [0], [1], [0, 0, 1, 1], [], []>} : vector<8x256xbf16>, vector<256x128xbf16>, vector<8x128xf32> -> vector<8x128xf32>
    %c0_96 = arith.constant 0 : index
    %c0_97 = arith.constant 0 : index
    %178 = vector.load %arg12[%c0_96, %c0_97] : memref<1x128xf32, #tpu.memory_space<vmem>>, vector<1x128xf32>
    %179 = vector.broadcast %178 : vector<1x128xf32> to vector<8x128xf32>
    %180 = arith.addf %177, %179 : vector<8x128xf32>
    %181 = arith.addf %133, %180 : vector<8x128xf32>
    %c0_98 = arith.constant 0 : index
    %c0_99 = arith.constant 0 : index
    %c0_100 = arith.constant 0 : index
    %182 = vector.load %arg13[%c0_98, %c0_99, %c0_100] : memref<1x8x128xf32, #tpu.memory_space<vmem>>, vector<1x8x128xf32>
    %183 = vector.shape_cast %182 : vector<1x8x128xf32> to vector<8x128xf32>
    %184 = vector.shape_cast %181 : vector<8x128xf32> to vector<1x8x128xf32>
    tpu.vector_store %arg13[%c0_98, %c0_99, %c0_100], %184 {strides = array<i32>} : memref<1x8x128xf32, #tpu.memory_space<vmem>>, vector<1x8x128xf32>,
    return
  }
  func.func @transform_0(%arg0: i32) -> (i32, i32, i32) {
    %c0_i32 = arith.constant 0 : i32
    %c0_i32_0 = arith.constant 0 : i32
    %c0_i32_1 = arith.constant 0 : i32
    return %arg0, %c0_i32, %c0_i32_0 : i32, i32, i32
  }
  func.func @transform_1(%arg0: i32) -> (i32, i32) {
    %c0_i32 = arith.constant 0 : i32
    %c0_i32_0 = arith.constant 0 : i32
    %c0_i32_1 = arith.constant 0 : i32
    return %c0_i32, %c0_i32_0 : i32, i32
  }
  func.func @transform_2(%arg0: i32) -> (i32, i32) {
    %c0_i32 = arith.constant 0 : i32
    %c0_i32_0 = arith.constant 0 : i32
    %c0_i32_1 = arith.constant 0 : i32
    return %c0_i32, %c0_i32_0 : i32, i32
  }
  func.func @transform_3(%arg0: i32) -> (i32, i32) {
    %c0_i32 = arith.constant 0 : i32
    %c0_i32_0 = arith.constant 0 : i32
    %c0_i32_1 = arith.constant 0 : i32
    return %c0_i32, %c0_i32_0 : i32, i32
  }
  func.func @transform_4(%arg0: i32) -> (i32, i32) {
    %c0_i32 = arith.constant 0 : i32
    %c0_i32_0 = arith.constant 0 : i32
    %c0_i32_1 = arith.constant 0 : i32
    return %c0_i32, %c0_i32_0 : i32, i32
  }
  func.func @transform_5(%arg0: i32) -> (i32, i32) {
    %c0_i32 = arith.constant 0 : i32
    %c0_i32_0 = arith.constant 0 : i32
    %c0_i32_1 = arith.constant 0 : i32
    return %c0_i32, %c0_i32_0 : i32, i32
  }
  func.func @transform_6(%arg0: i32) -> (i32, i32) {
    %c0_i32 = arith.constant 0 : i32
    %c0_i32_0 = arith.constant 0 : i32
    %c0_i32_1 = arith.constant 0 : i32
    return %c0_i32, %c0_i32_0 : i32, i32
  }
  func.func @transform_7(%arg0: i32) -> (i32, i32) {
    %c0_i32 = arith.constant 0 : i32
    %c0_i32_0 = arith.constant 0 : i32
    %c0_i32_1 = arith.constant 0 : i32
    return %c0_i32, %c0_i32_0 : i32, i32
  }
  func.func @transform_8(%arg0: i32) -> (i32, i32) {
    %c0_i32 = arith.constant 0 : i32
    %c0_i32_0 = arith.constant 0 : i32
    %c0_i32_1 = arith.constant 0 : i32
    return %c0_i32, %c0_i32_0 : i32, i32
  }
  func.func @transform_9(%arg0: i32) -> (i32, i32) {
    %c0_i32 = arith.constant 0 : i32
    %c0_i32_0 = arith.constant 0 : i32
    %c0_i32_1 = arith.constant 0 : i32
    return %c0_i32, %c0_i32_0 : i32, i32
  }
  func.func @transform_10(%arg0: i32) -> (i32, i32) {
    %c0_i32 = arith.constant 0 : i32
    %c0_i32_0 = arith.constant 0 : i32
    %c0_i32_1 = arith.constant 0 : i32
    return %c0_i32, %c0_i32_0 : i32, i32
  }
  func.func @transform_11(%arg0: i32) -> (i32, i32) {
    %c0_i32 = arith.constant 0 : i32
    %c0_i32_0 = arith.constant 0 : i32
    %c0_i32_1 = arith.constant 0 : i32
    return %c0_i32, %c0_i32_0 : i32, i32
  }
  func.func @transform_12(%arg0: i32) -> (i32, i32, i32) {
    %c0_i32 = arith.constant 0 : i32
    %c0_i32_0 = arith.constant 0 : i32
    %c0_i32_1 = arith.constant 0 : i32
    return %arg0, %c0_i32, %c0_i32_0 : i32, i32, i32
  }
}

module attributes {stable_mosaic.version = 11 : i64} {
  func.func @layer_kernel(%arg0: i32, %arg1: memref<1x8x128xf32, #tpu.memory_space<vmem>>, %arg2: memref<1x128xf32, #tpu.memory_space<vmem>>, %arg3: memref<1x128xf32, #tpu.memory_space<vmem>>, %arg4: memref<128x384xbf16, #tpu.memory_space<vmem>>, %arg5: memref<128x128xbf16, #tpu.memory_space<vmem>>, %arg6: memref<1x128xf32, #tpu.memory_space<vmem>>, %arg7: memref<1x128xf32, #tpu.memory_space<vmem>>, %arg8: memref<1x128xf32, #tpu.memory_space<vmem>>, %arg9: memref<128x256xbf16, #tpu.memory_space<vmem>>, %arg10: memref<1x256xf32, #tpu.memory_space<vmem>>, %arg11: memref<256x128xbf16, #tpu.memory_space<vmem>>, %arg12: memref<1x128xf32, #tpu.memory_space<vmem>>, %arg13: memref<1x8x128xf32, #tpu.memory_space<vmem>>, %arg14: memref<4x8x32xbf16, #tpu.memory_space<vmem>>, %arg15: memref<4x8x32xbf16, #tpu.memory_space<vmem>>, %arg16: memref<4x8x32xbf16, #tpu.memory_space<vmem>>, %arg17: memref<8x128xbf16, #tpu.memory_space<vmem>>) attributes {dimension_semantics = [#tpu.dimension_semantics<parallel>], iteration_bounds = array<i64: 2>, scalar_prefetch = 0 : i64, scratch_operands = 4 : i64, tpu.core_type = #tpu.core_type<tc>, window_params = [{transform_indices = @transform_0, window_bounds = array<i64: 1, 8, 128>}, {pipeline_mode = #tpu.pipeline_mode<synchronous>, transform_indices = @transform_1, window_bounds = array<i64: 1, 128>}, {pipeline_mode = #tpu.pipeline_mode<synchronous>, transform_indices = @transform_2, window_bounds = array<i64: 1, 128>}, {pipeline_mode = #tpu.pipeline_mode<synchronous>, transform_indices = @transform_3, window_bounds = array<i64: 128, 384>}, {pipeline_mode = #tpu.pipeline_mode<synchronous>, transform_indices = @transform_4, window_bounds = array<i64: 128, 128>}, {pipeline_mode = #tpu.pipeline_mode<synchronous>, transform_indices = @transform_5, window_bounds = array<i64: 1, 128>}, {pipeline_mode = #tpu.pipeline_mode<synchronous>, transform_indices = @transform_6, window_bounds = array<i64: 1, 128>}, {pipeline_mode = #tpu.pipeline_mode<synchronous>, transform_indices = @transform_7, window_bounds = array<i64: 1, 128>}, {pipeline_mode = #tpu.pipeline_mode<synchronous>, transform_indices = @transform_8, window_bounds = array<i64: 128, 256>}, {pipeline_mode = #tpu.pipeline_mode<synchronous>, transform_indices = @transform_9, window_bounds = array<i64: 1, 256>}, {pipeline_mode = #tpu.pipeline_mode<synchronous>, transform_indices = @transform_10, window_bounds = array<i64: 256, 128>}, {pipeline_mode = #tpu.pipeline_mode<synchronous>, transform_indices = @transform_11, window_bounds = array<i64: 1, 128>}, {transform_indices = @transform_12, window_bounds = array<i64: 1, 8, 128>}]} {
    %c0 = arith.constant 0 : index
    %c0_0 = arith.constant 0 : index
    %c0_1 = arith.constant 0 : index
    %0 = vector.load %arg1[%c0, %c0_0, %c0_1] : memref<1x8x128xf32, #tpu.memory_space<vmem>>, vector<1x8x128xf32>
    %1 = vector.shape_cast %0 : vector<1x8x128xf32> to vector<8x128xf32>
    %c0_2 = arith.constant 0 : index
    %c0_3 = arith.constant 0 : index
    %2 = vector.load %arg2[%c0_2, %c0_3] : memref<1x128xf32, #tpu.memory_space<vmem>>, vector<1x128xf32>
    %c0_4 = arith.constant 0 : index
    %c0_5 = arith.constant 0 : index
    %3 = vector.load %arg3[%c0_4, %c0_5] : memref<1x128xf32, #tpu.memory_space<vmem>>, vector<1x128xf32>
    %cst = arith.constant dense<0.000000e+00> : vector<8xf32>
    %4 = vector.multi_reduction <add>, %1, %cst [1] : vector<8x128xf32> to vector<8xf32>
    %5 = vector.shape_cast %4 : vector<8xf32> to vector<8x1xf32>
    %cst_6 = arith.constant 1.280000e+02 : f32
    %6 = vector.broadcast %cst_6 : f32 to vector<8x1xf32>
    %7 = arith.divf %5, %6 : vector<8x1xf32>
    %8 = vector.broadcast %7 : vector<8x1xf32> to vector<8x128xf32>
    %9 = arith.subf %1, %8 : vector<8x128xf32>
    %10 = arith.mulf %9, %9 : vector<8x128xf32>
    %cst_7 = arith.constant dense<0.000000e+00> : vector<8xf32>
    %11 = vector.multi_reduction <add>, %10, %cst_7 [1] : vector<8x128xf32> to vector<8xf32>
    %12 = vector.shape_cast %11 : vector<8xf32> to vector<8x1xf32>
    %cst_8 = arith.constant 1.280000e+02 : f32
    %13 = vector.broadcast %cst_8 : f32 to vector<8x1xf32>
    %14 = arith.divf %12, %13 : vector<8x1xf32>
    %cst_9 = arith.constant 9.99999974E-6 : f32
    %15 = vector.broadcast %cst_9 : f32 to vector<8x1xf32>
    %16 = arith.addf %14, %15 : vector<8x1xf32>
    %17 = math.rsqrt %16 : vector<8x1xf32>
    %18 = vector.broadcast %17 : vector<8x1xf32> to vector<8x128xf32>
    %19 = arith.mulf %9, %18 : vector<8x128xf32>
    %20 = vector.broadcast %2 : vector<1x128xf32> to vector<8x128xf32>
    %21 = arith.mulf %19, %20 : vector<8x128xf32>
    %22 = vector.broadcast %3 : vector<1x128xf32> to vector<8x128xf32>
    %23 = arith.addf %21, %22 : vector<8x128xf32>
    %24 = arith.truncf %23 : vector<8x128xf32> to vector<8x128xbf16>
    %c0_10 = arith.constant 0 : index
    %c0_11 = arith.constant 0 : index
    %25 = vector.load %arg4[%c0_10, %c0_11] : memref<128x384xbf16, #tpu.memory_space<vmem>>, vector<128x384xbf16>
    %cst_12 = arith.constant dense<0.000000e+00> : vector<8x384xf32>
    %26 = tpu.matmul %24, %25, %cst_12 {dimension_numbers = #tpu.dot_dimension_numbers<[1], [0], [0], [1], [0, 0, 1, 1], [], []>} : vector<8x128xbf16>, vector<128x384xbf16>, vector<8x384xf32> -> vector<8x384xf32>
    %27 = vector.extract_strided_slice %26 {offsets = [0, 0], sizes = [8, 32], strides = [1, 1]} : vector<8x384xf32> to vector<8x32xf32>
    %cst_13 = arith.constant 0.176776692 : f32
    %28 = vector.broadcast %cst_13 : f32 to vector<8x32xf32>
    %29 = arith.mulf %27, %28 : vector<8x32xf32>
    %30 = arith.truncf %29 : vector<8x32xf32> to vector<8x32xbf16>
    %c0_14 = arith.constant 0 : index
    %c0_15 = arith.constant 0 : index
    %c0_16 = arith.constant 0 : index
    %31 = vector.load %arg14[%c0_14, %c0_15, %c0_16] : memref<4x8x32xbf16, #tpu.memory_space<vmem>>, vector<1x8x32xbf16>
    %32 = vector.shape_cast %31 : vector<1x8x32xbf16> to vector<8x32xbf16>
    %33 = vector.shape_cast %30 : vector<8x32xbf16> to vector<1x8x32xbf16>
    tpu.vector_store %arg14[%c0_14, %c0_15, %c0_16], %33 {strides = array<i32>} : memref<4x8x32xbf16, #tpu.memory_space<vmem>>, vector<1x8x32xbf16>,
    %34 = vector.extract_strided_slice %26 {offsets = [0, 128], sizes = [8, 32], strides = [1, 1]} : vector<8x384xf32> to vector<8x32xf32>
    %35 = arith.truncf %34 : vector<8x32xf32> to vector<8x32xbf16>
    %c0_17 = arith.constant 0 : index
    %c0_18 = arith.constant 0 : index
    %c0_19 = arith.constant 0 : index
    %36 = vector.load %arg15[%c0_17, %c0_18, %c0_19] : memref<4x8x32xbf16, #tpu.memory_space<vmem>>, vector<1x8x32xbf16>
    %37 = vector.shape_cast %36 : vector<1x8x32xbf16> to vector<8x32xbf16>
    %38 = vector.shape_cast %35 : vector<8x32xbf16> to vector<1x8x32xbf16>
    tpu.vector_store %arg15[%c0_17, %c0_18, %c0_19], %38 {strides = array<i32>} : memref<4x8x32xbf16, #tpu.memory_space<vmem>>, vector<1x8x32xbf16>,
    %39 = vector.extract_strided_slice %26 {offsets = [0, 256], sizes = [8, 32], strides = [1, 1]} : vector<8x384xf32> to vector<8x32xf32>
    %40 = arith.truncf %39 : vector<8x32xf32> to vector<8x32xbf16>
    %c0_20 = arith.constant 0 : index
    %c0_21 = arith.constant 0 : index
    %c0_22 = arith.constant 0 : index
    %41 = vector.load %arg16[%c0_20, %c0_21, %c0_22] : memref<4x8x32xbf16, #tpu.memory_space<vmem>>, vector<1x8x32xbf16>
    %42 = vector.shape_cast %41 : vector<1x8x32xbf16> to vector<8x32xbf16>
    %43 = vector.shape_cast %40 : vector<8x32xbf16> to vector<1x8x32xbf16>
    tpu.vector_store %arg16[%c0_20, %c0_21, %c0_22], %43 {strides = array<i32>} : memref<4x8x32xbf16, #tpu.memory_space<vmem>>, vector<1x8x32xbf16>,
    %44 = vector.extract_strided_slice %26 {offsets = [0, 32], sizes = [8, 32], strides = [1, 1]} : vector<8x384xf32> to vector<8x32xf32>
    %cst_23 = arith.constant 0.176776692 : f32
    %45 = vector.broadcast %cst_23 : f32 to vector<8x32xf32>
    %46 = arith.mulf %44, %45 : vector<8x32xf32>
    %47 = arith.truncf %46 : vector<8x32xf32> to vector<8x32xbf16>
    %c1 = arith.constant 1 : index
    %c0_24 = arith.constant 0 : index
    %c0_25 = arith.constant 0 : index
    %48 = vector.load %arg14[%c1, %c0_24, %c0_25] : memref<4x8x32xbf16, #tpu.memory_space<vmem>>, vector<1x8x32xbf16>
    %49 = vector.shape_cast %48 : vector<1x8x32xbf16> to vector<8x32xbf16>
    %50 = vector.shape_cast %47 : vector<8x32xbf16> to vector<1x8x32xbf16>
    tpu.vector_store %arg14[%c1, %c0_24, %c0_25], %50 {strides = array<i32>} : memref<4x8x32xbf16, #tpu.memory_space<vmem>>, vector<1x8x32xbf16>,
    %51 = vector.extract_strided_slice %26 {offsets = [0, 160], sizes = [8, 32], strides = [1, 1]} : vector<8x384xf32> to vector<8x32xf32>
    %52 = arith.truncf %51 : vector<8x32xf32> to vector<8x32xbf16>
    %c1_26 = arith.constant 1 : index
    %c0_27 = arith.constant 0 : index
    %c0_28 = arith.constant 0 : index
    %53 = vector.load %arg15[%c1_26, %c0_27, %c0_28] : memref<4x8x32xbf16, #tpu.memory_space<vmem>>, vector<1x8x32xbf16>
    %54 = vector.shape_cast %53 : vector<1x8x32xbf16> to vector<8x32xbf16>
    %55 = vector.shape_cast %52 : vector<8x32xbf16> to vector<1x8x32xbf16>
    tpu.vector_store %arg15[%c1_26, %c0_27, %c0_28], %55 {strides = array<i32>} : memref<4x8x32xbf16, #tpu.memory_space<vmem>>, vector<1x8x32xbf16>,
    %56 = vector.extract_strided_slice %26 {offsets = [0, 288], sizes = [8, 32], strides = [1, 1]} : vector<8x384xf32> to vector<8x32xf32>
    %57 = arith.truncf %56 : vector<8x32xf32> to vector<8x32xbf16>
    %c1_29 = arith.constant 1 : index
    %c0_30 = arith.constant 0 : index
    %c0_31 = arith.constant 0 : index
    %58 = vector.load %arg16[%c1_29, %c0_30, %c0_31] : memref<4x8x32xbf16, #tpu.memory_space<vmem>>, vector<1x8x32xbf16>
    %59 = vector.shape_cast %58 : vector<1x8x32xbf16> to vector<8x32xbf16>
    %60 = vector.shape_cast %57 : vector<8x32xbf16> to vector<1x8x32xbf16>
    tpu.vector_store %arg16[%c1_29, %c0_30, %c0_31], %60 {strides = array<i32>} : memref<4x8x32xbf16, #tpu.memory_space<vmem>>, vector<1x8x32xbf16>,
    %61 = vector.extract_strided_slice %26 {offsets = [0, 64], sizes = [8, 32], strides = [1, 1]} : vector<8x384xf32> to vector<8x32xf32>
    %cst_32 = arith.constant 0.176776692 : f32
    %62 = vector.broadcast %cst_32 : f32 to vector<8x32xf32>
    %63 = arith.mulf %61, %62 : vector<8x32xf32>
    %64 = arith.truncf %63 : vector<8x32xf32> to vector<8x32xbf16>
    %c2 = arith.constant 2 : index
    %c0_33 = arith.constant 0 : index
    %c0_34 = arith.constant 0 : index
    %65 = vector.load %arg14[%c2, %c0_33, %c0_34] : memref<4x8x32xbf16, #tpu.memory_space<vmem>>, vector<1x8x32xbf16>
    %66 = vector.shape_cast %65 : vector<1x8x32xbf16> to vector<8x32xbf16>
    %67 = vector.shape_cast %64 : vector<8x32xbf16> to vector<1x8x32xbf16>
    tpu.vector_store %arg14[%c2, %c0_33, %c0_34], %67 {strides = array<i32>} : memref<4x8x32xbf16, #tpu.memory_space<vmem>>, vector<1x8x32xbf16>,
    %68 = vector.extract_strided_slice %26 {offsets = [0, 192], sizes = [8, 32], strides = [1, 1]} : vector<8x384xf32> to vector<8x32xf32>
    %69 = arith.truncf %68 : vector<8x32xf32> to vector<8x32xbf16>
    %c2_35 = arith.constant 2 : index
    %c0_36 = arith.constant 0 : index
    %c0_37 = arith.constant 0 : index
    %70 = vector.load %arg15[%c2_35, %c0_36, %c0_37] : memref<4x8x32xbf16, #tpu.memory_space<vmem>>, vector<1x8x32xbf16>
    %71 = vector.shape_cast %70 : vector<1x8x32xbf16> to vector<8x32xbf16>
    %72 = vector.shape_cast %69 : vector<8x32xbf16> to vector<1x8x32xbf16>
    tpu.vector_store %arg15[%c2_35, %c0_36, %c0_37], %72 {strides = array<i32>} : memref<4x8x32xbf16, #tpu.memory_space<vmem>>, vector<1x8x32xbf16>,
    %73 = vector.extract_strided_slice %26 {offsets = [0, 320], sizes = [8, 32], strides = [1, 1]} : vector<8x384xf32> to vector<8x32xf32>
    %74 = arith.truncf %73 : vector<8x32xf32> to vector<8x32xbf16>
    %c2_38 = arith.constant 2 : index
    %c0_39 = arith.constant 0 : index
    %c0_40 = arith.constant 0 : index
    %75 = vector.load %arg16[%c2_38, %c0_39, %c0_40] : memref<4x8x32xbf16, #tpu.memory_space<vmem>>, vector<1x8x32xbf16>
    %76 = vector.shape_cast %75 : vector<1x8x32xbf16> to vector<8x32xbf16>
    %77 = vector.shape_cast %74 : vector<8x32xbf16> to vector<1x8x32xbf16>
    tpu.vector_store %arg16[%c2_38, %c0_39, %c0_40], %77 {strides = array<i32>} : memref<4x8x32xbf16, #tpu.memory_space<vmem>>, vector<1x8x32xbf16>,
    %78 = vector.extract_strided_slice %26 {offsets = [0, 96], sizes = [8, 32], strides = [1, 1]} : vector<8x384xf32> to vector<8x32xf32>
    %cst_41 = arith.constant 0.176776692 : f32
    %79 = vector.broadcast %cst_41 : f32 to vector<8x32xf32>
    %80 = arith.mulf %78, %79 : vector<8x32xf32>
    %81 = arith.truncf %80 : vector<8x32xf32> to vector<8x32xbf16>
    %c3 = arith.constant 3 : index
    %c0_42 = arith.constant 0 : index
    %c0_43 = arith.constant 0 : index
    %82 = vector.load %arg14[%c3, %c0_42, %c0_43] : memref<4x8x32xbf16, #tpu.memory_space<vmem>>, vector<1x8x32xbf16>
    %83 = vector.shape_cast %82 : vector<1x8x32xbf16> to vector<8x32xbf16>
    %84 = vector.shape_cast %81 : vector<8x32xbf16> to vector<1x8x32xbf16>
    tpu.vector_store %arg14[%c3, %c0_42, %c0_43], %84 {strides = array<i32>} : memref<4x8x32xbf16, #tpu.memory_space<vmem>>, vector<1x8x32xbf16>,
    %85 = vector.extract_strided_slice %26 {offsets = [0, 224], sizes = [8, 32], strides = [1, 1]} : vector<8x384xf32> to vector<8x32xf32>
    %86 = arith.truncf %85 : vector<8x32xf32> to vector<8x32xbf16>
    %c3_44 = arith.constant 3 : index
    %c0_45 = arith.constant 0 : index
    %c0_46 = arith.constant 0 : index
    %87 = vector.load %arg15[%c3_44, %c0_45, %c0_46] : memref<4x8x32xbf16, #tpu.memory_space<vmem>>, vector<1x8x32xbf16>
    %88 = vector.shape_cast %87 : vector<1x8x32xbf16> to vector<8x32xbf16>
    %89 = vector.shape_cast %86 : vector<8x32xbf16> to vector<1x8x32xbf16>
    tpu.vector_store %arg15[%c3_44, %c0_45, %c0_46], %89 {strides = array<i32>} : memref<4x8x32xbf16, #tpu.memory_space<vmem>>, vector<1x8x32xbf16>,
    %90 = vector.extract_strided_slice %26 {offsets = [0, 352], sizes = [8, 32], strides = [1, 1]} : vector<8x384xf32> to vector<8x32xf32>
    %91 = arith.truncf %90 : vector<8x32xf32> to vector<8x32xbf16>
    %c3_47 = arith.constant 3 : index
    %c0_48 = arith.constant 0 : index
    %c0_49 = arith.constant 0 : index
    %92 = vector.load %arg16[%c3_47, %c0_48, %c0_49] : memref<4x8x32xbf16, #tpu.memory_space<vmem>>, vector<1x8x32xbf16>
    %93 = vector.shape_cast %92 : vector<1x8x32xbf16> to vector<8x32xbf16>
    %94 = vector.shape_cast %91 : vector<8x32xbf16> to vector<1x8x32xbf16>
    tpu.vector_store %arg16[%c3_47, %c0_48, %c0_49], %94 {strides = array<i32>} : memref<4x8x32xbf16, #tpu.memory_space<vmem>>, vector<1x8x32xbf16>,
    %c0_50 = arith.constant 0 : index
    %c0_51 = arith.constant 0 : index
    %c0_52 = arith.constant 0 : index
    %95 = vector.load %arg14[%c0_50, %c0_51, %c0_52] : memref<4x8x32xbf16, #tpu.memory_space<vmem>>, vector<4x8x32xbf16>
    %c0_53 = arith.constant 0 : index
    %c0_54 = arith.constant 0 : index
    %c0_55 = arith.constant 0 : index
    %96 = vector.load %arg15[%c0_53, %c0_54, %c0_55] : memref<4x8x32xbf16, #tpu.memory_space<vmem>>, vector<4x8x32xbf16>
    "tpu.trace_start"() <{level = 10 : i32, message = "hqd,hkd->hqk"}> : () -> ()
    %cst_56 = arith.constant dense<0.000000e+00> : vector<4x8x8xf32>
    %97 = tpu.matmul %95, %96, %cst_56 {dimension_numbers = #tpu.dot_dimension_numbers<[2], [2], [1], [1], [0, 0, 0, 1, 1, 1], [0], [0]>} : vector<4x8x32xbf16>, vector<4x8x32xbf16>, vector<4x8x8xf32> -> vector<4x8x8xf32>
    "tpu.trace_stop"() : () -> ()
    %cst_57 = arith.constant dense<0xFF800000> : vector<4x8xf32>
    %98 = vector.multi_reduction <maximumf>, %97, %cst_57 [2] : vector<4x8x8xf32> to vector<4x8xf32>
    %99 = vector.shape_cast %98 : vector<4x8xf32> to vector<4x8x1xf32>
    %100 = vector.broadcast %99 : vector<4x8x1xf32> to vector<4x8x8xf32>
    %101 = arith.subf %97, %100 : vector<4x8x8xf32>
    %102 = math.exp %101 : vector<4x8x8xf32>
    %cst_58 = arith.constant dense<0.000000e+00> : vector<4x8xf32>
    %103 = vector.multi_reduction <add>, %102, %cst_58 [2] : vector<4x8x8xf32> to vector<4x8xf32>
    %104 = vector.shape_cast %103 : vector<4x8xf32> to vector<4x8x1xf32>
    %105 = tpu.reciprocal %104 {approx = true} : vector<4x8x1xf32> -> vector<4x8x1xf32>
    %106 = vector.broadcast %105 : vector<4x8x1xf32> to vector<4x8x8xf32>
    %107 = arith.mulf %102, %106 : vector<4x8x8xf32>
    %108 = arith.truncf %107 : vector<4x8x8xf32> to vector<4x8x8xbf16>
    %c0_59 = arith.constant 0 : index
    %c0_60 = arith.constant 0 : index
    %c0_61 = arith.constant 0 : index
    %109 = vector.load %arg16[%c0_59, %c0_60, %c0_61] : memref<4x8x32xbf16, #tpu.memory_space<vmem>>, vector<4x8x32xbf16>
    "tpu.trace_start"() <{level = 10 : i32, message = "hqk,hkd->hqd"}> : () -> ()
    %cst_62 = arith.constant dense<0.000000e+00> : vector<4x8x32xf32>
    %110 = tpu.matmul %108, %109, %cst_62 {dimension_numbers = #tpu.dot_dimension_numbers<[2], [1], [1], [2], [0, 0, 0, 1, 1, 2], [0], [0]>} : vector<4x8x8xbf16>, vector<4x8x32xbf16>, vector<4x8x32xf32> -> vector<4x8x32xf32>
    "tpu.trace_stop"() : () -> ()
    %111 = vector.extract_strided_slice %110 {offsets = [0, 0, 0], sizes = [1, 8, 32], strides = [1, 1, 1]} : vector<4x8x32xf32> to vector<1x8x32xf32>
    %112 = vector.shape_cast %111 : vector<1x8x32xf32> to vector<8x32xf32>
    %113 = arith.truncf %112 : vector<8x32xf32> to vector<8x32xbf16>
    %c0_63 = arith.constant 0 : index
    %c0_64 = arith.constant 0 : index
    %114 = vector.load %arg17[%c0_63, %c0_64] : memref<8x128xbf16, #tpu.memory_space<vmem>>, vector<8x32xbf16>
    tpu.vector_store %arg17[%c0_63, %c0_64], %113 {strides = array<i32>} : memref<8x128xbf16, #tpu.memory_space<vmem>>, vector<8x32xbf16>,
    %115 = vector.extract_strided_slice %110 {offsets = [1, 0, 0], sizes = [1, 8, 32], strides = [1, 1, 1]} : vector<4x8x32xf32> to vector<1x8x32xf32>
    %116 = vector.shape_cast %115 : vector<1x8x32xf32> to vector<8x32xf32>
    %117 = arith.truncf %116 : vector<8x32xf32> to vector<8x32xbf16>
    %c0_65 = arith.constant 0 : index
    %c32 = arith.constant 32 : index
    %118 = vector.load %arg17[%c0_65, %c32] : memref<8x128xbf16, #tpu.memory_space<vmem>>, vector<8x32xbf16>
    tpu.vector_store %arg17[%c0_65, %c32], %117 {strides = array<i32>} : memref<8x128xbf16, #tpu.memory_space<vmem>>, vector<8x32xbf16>,
    %119 = vector.extract_strided_slice %110 {offsets = [2, 0, 0], sizes = [1, 8, 32], strides = [1, 1, 1]} : vector<4x8x32xf32> to vector<1x8x32xf32>
    %120 = vector.shape_cast %119 : vector<1x8x32xf32> to vector<8x32xf32>
    %121 = arith.truncf %120 : vector<8x32xf32> to vector<8x32xbf16>
    %c0_66 = arith.constant 0 : index
    %c64 = arith.constant 64 : index
    %122 = vector.load %arg17[%c0_66, %c64] : memref<8x128xbf16, #tpu.memory_space<vmem>>, vector<8x32xbf16>
    tpu.vector_store %arg17[%c0_66, %c64], %121 {strides = array<i32>} : memref<8x128xbf16, #tpu.memory_space<vmem>>, vector<8x32xbf16>,
    %123 = vector.extract_strided_slice %110 {offsets = [3, 0, 0], sizes = [1, 8, 32], strides = [1, 1, 1]} : vector<4x8x32xf32> to vector<1x8x32xf32>
    %124 = vector.shape_cast %123 : vector<1x8x32xf32> to vector<8x32xf32>
    %125 = arith.truncf %124 : vector<8x32xf32> to vector<8x32xbf16>
    %c0_67 = arith.constant 0 : index
    %c96 = arith.constant 96 : index
    %126 = vector.load %arg17[%c0_67, %c96] : memref<8x128xbf16, #tpu.memory_space<vmem>>, vector<8x32xbf16>
    tpu.vector_store %arg17[%c0_67, %c96], %125 {strides = array<i32>} : memref<8x128xbf16, #tpu.memory_space<vmem>>, vector<8x32xbf16>,
    %c0_68 = arith.constant 0 : index
    %c0_69 = arith.constant 0 : index
    %127 = vector.load %arg17[%c0_68, %c0_69] : memref<8x128xbf16, #tpu.memory_space<vmem>>, vector<8x128xbf16>
    %c0_70 = arith.constant 0 : index
    %c0_71 = arith.constant 0 : index
    %128 = vector.load %arg5[%c0_70, %c0_71] : memref<128x128xbf16, #tpu.memory_space<vmem>>, vector<128x128xbf16>
    %cst_72 = arith.constant dense<0.000000e+00> : vector<8x128xf32>
    %129 = tpu.matmul %127, %128, %cst_72 {dimension_numbers = #tpu.dot_dimension_numbers<[1], [0], [0], [1], [0, 0, 1, 1], [], []>} : vector<8x128xbf16>, vector<128x128xbf16>, vector<8x128xf32> -> vector<8x128xf32>
    %130 = arith.addf %1, %129 : vector<8x128xf32>
    %c0_73 = arith.constant 0 : index
    %c0_74 = arith.constant 0 : index
    %131 = vector.load %arg6[%c0_73, %c0_74] : memref<1x128xf32, #tpu.memory_space<vmem>>, vector<1x128xf32>
    %132 = vector.broadcast %131 : vector<1x128xf32> to vector<8x128xf32>
    %133 = arith.addf %130, %132 : vector<8x128xf32>
    %c0_75 = arith.constant 0 : index
    %c0_76 = arith.constant 0 : index
    %134 = vector.load %arg7[%c0_75, %c0_76] : memref<1x128xf32, #tpu.memory_space<vmem>>, vector<1x128xf32>
    %c0_77 = arith.constant 0 : index
    %c0_78 = arith.constant 0 : index
    %135 = vector.load %arg8[%c0_77, %c0_78] : memref<1x128xf32, #tpu.memory_space<vmem>>, vector<1x128xf32>
    %cst_79 = arith.constant dense<0.000000e+00> : vector<8xf32>
    %136 = vector.multi_reduction <add>, %133, %cst_79 [1] : vector<8x128xf32> to vector<8xf32>
    %137 = vector.shape_cast %136 : vector<8xf32> to vector<8x1xf32>
    %cst_80 = arith.constant 1.280000e+02 : f32
    %138 = vector.broadcast %cst_80 : f32 to vector<8x1xf32>
    %139 = arith.divf %137, %138 : vector<8x1xf32>
    %140 = vector.broadcast %139 : vector<8x1xf32> to vector<8x128xf32>
    %141 = arith.subf %133, %140 : vector<8x128xf32>
    %142 = arith.mulf %141, %141 : vector<8x128xf32>
    %cst_81 = arith.constant dense<0.000000e+00> : vector<8xf32>
    %143 = vector.multi_reduction <add>, %142, %cst_81 [1] : vector<8x128xf32> to vector<8xf32>
    %144 = vector.shape_cast %143 : vector<8xf32> to vector<8x1xf32>
    %cst_82 = arith.constant 1.280000e+02 : f32
    %145 = vector.broadcast %cst_82 : f32 to vector<8x1xf32>
    %146 = arith.divf %144, %145 : vector<8x1xf32>
    %cst_83 = arith.constant 9.99999974E-6 : f32
    %147 = vector.broadcast %cst_83 : f32 to vector<8x1xf32>
    %148 = arith.addf %146, %147 : vector<8x1xf32>
    %149 = math.rsqrt %148 : vector<8x1xf32>
    %150 = vector.broadcast %149 : vector<8x1xf32> to vector<8x128xf32>
    %151 = arith.mulf %141, %150 : vector<8x128xf32>
    %152 = vector.broadcast %134 : vector<1x128xf32> to vector<8x128xf32>
    %153 = arith.mulf %151, %152 : vector<8x128xf32>
    %154 = vector.broadcast %135 : vector<1x128xf32> to vector<8x128xf32>
    %155 = arith.addf %153, %154 : vector<8x128xf32>
    %156 = arith.truncf %155 : vector<8x128xf32> to vector<8x128xbf16>
    %c0_84 = arith.constant 0 : index
    %c0_85 = arith.constant 0 : index
    %157 = vector.load %arg9[%c0_84, %c0_85] : memref<128x256xbf16, #tpu.memory_space<vmem>>, vector<128x256xbf16>
    %cst_86 = arith.constant dense<0.000000e+00> : vector<8x256xf32>
    %158 = tpu.matmul %156, %157, %cst_86 {dimension_numbers = #tpu.dot_dimension_numbers<[1], [0], [0], [1], [0, 0, 1, 1], [], []>} : vector<8x128xbf16>, vector<128x256xbf16>, vector<8x256xf32> -> vector<8x256xf32>
    %c0_87 = arith.constant 0 : index
    %c0_88 = arith.constant 0 : index
    %159 = vector.load %arg10[%c0_87, %c0_88] : memref<1x256xf32, #tpu.memory_space<vmem>>, vector<1x256xf32>
    %160 = vector.broadcast %159 : vector<1x256xf32> to vector<8x256xf32>
    %161 = arith.addf %158, %160 : vector<8x256xf32>
    %cst_89 = arith.constant 5.000000e-01 : f32
    %162 = vector.broadcast %cst_89 : f32 to vector<8x256xf32>
    %163 = arith.mulf %162, %161 : vector<8x256xf32>
    %cst_90 = arith.constant 4.471500e-02 : f32
    %164 = vector.broadcast %cst_90 : f32 to vector<8x256xf32>
    %165 = arith.mulf %164, %161 : vector<8x256xf32>
    %166 = arith.mulf %165, %161 : vector<8x256xf32>
    %167 = arith.mulf %166, %161 : vector<8x256xf32>
    %168 = arith.addf %161, %167 : vector<8x256xf32>
    %cst_91 = arith.constant 0.797884583 : f32
    %169 = vector.broadcast %cst_91 : f32 to vector<8x256xf32>
    %170 = arith.mulf %169, %168 : vector<8x256xf32>
    %171 = math.tanh %170 : vector<8x256xf32>
    %cst_92 = arith.constant 1.000000e+00 : f32
    %172 = vector.broadcast %cst_92 : f32 to vector<8x256xf32>
    %173 = arith.addf %172, %171 : vector<8x256xf32>
    %174 = arith.mulf %163, %173 : vector<8x256xf32>
    %175 = arith.truncf %174 : vector<8x256xf32> to vector<8x256xbf16>
    %c0_93 = arith.constant 0 : index
    %c0_94 = arith.constant 0 : index
    %176 = vector.load %arg11[%c0_93, %c0_94] : memref<256x128xbf16, #tpu.memory_space<vmem>>, vector<256x128xbf16>
    %cst_95 = arith.constant dense<0.000000e+00> : vector<8x128xf32>
    %177 = tpu.matmul %175, %176, %cst_95 {dimension_numbers = #tpu.dot_dimension_numbers<[1], [0], [0], [1], [0, 0, 1, 1], [], []>} : vector<8x256xbf16>, vector<256x128xbf16>, vector<8x128xf32> -> vector<8x128xf32>
    %c0_96 = arith.constant 0 : index
    %c0_97 = arith.constant 0 : index
    %178 = vector.load %arg12[%c0_96, %c0_97] : memref<1x128xf32, #tpu.memory_space<vmem>>, vector<1x128xf32>
    %179 = vector.broadcast %178 : vector<1x128xf32> to vector<8x128xf32>
    %180 = arith.addf %177, %179 : vector<8x128xf32>
    %181 = arith.addf %133, %180 : vector<8x128xf32>
    %c0_98 = arith.constant 0 : index
    %c0_99 = arith.constant 0 : index
    %c0_100 = arith.constant 0 : index
    %182 = vector.load %arg13[%c0_98, %c0_99, %c0_100] : memref<1x8x128xf32, #tpu.memory_space<vmem>>, vector<1x8x128xf32>
    %183 = vector.shape_cast %182 : vector<1x8x128xf32> to vector<8x128xf32>
    %184 = vector.shape_cast %181 : vector<8x128xf32> to vector<1x8x128xf32>
    tpu.vector_store %arg13[%c0_98, %c0_99, %c0_100], %184 {strides = array<i32>} : memref<1x8x128xf32, #tpu.memory_space<vmem>>, vector<1x8x128xf32>,
    return
  }
  func.func @transform_0(%arg0: i32) -> (i32, i32, i32) {
    %c0_i32 = arith.constant 0 : i32
    %c0_i32_0 = arith.constant 0 : i32
    %c0_i32_1 = arith.constant 0 : i32
    return %arg0, %c0_i32, %c0_i32_0 : i32, i32, i32
  }
  func.func @transform_1(%arg0: i32) -> (i32, i32) {
    %c0_i32 = arith.constant 0 : i32
    %c0_i32_0 = arith.constant 0 : i32
    %c0_i32_1 = arith.constant 0 : i32
    return %c0_i32, %c0_i32_0 : i32, i32
  }
  func.func @transform_2(%arg0: i32) -> (i32, i32) {
    %c0_i32 = arith.constant 0 : i32
    %c0_i32_0 = arith.constant 0 : i32
    %c0_i32_1 = arith.constant 0 : i32
    return %c0_i32, %c0_i32_0 : i32, i32
  }
  func.func @transform_3(%arg0: i32) -> (i32, i32) {
    %c0_i32 = arith.constant 0 : i32
    %c0_i32_0 = arith.constant 0 : i32
    %c0_i32_1 = arith.constant 0 : i32
    return %c0_i32, %c0_i32_0 : i32, i32
  }
  func.func @transform_4(%arg0: i32) -> (i32, i32) {
    %c0_i32 = arith.constant 0 : i32
    %c0_i32_0 = arith.constant 0 : i32
    %c0_i32_1 = arith.constant 0 : i32
    return %c0_i32, %c0_i32_0 : i32, i32
  }
  func.func @transform_5(%arg0: i32) -> (i32, i32) {
    %c0_i32 = arith.constant 0 : i32
    %c0_i32_0 = arith.constant 0 : i32
    %c0_i32_1 = arith.constant 0 : i32
    return %c0_i32, %c0_i32_0 : i32, i32
  }
  func.func @transform_6(%arg0: i32) -> (i32, i32) {
    %c0_i32 = arith.constant 0 : i32
    %c0_i32_0 = arith.constant 0 : i32
    %c0_i32_1 = arith.constant 0 : i32
    return %c0_i32, %c0_i32_0 : i32, i32
  }
  func.func @transform_7(%arg0: i32) -> (i32, i32) {
    %c0_i32 = arith.constant 0 : i32
    %c0_i32_0 = arith.constant 0 : i32
    %c0_i32_1 = arith.constant 0 : i32
    return %c0_i32, %c0_i32_0 : i32, i32
  }
  func.func @transform_8(%arg0: i32) -> (i32, i32) {
    %c0_i32 = arith.constant 0 : i32
    %c0_i32_0 = arith.constant 0 : i32
    %c0_i32_1 = arith.constant 0 : i32
    return %c0_i32, %c0_i32_0 : i32, i32
  }
  func.func @transform_9(%arg0: i32) -> (i32, i32) {
    %c0_i32 = arith.constant 0 : i32
    %c0_i32_0 = arith.constant 0 : i32
    %c0_i32_1 = arith.constant 0 : i32
    return %c0_i32, %c0_i32_0 : i32, i32
  }
  func.func @transform_10(%arg0: i32) -> (i32, i32) {
    %c0_i32 = arith.constant 0 : i32
    %c0_i32_0 = arith.constant 0 : i32
    %c0_i32_1 = arith.constant 0 : i32
    return %c0_i32, %c0_i32_0 : i32, i32
  }
  func.func @transform_11(%arg0: i32) -> (i32, i32) {
    %c0_i32 = arith.constant 0 : i32
    %c0_i32_0 = arith.constant 0 : i32
    %c0_i32_1 = arith.constant 0 : i32
    return %c0_i32, %c0_i32_0 : i32, i32
  }
  func.func @transform_12(%arg0: i32) -> (i32, i32, i32) {
    %c0_i32 = arith.constant 0 : i32
    %c0_i32_0 = arith.constant 0 : i32
    %c0_i32_1 = arith.constant 0 : i32
    return %arg0, %c0_i32, %c0_i32_0 : i32, i32, i32
  }
}

</mosaic_0001>

<llo_original>
// kernel: transformer_forward.3
$region0: #{transformer_forward.3}
  #allocation0 [shape = 'u32[]', space=smem, size = 0x4, offset = 0x4, fixed_abs, tag = 'smem constant byte address 0x4 - core index']
  #allocation1 [shape = 'u32[72,128]{1,0:T(1,128)}', space=vmem, size = 0x9000, scoped, tag = 'internal scratch']
  #allocation2 [shape = 'bf16[4,8,32]{2,1,0:T(8,128)(2,1)}', space=vmem, size = 0x2000, scoped, tag = 'scratch operand']
  #allocation3 [shape = 'bf16[4,8,32]{2,1,0:T(8,128)(2,1)}', space=vmem, size = 0x2000, scoped, tag = 'scratch operand']
  #allocation4 [shape = 'bf16[4,8,32]{2,1,0:T(8,128)(2,1)}', space=vmem, size = 0x2000, scoped, tag = 'scratch operand']
  #allocation5 [shape = 'bf16[8,128]{1,0:T(8,128)(2,1)}', space=vmem, size = 0x800, scoped, tag = 'scratch operand']
  %s0 = inlined_call_operand.vmem [shape: f32[2,8,128], index: 0, kind: input, shape index: {}]
  %s1 = inlined_call_operand.vmem [shape: f32[1,128], index: 1, kind: input, shape index: {}]
  %s2 = inlined_call_operand.vmem [shape: f32[1,128], index: 2, kind: input, shape index: {}]
  %s3 = inlined_call_operand.hbm [shape: bf16[128,384], index: 3, kind: input, shape index: {}]
  %s4 = inlined_call_operand.hbm [shape: bf16[128,128], index: 4, kind: input, shape index: {}]
  %s5 = inlined_call_operand.vmem [shape: f32[1,128], index: 5, kind: input, shape index: {}]
  %s6 = inlined_call_operand.vmem [shape: f32[1,128], index: 6, kind: input, shape index: {}]
  %s7 = inlined_call_operand.vmem [shape: f32[1,128], index: 7, kind: input, shape index: {}]
  %s8 = inlined_call_operand.hbm [shape: bf16[128,256], index: 8, kind: input, shape index: {}]
  %s9 = inlined_call_operand.vmem [shape: f32[1,256], index: 9, kind: input, shape index: {}]
  %s10 = inlined_call_operand.hbm [shape: bf16[256,128], index: 10, kind: input, shape index: {}]
  %s11 = inlined_call_operand.vmem [shape: f32[1,128], index: 11, kind: input, shape index: {}]
  %s12 = inlined_call_operand.hbm [shape: f32[2,8,128], index: 12, kind: output, shape index: {}]
  %s13 = sld [smem:[#allocation0]]
  $region97: #{transformer_forward.3} parent=0
    _
  %s15 = ssub.s32 1, %s13
  %s16 = scalar_select 0, %s15, %s13
  $region1: #{transformer_forward.3} parent=0
    #allocation6 [shape = 'u8[98304]{0}', space=vmem, size = 0x18000, scoped, tag = 'input window, operand 3, single buffered']
    #allocation7 [shape = 's32[2]{0}', space=sflag, size = 0x8, scoped, tag = 'scoped memory for transformer_forward.3']
    #allocation8 [shape = 's32[2]{0}', space=sflag, size = 0x8, scoped, tag = 'scoped memory for transformer_forward.3']
    #allocation9 [shape = 'u8[32768]{0}', space=vmem, size = 0x8000, scoped, tag = 'input window, operand 4, single buffered']
    #allocation10 [shape = 's32[1]{0}', space=sflag, size = 0x4, scoped, tag = 'scoped memory for transformer_forward.3']
    #allocation11 [shape = 'u8[65536]{0}', space=vmem, size = 0x10000, scoped, tag = 'input window, operand 8, single buffered']
    #allocation12 [shape = 'u8[65536]{0}', space=vmem, size = 0x10000, scoped, tag = 'input window, operand 10, single buffered']
    #allocation13 [shape = 's32[1]{0}', space=sflag, size = 0x4, scoped, tag = 'scoped memory for transformer_forward.3']
    #allocation14 [shape = 'u8[8192]{0}', space=vmem, size = 0x2000, scoped, tag = 'output window, operand 0']
    %17 = vsyncpa [#allocation7], 0
    %18 = vsyncpa [#allocation10], 0
    %19 = vsyncpa [#allocation13], 0
    %20 = vsyncpa [#allocation8], 0
    %s21 = scalar_lea.sflag [#allocation8], 1
    %22 = vsyncpa %s21, 0
    loop: start=0, step=1, limit=4
    $region2: #{transformer_forward.3} parent=1 // loop_pre_header
      _
    $region3: #{transformer_forward.3} parent=1 // loop_header
      %s24 = sphi 0, %s28
      %p25 = scmp.ge.s32.totalorder %s24, 4
      %s34 = sphi 0, %s36
      %s37 = sphi 0, %s34
      %s38 = sphi 0, %s37
      %s54 = sphi 0, %s38
      %s58 = sphi 0, %s58
      %s60 = sphi 0, %s58
      %s61 = sphi 0, %s60
      %s75 = sphi 0, %s61
      %s79 = sphi 0, %s79
      %s81 = sphi 0, %s79
      %s82 = sphi 0, %s81
      %s96 = sphi 0, %s82
      %s100 = sphi 0, %s100
      %s102 = sphi 0, %s100
      %s103 = sphi 0, %s102
      %s117 = sphi 0, %s103
      %s121 = sphi 0, %s121
      %s123 = sphi 0, %s121
      %s124 = sphi 0, %s123
      %s138 = sphi 0, %s124
      %s142 = sphi 0, %s142
      %s144 = sphi 0, %s142
      %s145 = sphi 0, %s144
      %s159 = sphi 0, %s145
      %s163 = sphi 0, %s163
      %s165 = sphi 0, %s163
      %s166 = sphi 0, %s165
      %s180 = sphi 0, %s166
      %s184 = sphi 0, %s184
      %s186 = sphi 0, %s184
      %s187 = sphi 0, %s186
      %s201 = sphi 0, %s187
      %s205 = sphi 0, %s205
      %s207 = sphi 0, %s205
      %s208 = sphi 0, %s207
      %s222 = sphi 0, %s208
      %s226 = sphi 0, %s226
      %s228 = sphi 0, %s226
      %s229 = sphi 0, %s228
      %s243 = sphi 0, %s229
      %s247 = sphi 0, %s247
      %s249 = sphi 0, %s247
      %s250 = sphi 0, %s249
      %s264 = sphi 0, %s250
      %s268 = sphi 0, %s268
      %s270 = sphi 0, %s268
      %s271 = sphi 0, %s270
      %s285 = sphi 0, %s271
      %s291 = sphi 0, %s293
      %s294 = sphi 0, %s291
      %s295 = sphi 0, %s294
      %s311 = sphi 0, %s295
    $region4: #{transformer_forward.3} parent=1 // loop_header_branch
      %27 = sbr.rel (%p25) target = $region8
    $region5: #{transformer_forward.3} parent=1 // loop_body
      %s29 = ssub.s32 %s24, 1
      %s30 = ssub.s32 %s24, 2
      %s31 = sadd.s32 %s24, 1
      %s32 = ssub.s32 %s24, %s31
      %p33 = scmp.eq.s32.totalorder %s32, 0
      %s35 = sadd.s32 %s34, 1
      %s36 = scalar_select %p33, %s34, %s35
      %p39 = pneg %p33
      %p40 = scmp.eq.s32.totalorder %s24, 1
      %p41 = por %p39, %p40
      %p42 = scmp.ne.s32.totalorder %s34, %s37
      %p43 = scmp.eq.s32.totalorder %s24, 0
      %p44 = por %p42, %p43
      %p45 = scmp.ne.s32.totalorder %s34, %s37
      %p46 = scmp.eq.s32.totalorder %s29, 1
      %p47 = por %p45, %p46
      %p48 = scmp.ne.s32.totalorder %s37, %s38
      %p49 = scmp.eq.s32.totalorder %s29, 0
      %p50 = por %p48, %p49
      %p51 = scmp.ne.s32.totalorder %s37, %s38
      %p52 = scmp.eq.s32.totalorder %s30, 1
      %p53 = por %p51, %p52
      %p55 = scmp.ne.s32.totalorder %s38, %s54
      %p56 = scmp.eq.s32.totalorder %s30, 0
      %p57 = por %p55, %p56
      %s59 = sadd.s32 %s58, 1
      %p62 = scmp.eq.s32.totalorder %s24, 1
      %p63 = scmp.ne.s32.totalorder %s58, %s60
      %p64 = scmp.eq.s32.totalorder %s24, 0
      %p65 = por %p63, %p64
      %p66 = scmp.ne.s32.totalorder %s58, %s60
      %p67 = scmp.eq.s32.totalorder %s29, 1
      %p68 = por %p66, %p67
      %p69 = scmp.ne.s32.totalorder %s60, %s61
      %p70 = scmp.eq.s32.totalorder %s29, 0
      %p71 = por %p69, %p70
      %p72 = scmp.ne.s32.totalorder %s60, %s61
      %p73 = scmp.eq.s32.totalorder %s30, 1
      %p74 = por %p72, %p73
      %p76 = scmp.ne.s32.totalorder %s61, %s75
      %p77 = scmp.eq.s32.totalorder %s30, 0
      %p78 = por %p76, %p77
      %s80 = sadd.s32 %s79, 1
      %p83 = scmp.eq.s32.totalorder %s24, 1
      %p84 = scmp.ne.s32.totalorder %s79, %s81
      %p85 = scmp.eq.s32.totalorder %s24, 0
      %p86 = por %p84, %p85
      %p87 = scmp.ne.s32.totalorder %s79, %s81
      %p88 = scmp.eq.s32.totalorder %s29, 1
      %p89 = por %p87, %p88
      %p90 = scmp.ne.s32.totalorder %s81, %s82
      %p91 = scmp.eq.s32.totalorder %s29, 0
      %p92 = por %p90, %p91
      %p93 = scmp.ne.s32.totalorder %s81, %s82
      %p94 = scmp.eq.s32.totalorder %s30, 1
      %p95 = por %p93, %p94
      %p97 = scmp.ne.s32.totalorder %s82, %s96
      %p98 = scmp.eq.s32.totalorder %s30, 0
      %p99 = por %p97, %p98
      %s101 = sadd.s32 %s100, 1
      %p104 = scmp.eq.s32.totalorder %s24, 1
      %p105 = scmp.ne.s32.totalorder %s100, %s102
      %p106 = scmp.eq.s32.totalorder %s24, 0
      %p107 = por %p105, %p106
      %p108 = scmp.ne.s32.totalorder %s100, %s102
      %p109 = scmp.eq.s32.totalorder %s29, 1
      %p110 = por %p108, %p109
      %p111 = scmp.ne.s32.totalorder %s102, %s103
      %p112 = scmp.eq.s32.totalorder %s29, 0
      %p113 = por %p111, %p112
      %p114 = scmp.ne.s32.totalorder %s102, %s103
      %p115 = scmp.eq.s32.totalorder %s30, 1
      %p116 = por %p114, %p115
      %p118 = scmp.ne.s32.totalorder %s103, %s117
      %p119 = scmp.eq.s32.totalorder %s30, 0
      %p120 = por %p118, %p119
      %s122 = sadd.s32 %s121, 1
      %p125 = scmp.eq.s32.totalorder %s24, 1
      %p126 = scmp.ne.s32.totalorder %s121, %s123
      %p127 = scmp.eq.s32.totalorder %s24, 0
      %p128 = por %p126, %p127
      %p129 = scmp.ne.s32.totalorder %s121, %s123
      %p130 = scmp.eq.s32.totalorder %s29, 1
      %p131 = por %p129, %p130
      %p132 = scmp.ne.s32.totalorder %s123, %s124
      %p133 = scmp.eq.s32.totalorder %s29, 0
      %p134 = por %p132, %p133
      %p135 = scmp.ne.s32.totalorder %s123, %s124
      %p136 = scmp.eq.s32.totalorder %s30, 1
      %p137 = por %p135, %p136
      %p139 = scmp.ne.s32.totalorder %s124, %s138
      %p140 = scmp.eq.s32.totalorder %s30, 0
      %p141 = por %p139, %p140
      %s143 = sadd.s32 %s142, 1
      %p146 = scmp.eq.s32.totalorder %s24, 1
      %p147 = scmp.ne.s32.totalorder %s142, %s144
      %p148 = scmp.eq.s32.totalorder %s24, 0
      %p149 = por %p147, %p148
      %p150 = scmp.ne.s32.totalorder %s142, %s144
      %p151 = scmp.eq.s32.totalorder %s29, 1
      %p152 = por %p150, %p151
      %p153 = scmp.ne.s32.totalorder %s144, %s145
      %p154 = scmp.eq.s32.totalorder %s29, 0
      %p155 = por %p153, %p154
      %p156 = scmp.ne.s32.totalorder %s144, %s145
      %p157 = scmp.eq.s32.totalorder %s30, 1
      %p158 = por %p156, %p157
      %p160 = scmp.ne.s32.totalorder %s145, %s159
      %p161 = scmp.eq.s32.totalorder %s30, 0
      %p162 = por %p160, %p161
      %s164 = sadd.s32 %s163, 1
      %p167 = scmp.eq.s32.totalorder %s24, 1
      %p168 = scmp.ne.s32.totalorder %s163, %s165
      %p169 = scmp.eq.s32.totalorder %s24, 0
      %p170 = por %p168, %p169
      %p171 = scmp.ne.s32.totalorder %s163, %s165
      %p172 = scmp.eq.s32.totalorder %s29, 1
      %p173 = por %p171, %p172
      %p174 = scmp.ne.s32.totalorder %s165, %s166
      %p175 = scmp.eq.s32.totalorder %s29, 0
      %p176 = por %p174, %p175
      %p177 = scmp.ne.s32.totalorder %s165, %s166
      %p178 = scmp.eq.s32.totalorder %s30, 1
      %p179 = por %p177, %p178
      %p181 = scmp.ne.s32.totalorder %s166, %s180
      %p182 = scmp.eq.s32.totalorder %s30, 0
      %p183 = por %p181, %p182
      %s185 = sadd.s32 %s184, 1
      %p188 = scmp.eq.s32.totalorder %s24, 1
      %p189 = scmp.ne.s32.totalorder %s184, %s186
      %p190 = scmp.eq.s32.totalorder %s24, 0
      %p191 = por %p189, %p190
      %p192 = scmp.ne.s32.totalorder %s184, %s186
      %p193 = scmp.eq.s32.totalorder %s29, 1
      %p194 = por %p192, %p193
      %p195 = scmp.ne.s32.totalorder %s186, %s187
      %p196 = scmp.eq.s32.totalorder %s29, 0
      %p197 = por %p195, %p196
      %p198 = scmp.ne.s32.totalorder %s186, %s187
      %p199 = scmp.eq.s32.totalorder %s30, 1
      %p200 = por %p198, %p199
      %p202 = scmp.ne.s32.totalorder %s187, %s201
      %p203 = scmp.eq.s32.totalorder %s30, 0
      %p204 = por %p202, %p203
      %s206 = sadd.s32 %s205, 1
      %p209 = scmp.eq.s32.totalorder %s24, 1
      %p210 = scmp.ne.s32.totalorder %s205, %s207
      %p211 = scmp.eq.s32.totalorder %s24, 0
      %p212 = por %p210, %p211
      %p213 = scmp.ne.s32.totalorder %s205, %s207
      %p214 = scmp.eq.s32.totalorder %s29, 1
      %p215 = por %p213, %p214
      %p216 = scmp.ne.s32.totalorder %s207, %s208
      %p217 = scmp.eq.s32.totalorder %s29, 0
      %p218 = por %p216, %p217
      %p219 = scmp.ne.s32.totalorder %s207, %s208
      %p220 = scmp.eq.s32.totalorder %s30, 1
      %p221 = por %p219, %p220
      %p223 = scmp.ne.s32.totalorder %s208, %s222
      %p224 = scmp.eq.s32.totalorder %s30, 0
      %p225 = por %p223, %p224
      %s227 = sadd.s32 %s226, 1
      %p230 = scmp.eq.s32.totalorder %s24, 1
      %p231 = scmp.ne.s32.totalorder %s226, %s228
      %p232 = scmp.eq.s32.totalorder %s24, 0
      %p233 = por %p231, %p232
      %p234 = scmp.ne.s32.totalorder %s226, %s228
      %p235 = scmp.eq.s32.totalorder %s29, 1
      %p236 = por %p234, %p235
      %p237 = scmp.ne.s32.totalorder %s228, %s229
      %p238 = scmp.eq.s32.totalorder %s29, 0
      %p239 = por %p237, %p238
      %p240 = scmp.ne.s32.totalorder %s228, %s229
      %p241 = scmp.eq.s32.totalorder %s30, 1
      %p242 = por %p240, %p241
      %p244 = scmp.ne.s32.totalorder %s229, %s243
      %p245 = scmp.eq.s32.totalorder %s30, 0
      %p246 = por %p244, %p245
      %s248 = sadd.s32 %s247, 1
      %p251 = scmp.eq.s32.totalorder %s24, 1
      %p252 = scmp.ne.s32.totalorder %s247, %s249
      %p253 = scmp.eq.s32.totalorder %s24, 0
      %p254 = por %p252, %p253
      %p255 = scmp.ne.s32.totalorder %s247, %s249
      %p256 = scmp.eq.s32.totalorder %s29, 1
      %p257 = por %p255, %p256
      %p258 = scmp.ne.s32.totalorder %s249, %s250
      %p259 = scmp.eq.s32.totalorder %s29, 0
      %p260 = por %p258, %p259
      %p261 = scmp.ne.s32.totalorder %s249, %s250
      %p262 = scmp.eq.s32.totalorder %s30, 1
      %p263 = por %p261, %p262
      %p265 = scmp.ne.s32.totalorder %s250, %s264
      %p266 = scmp.eq.s32.totalorder %s30, 0
      %p267 = por %p265, %p266
      %s269 = sadd.s32 %s268, 1
      %p272 = scmp.eq.s32.totalorder %s24, 1
      %p273 = scmp.ne.s32.totalorder %s268, %s270
      %p274 = scmp.eq.s32.totalorder %s24, 0
      %p275 = por %p273, %p274
      %p276 = scmp.ne.s32.totalorder %s268, %s270
      %p277 = scmp.eq.s32.totalorder %s29, 1
      %p278 = por %p276, %p277
      %p279 = scmp.ne.s32.totalorder %s270, %s271
      %p280 = scmp.eq.s32.totalorder %s29, 0
      %p281 = por %p279, %p280
      %p282 = scmp.ne.s32.totalorder %s270, %s271
      %p283 = scmp.eq.s32.totalorder %s30, 1
      %p284 = por %p282, %p283
      %p286 = scmp.ne.s32.totalorder %s271, %s285
      %p287 = scmp.eq.s32.totalorder %s30, 0
      %p288 = por %p286, %p287
      %s289 = ssub.s32 %s24, %s31
      %p290 = scmp.eq.s32.totalorder %s289, 0
      %s292 = sadd.s32 %s291, 1
      %s293 = scalar_select %p290, %s291, %s292
      %p296 = pneg %p290
      %p297 = scmp.eq.s32.totalorder %s24, 1
      %p298 = por %p296, %p297
      %p299 = scmp.ne.s32.totalorder %s291, %s294
      %p300 = scmp.eq.s32.totalorder %s24, 0
      %p301 = por %p299, %p300
      %p302 = scmp.ne.s32.totalorder %s291, %s294
      %p303 = scmp.eq.s32.totalorder %s29, 1
      %p304 = por %p302, %p303
      %p305 = scmp.ne.s32.totalorder %s294, %s295
      %p306 = scmp.eq.s32.totalorder %s29, 0
      %p307 = por %p305, %p306
      %p308 = scmp.ne.s32.totalorder %s294, %s295
      %p309 = scmp.eq.s32.totalorder %s30, 1
      %p310 = por %p308, %p309
      %p312 = scmp.ne.s32.totalorder %s295, %s311
      %p313 = scmp.eq.s32.totalorder %s30, 0
      %p314 = por %p312, %p313
      %p315 = scmp.le.s32.totalorder 1, %s24
      %p316 = scmp.lt.s32.totalorder %s24, 3
      %p317 = pnand %p315, %p316
      %p318 = pneg %p317
      // Predicated region
      $region9: #{transformer_forward.3} parent=5 // pred_check
        _
      $region10: #{transformer_forward.3} parent=5 // pred_check_branch
        %320 = sbr.rel (%p317) target = $region12
      $region11: #{transformer_forward.3} parent=5 // pred_region
        %s321 = ssub.s32 %s24, 1
        // Predicated region
        $region13: #{transformer_forward.3} parent=11 // pred_check
          %p322 = pneg %p71
        $region14: #{transformer_forward.3} parent=11 // pred_check_branch
          %324 = sbr.rel (%p322) target = $region16
        $region15: #{transformer_forward.3} parent=11 // pred_region
          _
        $region16: #{transformer_forward.3} parent=11 // pred_fallthru
          _
        // Predicated region
        $region17: #{transformer_forward.3} parent=11 // pred_check
          %p325 = pneg %p92
        $region18: #{transformer_forward.3} parent=11 // pred_check_branch
          %327 = sbr.rel (%p325) target = $region20
        $region19: #{transformer_forward.3} parent=11 // pred_region
          _
        $region20: #{transformer_forward.3} parent=11 // pred_fallthru
          _
        // Predicated region
        $region21: #{transformer_forward.3} parent=11 // pred_check
          %p328 = pneg %p113
        $region22: #{transformer_forward.3} parent=11 // pred_check_branch
          %330 = sbr.rel (%p328) target = $region24
        $region23: #{transformer_forward.3} parent=11 // pred_region
          %332 = vsyncadd [#allocation7], 0
          %s333 = sshll.u32 %s3, 4
          %s334 = int_to_ptr.hbm [resolvable:$true] %s333
          %s335 = sshll.u32 [#allocation6], 4
          %s336 = int_to_ptr.vmem [resolvable:$true] %s335
          %341 = dma.hbm_to_vmem [thread:$0]  %s334, 3072, %s336, [#allocation7], 192, 192, 12
        $region24: #{transformer_forward.3} parent=11 // pred_fallthru
          _
        // Predicated region
        $region25: #{transformer_forward.3} parent=11 // pred_check
          %p342 = pneg %p134
        $region26: #{transformer_forward.3} parent=11 // pred_check_branch
          %344 = sbr.rel (%p342) target = $region28
        $region27: #{transformer_forward.3} parent=11 // pred_region
          %346 = vsyncadd [#allocation10], 0
          %s347 = sshll.u32 %s4, 4
          %s348 = int_to_ptr.hbm [resolvable:$true] %s347
          %s349 = sshll.u32 [#allocation9], 4
          %s350 = int_to_ptr.vmem [resolvable:$true] %s349
          %355 = dma.hbm_to_vmem [thread:$0]  %s348, 1024, %s350, [#allocation10], 64, 64, 4
        $region28: #{transformer_forward.3} parent=11 // pred_fallthru
          _
        // Predicated region
        $region29: #{transformer_forward.3} parent=11 // pred_check
          %p356 = pneg %p155
        $region30: #{transformer_forward.3} parent=11 // pred_check_branch
          %358 = sbr.rel (%p356) target = $region32
        $region31: #{transformer_forward.3} parent=11 // pred_region
          _
        $region32: #{transformer_forward.3} parent=11 // pred_fallthru
          _
        // Predicated region
        $region33: #{transformer_forward.3} parent=11 // pred_check
          %p359 = pneg %p176
        $region34: #{transformer_forward.3} parent=11 // pred_check_branch
          %361 = sbr.rel (%p359) target = $region36
        $region35: #{transformer_forward.3} parent=11 // pred_region
          _
        $region36: #{transformer_forward.3} parent=11 // pred_fallthru
          _
        // Predicated region
        $region37: #{transformer_forward.3} parent=11 // pred_check
          %p362 = pneg %p197
        $region38: #{transformer_forward.3} parent=11 // pred_check_branch
          %364 = sbr.rel (%p362) target = $region40
        $region39: #{transformer_forward.3} parent=11 // pred_region
          _
        $region40: #{transformer_forward.3} parent=11 // pred_fallthru
          _
        // Predicated region
        $region41: #{transformer_forward.3} parent=11 // pred_check
          %p365 = pneg %p218
        $region42: #{transformer_forward.3} parent=11 // pred_check_branch
          %367 = sbr.rel (%p365) target = $region44
        $region43: #{transformer_forward.3} parent=11 // pred_region
          %369 = vsyncadd [#allocation10], 0
          %s370 = sshll.u32 %s8, 4
          %s371 = int_to_ptr.hbm [resolvable:$true] %s370
          %s372 = sshll.u32 [#allocation11], 4
          %s373 = int_to_ptr.vmem [resolvable:$true] %s372
          %378 = dma.hbm_to_vmem [thread:$0]  %s371, 2048, %s373, [#allocation10], 128, 128, 8
        $region44: #{transformer_forward.3} parent=11 // pred_fallthru
          _
        // Predicated region
        $region45: #{transformer_forward.3} parent=11 // pred_check
          %p379 = pneg %p239
        $region46: #{transformer_forward.3} parent=11 // pred_check_branch
          %381 = sbr.rel (%p379) target = $region48
        $region47: #{transformer_forward.3} parent=11 // pred_region
          _
        $region48: #{transformer_forward.3} parent=11 // pred_fallthru
          _
        // Predicated region
        $region49: #{transformer_forward.3} parent=11 // pred_check
          %p382 = pneg %p260
        $region50: #{transformer_forward.3} parent=11 // pred_check_branch
          %384 = sbr.rel (%p382) target = $region52
        $region51: #{transformer_forward.3} parent=11 // pred_region
          %386 = vsyncadd [#allocation13], 0
          %s387 = sshll.u32 %s10, 4
          %s388 = int_to_ptr.hbm [resolvable:$true] %s387
          %s389 = sshll.u32 [#allocation12], 4
          %s390 = int_to_ptr.vmem [resolvable:$true] %s389
          %395 = dma.hbm_to_vmem [thread:$0]  %s388, 2048, %s390, [#allocation13], 64, 64, 4
        $region52: #{transformer_forward.3} parent=11 // pred_fallthru
          _
        // Predicated region
        $region53: #{transformer_forward.3} parent=11 // pred_check
          %p396 = pneg %p281
        $region54: #{transformer_forward.3} parent=11 // pred_check_branch
          %398 = sbr.rel (%p396) target = $region56
        $region55: #{transformer_forward.3} parent=11 // pred_region
          _
        $region56: #{transformer_forward.3} parent=11 // pred_fallthru
          _
      $region12: #{transformer_forward.3} parent=5 // pred_fallthru
        _
      %p399 = scmp.lt.s32.totalorder %s24, 2
      // Predicated region
      $region57: #{transformer_forward.3} parent=5 // pred_check
        %p400 = pneg %p399
      $region58: #{transformer_forward.3} parent=5 // pred_check_branch
        %402 = sbr.rel (%p400) target = $region60
      $region59: #{transformer_forward.3} parent=5 // pred_region
        // Predicated region
        $region61: #{transformer_forward.3} parent=59 // pred_check
          %p403 = pneg %p44
        $region62: #{transformer_forward.3} parent=59 // pred_check_branch
          %405 = sbr.rel (%p403) target = $region64
        $region63: #{transformer_forward.3} parent=59 // pred_region
          %p406 = scmp.lt.s32.totalorder %s24, 1
          %s407 = scalar_select %p406, %s24, 1
          %s408 = smul.addr %s407, 8
          %s409 = scalar_lea.vmem %s0, %s408
        $region64: #{transformer_forward.3} parent=59 // pred_fallthru
          _
      $region60: #{transformer_forward.3} parent=5 // pred_fallthru
        _
      %p410 = scmp.le.s32.totalorder 1, %s24
      %p411 = scmp.lt.s32.totalorder %s24, 3
      %p412 = pnand %p410, %p411
      %p413 = pneg %p412
      // Predicated region
      $region65: #{transformer_forward.3} parent=5 // pred_check
        _
      $region66: #{transformer_forward.3} parent=5 // pred_check_branch
        %415 = sbr.rel (%p412) target = $region68
      $region67: #{transformer_forward.3} parent=5 // pred_region
        %s416 = ssub.s32 %s24, 1
        // Predicated region
        $region69: #{transformer_forward.3} parent=67 // pred_check
          %p417 = pneg %p113
        $region70: #{transformer_forward.3} parent=67 // pred_check_branch
          %419 = sbr.rel (%p417) target = $region72
        $region71: #{transformer_forward.3} parent=67 // pred_region
          %421 = dma.done [#allocation7], 3072
        $region72: #{transformer_forward.3} parent=67 // pred_fallthru
          _
        // Predicated region
        $region73: #{transformer_forward.3} parent=67 // pred_check
          %p422 = pneg %p134
        $region74: #{transformer_forward.3} parent=67 // pred_check_branch
          %424 = sbr.rel (%p422) target = $region76
        $region75: #{transformer_forward.3} parent=67 // pred_region
          %426 = dma.done [#allocation10], 1024
        $region76: #{transformer_forward.3} parent=67 // pred_fallthru
          _
        // Predicated region
        $region77: #{transformer_forward.3} parent=67 // pred_check
          %p427 = pneg %p218
        $region78: #{transformer_forward.3} parent=67 // pred_check_branch
          %429 = sbr.rel (%p427) target = $region80
        $region79: #{transformer_forward.3} parent=67 // pred_region
          %431 = dma.done [#allocation10], 2048
        $region80: #{transformer_forward.3} parent=67 // pred_fallthru
          _
        // Predicated region
        $region81: #{transformer_forward.3} parent=67 // pred_check
          %p432 = pneg %p260
        $region82: #{transformer_forward.3} parent=67 // pred_check_branch
          %434 = sbr.rel (%p432) target = $region84
        $region83: #{transformer_forward.3} parent=67 // pred_region
          %436 = dma.done [#allocation13], 2048
        $region84: #{transformer_forward.3} parent=67 // pred_fallthru
          _
        %p437 = scmp.lt.s32.totalorder %s29, 1
        %s438 = scalar_select %p437, %s29, 1
        %s439 = smul.addr %s438, 8
        %s440 = scalar_lea.vmem %s0, %s439
        %p441 = pneg %p50
        %p442 = pneg %p47
        %p443 = pneg %p71
        %p444 = pneg %p68
        %p445 = pneg %p92
        %p446 = pneg %p89
        %p447 = pneg %p113
        %p448 = pneg %p110
        %p449 = pneg %p134
        %p450 = pneg %p131
        %p451 = pneg %p155
        %p452 = pneg %p152
        %p453 = pneg %p176
        %p454 = pneg %p173
        %p455 = pneg %p197
        %p456 = pneg %p194
        %p457 = pneg %p218
        %p458 = pneg %p215
        %p459 = pneg %p239
        %p460 = pneg %p236
        %p461 = pneg %p260
        %p462 = pneg %p257
        %p463 = pneg %p281
        %p464 = pneg %p278
        %p465 = pneg %p307
        %p466 = pneg %p304
        %s467 = sand.u32 %s294, 1
        %s468 = scalar_lea.sflag [#allocation8], %s467
        %s469 = sand.u32 %s294, 1
        %s470 = smul.addr %s469, 8
        %s471 = scalar_lea.vmem [#allocation14], %s470
        %p472 = scmp.lt.s32.totalorder %s29, 1
        %s473 = scalar_select %p472, %s29, 1
        %s474 = smul.addr %s473, 8
        %s475 = scalar_lea.vmem %s0, %s474
        %v477 = vld [vmem:[%s475] sm:$0xff]
        %v478 = vld [vmem:[%s1] sm:$0x1]
        %v479 = vld [vmem:[%s2] sm:$0x1]
        %480 = vadd.xlane.f32.xlu0 %v477
        %v481 = vpop.xlane.xlu0 %480
        %v482 = vrcp.pop 128.0
        %v483 = vmul.f32 128.0, %v482
        %v484 = vsub.f32 1.0, %v483
        %v485 = vmul.f32 %v482, %v484
        %v486 = vadd.f32 %v482, %v485
        %vm487 = vweird.f32 %v482
        %v488 = vsel %vm487, %v482, %v486
        %v489 = vmul.f32 %v481, %v488
        %v490 = vsub.f32 %v477, %v489
        %v491 = vmul.f32 %v490, %v490
        %492 = vadd.xlane.f32.xlu0 %v491
        %v493 = vpop.xlane.xlu0 %492
        %v494 = vmul.f32 %v493, %v488
        %v495 = vadd.f32 %v494, 1e-05
        %v496 = vrsqrt.pop %v495
        %v497 = vmul.f32 %v496, %v495
        %v498 = vmul.f32 %v497, %v496
        %v499 = vmul.f32 0.5, %v498
        %v500 = vsub.f32 1.5, %v499
        %v501 = vmul.f32 %v496, %v500
        %vm502 = vweird.f32 %v495
        %vm503 = vweird.f32 %v496
        %vm504 = vmor %vm502, %vm503
        %v505 = vsel %vm504, %v496, %v501
        %v506 = vmul.f32 %v490, %v505
        %v508 = vperm.slane %v478, 0
        %v510 = vmul.f32 %v506, %v508
        %v512 = vperm.slane %v479, 0
        %v514 = vadd.f32 %v510, %v512
        %v515 = vpack.c.bf16 %v514, %v514
        %v516 = vld [vmem:[#allocation6] sm:$0xff]
        %v517 = vld [vmem:[#allocation6 + $0x8] sm:$0xf]
        %v518 = vld [vmem:[#allocation6 + $0xc] sm:$0xff]
        %v519 = vld [vmem:[#allocation6 + $0x14] sm:$0xf]
        %v520 = vld [vmem:[#allocation6 + $0x18] sm:$0xff]
        %v521 = vld [vmem:[#allocation6 + $0x20] sm:$0xf]
        %v522 = vld [vmem:[#allocation6 + $0x24] sm:$0xff]
        %v523 = vld [vmem:[#allocation6 + $0x2c] sm:$0xf]
        %v524 = vld [vmem:[#allocation6 + $0x30] sm:$0xff]
        %v525 = vld [vmem:[#allocation6 + $0x38] sm:$0xf]
        %v526 = vld [vmem:[#allocation6 + $0x3c] sm:$0xff]
        %v527 = vld [vmem:[#allocation6 + $0x44] sm:$0xf]
        %v528 = vld [vmem:[#allocation6 + $0x48] sm:$0xff]
        %v529 = vld [vmem:[#allocation6 + $0x50] sm:$0xf]
        %v530 = vld [vmem:[#allocation6 + $0x54] sm:$0xff]
        %v531 = vld [vmem:[#allocation6 + $0x5c] sm:$0xf]
        %v532 = vld [vmem:[#allocation6 + $0x60] sm:$0xff]
        %v533 = vld [vmem:[#allocation6 + $0x68] sm:$0xf]
        %v534 = vld [vmem:[#allocation6 + $0x6c] sm:$0xff]
        %v535 = vld [vmem:[#allocation6 + $0x74] sm:$0xf]
        %v536 = vld [vmem:[#allocation6 + $0x78] sm:$0xff]
        %v537 = vld [vmem:[#allocation6 + $0x80] sm:$0xf]
        %v538 = vld [vmem:[#allocation6 + $0x84] sm:$0xff]
        %v539 = vld [vmem:[#allocation6 + $0x8c] sm:$0xf]
        %v540 = vld [vmem:[#allocation6 + $0x90] sm:$0xff]
        %v541 = vld [vmem:[#allocation6 + $0x98] sm:$0xf]
        %v542 = vld [vmem:[#allocation6 + $0x9c] sm:$0xff]
        %v543 = vld [vmem:[#allocation6 + $0xa4] sm:$0xf]
        %v544 = vld [vmem:[#allocation6 + $0xa8] sm:$0xff]
        %v545 = vld [vmem:[#allocation6 + $0xb0] sm:$0xf]
        %v546 = vld [vmem:[#allocation6 + $0xb4] sm:$0xff]
        %v547 = vld [vmem:[#allocation6 + $0xbc] sm:$0xf]
        %v580 = vunpack.c.l.b16 %v516
        %v581 = vunpack.c.h.b16 %v516
        %v582 = vunpack.c.l.b16 %v517
        %v583 = vunpack.c.l.b16 %v518
        %v584 = vunpack.c.h.b16 %v518
        %v585 = vunpack.c.l.b16 %v519
        %v586 = vunpack.c.l.b16 %v520
        %v587 = vunpack.c.h.b16 %v520
        %v588 = vunpack.c.l.b16 %v521
        %v589 = vunpack.c.l.b16 %v522
        %v590 = vunpack.c.h.b16 %v522
        %v591 = vunpack.c.l.b16 %v523
        %v592 = vunpack.c.l.b16 %v524
        %v593 = vunpack.c.h.b16 %v524
        %v594 = vunpack.c.l.b16 %v525
        %v595 = vunpack.c.l.b16 %v526
        %v596 = vunpack.c.h.b16 %v526
        %v597 = vunpack.c.l.b16 %v527
        %v598 = vunpack.c.l.b16 %v528
        %v599 = vunpack.c.h.b16 %v528
        %v600 = vunpack.c.l.b16 %v529
        %v601 = vunpack.c.l.b16 %v530
        %v602 = vunpack.c.h.b16 %v530
        %v603 = vunpack.c.l.b16 %v531
        %v604 = vunpack.c.l.b16 %v532
        %v605 = vunpack.c.h.b16 %v532
        %v606 = vunpack.c.l.b16 %v533
        %v607 = vunpack.c.l.b16 %v534
        %v608 = vunpack.c.h.b16 %v534
        %v609 = vunpack.c.l.b16 %v535
        %v610 = vunpack.c.l.b16 %v536
        %v611 = vunpack.c.h.b16 %v536
        %v612 = vunpack.c.l.b16 %v537
        %v613 = vunpack.c.l.b16 %v538
        %v614 = vunpack.c.h.b16 %v538
        %v615 = vunpack.c.l.b16 %v539
        %v616 = vunpack.c.l.b16 %v540
        %v617 = vunpack.c.h.b16 %v540
        %v618 = vunpack.c.l.b16 %v541
        %v619 = vunpack.c.l.b16 %v542
        %v620 = vunpack.c.h.b16 %v542
        %v621 = vunpack.c.l.b16 %v543
        %v622 = vunpack.c.l.b16 %v544
        %v623 = vunpack.c.h.b16 %v544
        %v624 = vunpack.c.l.b16 %v545
        %v625 = vunpack.c.l.b16 %v546
        %v626 = vunpack.c.h.b16 %v546
        %v627 = vunpack.c.l.b16 %v547
        %v628 = vpack.c.b16 %v583, %v580
        %v629 = vpack.c.b16 %v584, %v581
        %v630 = vpack.c.b16 %v585, %v582
        %v631 = vpack.c.b16 %v589, %v586
        %v632 = vpack.c.b16 %v590, %v587
        %v633 = vpack.c.b16 %v591, %v588
        %v634 = vpack.c.b16 %v595, %v592
        %v635 = vpack.c.b16 %v596, %v593
        %v636 = vpack.c.b16 %v597, %v594
        %v637 = vpack.c.b16 %v601, %v598
        %v638 = vpack.c.b16 %v602, %v599
        %v639 = vpack.c.b16 %v603, %v600
        %v640 = vpack.c.b16 %v607, %v604
        %v641 = vpack.c.b16 %v608, %v605
        %v642 = vpack.c.b16 %v609, %v606
        %v643 = vpack.c.b16 %v613, %v610
        %v644 = vpack.c.b16 %v614, %v611
        %v645 = vpack.c.b16 %v615, %v612
        %v646 = vpack.c.b16 %v619, %v616
        %v647 = vpack.c.b16 %v620, %v617
        %v648 = vpack.c.b16 %v621, %v618
        %v649 = vpack.c.b16 %v625, %v622
        %v650 = vpack.c.b16 %v626, %v623
        %v651 = vpack.c.b16 %v627, %v624
        %676 = vmatpush.bf16.msra.mxu0 %v649
        %677 = vmatpush.bf16.msra.mxu0 %v646
        %678 = vmatpush.bf16.msra.mxu0 %v643
        %679 = vmatpush.bf16.msra.mxu0 %v640
        %680 = vmatpush.bf16.msra.mxu0 %v637
        %681 = vmatpush.bf16.msra.mxu0 %v634
        %682 = vmatpush.bf16.msra.mxu0 %v631
        %683 = vmatpush.bf16.msra.mxu0 %v628
        %684 = vmatmul.bf16.gmra.mxu0 %v515
        %v685 = vpop.f32.mrf.mxu0
        %v686 = vadd.f32 0.0, %v685
        %v687 = vpop.f32.mrf.mxu0
        %688 = vdwg.mxu0
        %689 = vmatpush.bf16.msra.mxu0 %v650
        %690 = vmatpush.bf16.msra.mxu0 %v647
        %691 = vmatpush.bf16.msra.mxu0 %v644
        %692 = vmatpush.bf16.msra.mxu0 %v641
        %693 = vmatpush.bf16.msra.mxu0 %v638
        %694 = vmatpush.bf16.msra.mxu0 %v635
        %695 = vmatpush.bf16.msra.mxu0 %v632
        %696 = vmatpush.bf16.msra.mxu0 %v629
        %697 = vmatmul.bf16.gmra.mxu0 %v515
        %v698 = vpop.f32.mrf.mxu0
        %v699 = vadd.f32 0.0, %v698
        %v700 = vpop.f32.mrf.mxu0
        %701 = vdwg.mxu0
        %702 = vmatpush.bf16.msra.mxu0 %v651
        %703 = vmatpush.bf16.msra.mxu0 %v648
        %704 = vmatpush.bf16.msra.mxu0 %v645
        %705 = vmatpush.bf16.msra.mxu0 %v642
        %706 = vmatpush.bf16.msra.mxu0 %v639
        %707 = vmatpush.bf16.msra.mxu0 %v636
        %708 = vmatpush.bf16.msra.mxu0 %v633
        %709 = vmatpush.bf16.msra.mxu0 %v630
        %710 = vmatmul.bf16.gmra.mxu0 %v515
        %v711 = vpop.f32.mrf.mxu0
        %v712 = vadd.f32 0.0, %v711
        %v713 = vpop.f32.mrf.mxu0
        %714 = vdwg.mxu0
        %v715 = vmul.f32 %v686, 0.17677669
        %v716 = vpack.c.bf16 %v715, %v715
        %vm717 = vcmask 257024
        %718 = vst.msk [vmem:[#allocation2] sm:$0xf] %vm717, %v716
        %v719 = vpack.c.bf16 %v699, %v699
        %720 = vst.msk [vmem:[#allocation3] sm:$0xf] %vm717, %v719
        %v721 = vpack.c.bf16 %v712, %v712
        %722 = vst.msk [vmem:[#allocation4] sm:$0xf] %vm717, %v721
        %724 = vrot.lane.b32.xlu0 %v716, 96
        %v725 = vpop.permute.xlu0 %724
        %s727 = scalar_lea.vmem [#allocation2], 4
        %728 = vst.msk [vmem:[%s727] sm:$0xf] %vm717, %v725
        %730 = vrot.lane.b32.xlu0 %v719, 96
        %v731 = vpop.permute.xlu0 %730
        %s733 = scalar_lea.vmem [#allocation3], 4
        %734 = vst.msk [vmem:[%s733] sm:$0xf] %vm717, %v731
        %736 = vrot.lane.b32.xlu0 %v721, 96
        %v737 = vpop.permute.xlu0 %736
        %s739 = scalar_lea.vmem [#allocation4], 4
        %740 = vst.msk [vmem:[%s739] sm:$0xf] %vm717, %v737
        %741 = vrot.lane.b32.xlu0 %v716, 64
        %v742 = vpop.permute.xlu0 %741
        %s744 = scalar_lea.vmem [#allocation2], 8
        %745 = vst.msk [vmem:[%s744] sm:$0xf] %vm717, %v742
        %746 = vrot.lane.b32.xlu0 %v719, 64
        %v747 = vpop.permute.xlu0 %746
        %s749 = scalar_lea.vmem [#allocation3], 8
        %750 = vst.msk [vmem:[%s749] sm:$0xf] %vm717, %v747
        %751 = vrot.lane.b32.xlu0 %v721, 64
        %v752 = vpop.permute.xlu0 %751
        %s754 = scalar_lea.vmem [#allocation4], 8
        %755 = vst.msk [vmem:[%s754] sm:$0xf] %vm717, %v752
        %756 = vrot.lane.b32.xlu0 %v716, 32
        %v757 = vpop.permute.xlu0 %756
        %s759 = scalar_lea.vmem [#allocation2], 12
        %760 = vst.msk [vmem:[%s759] sm:$0xf] %vm717, %v757
        %761 = vrot.lane.b32.xlu0 %v719, 32
        %v762 = vpop.permute.xlu0 %761
        %s764 = scalar_lea.vmem [#allocation3], 12
        %765 = vst.msk [vmem:[%s764] sm:$0xf] %vm717, %v762
        %766 = vrot.lane.b32.xlu0 %v721, 32
        %v767 = vpop.permute.xlu0 %766
        %s769 = scalar_lea.vmem [#allocation4], 12
        %770 = vst.msk [vmem:[%s769] sm:$0xf] %vm717, %v767
        %v771 = vld [vmem:[#allocation2] sm:$0xf]
        %v772 = vld [vmem:[#allocation2 + $0x4] sm:$0xf]
        %v773 = vld [vmem:[#allocation2 + $0x8] sm:$0xf]
        %v774 = vld [vmem:[#allocation2 + $0xc] sm:$0xf]
        %v775 = vld [vmem:[#allocation3] sm:$0xf]
        %v776 = vld [vmem:[#allocation3 + $0x4] sm:$0xf]
        %v777 = vld [vmem:[#allocation3 + $0x8] sm:$0xf]
        %v778 = vld [vmem:[#allocation3 + $0xc] sm:$0xf]
        %vm779 = vcmask 261120
        %v781 = vsel %vm779, %v771, 0
        %v784 = vsel %vm779, %v775, 0
        %786 = vmatpush.bf16.xpose.msra.mxu0 0
        %787 = vmatpush.bf16.xpose.msra.mxu0 0
        %788 = vmatpush.bf16.xpose.msra.mxu0 0
        %789 = vmatpush.bf16.xpose.msra.mxu0 0
        %790 = vmatpush.bf16.xpose.msra.mxu0 0
        %791 = vmatpush.bf16.xpose.msra.mxu0 0
        %792 = vmatpush.bf16.xpose.msra.mxu0 0
        %793 = vmatpush.bf16.xpose.msra.mxu0 %v784
        %794 = vmatmul.bf16.gmra.mxu0 %v781
        %v795 = vpop.f32.mrf.mxu0
        %v796 = vadd.f32 0.0, %v795
        %v797 = vpop.f32.mrf.mxu0
        %798 = vdwg.mxu0
        %v800 = vsel %vm779, %v772, 0
        %v803 = vsel %vm779, %v776, 0
        %805 = vmatpush.bf16.xpose.msra.mxu0 0
        %806 = vmatpush.bf16.xpose.msra.mxu0 0
        %807 = vmatpush.bf16.xpose.msra.mxu0 0
        %808 = vmatpush.bf16.xpose.msra.mxu0 0
        %809 = vmatpush.bf16.xpose.msra.mxu0 0
        %810 = vmatpush.bf16.xpose.msra.mxu0 0
        %811 = vmatpush.bf16.xpose.msra.mxu0 0
        %812 = vmatpush.bf16.xpose.msra.mxu0 %v803
        %813 = vmatmul.bf16.gmra.mxu0 %v800
        %v814 = vpop.f32.mrf.mxu0
        %v815 = vadd.f32 0.0, %v814
        %v816 = vpop.f32.mrf.mxu0
        %817 = vdwg.mxu0
        %v819 = vsel %vm779, %v773, 0
        %v822 = vsel %vm779, %v777, 0
        %824 = vmatpush.bf16.xpose.msra.mxu0 0
        %825 = vmatpush.bf16.xpose.msra.mxu0 0
        %826 = vmatpush.bf16.xpose.msra.mxu0 0
        %827 = vmatpush.bf16.xpose.msra.mxu0 0
        %828 = vmatpush.bf16.xpose.msra.mxu0 0
        %829 = vmatpush.bf16.xpose.msra.mxu0 0
        %830 = vmatpush.bf16.xpose.msra.mxu0 0
        %831 = vmatpush.bf16.xpose.msra.mxu0 %v822
        %832 = vmatmul.bf16.gmra.mxu0 %v819
        %v833 = vpop.f32.mrf.mxu0
        %v834 = vadd.f32 0.0, %v833
        %v835 = vpop.f32.mrf.mxu0
        %836 = vdwg.mxu0
        %v838 = vsel %vm779, %v774, 0
        %v841 = vsel %vm779, %v778, 0
        %843 = vmatpush.bf16.xpose.msra.mxu0 0
        %844 = vmatpush.bf16.xpose.msra.mxu0 0
        %845 = vmatpush.bf16.xpose.msra.mxu0 0
        %846 = vmatpush.bf16.xpose.msra.mxu0 0
        %847 = vmatpush.bf16.xpose.msra.mxu0 0
        %848 = vmatpush.bf16.xpose.msra.mxu0 0
        %849 = vmatpush.bf16.xpose.msra.mxu0 0
        %850 = vmatpush.bf16.xpose.msra.mxu0 %v841
        %851 = vmatmul.bf16.gmra.mxu0 %v838
        %v852 = vpop.f32.mrf.mxu0
        %v853 = vadd.f32 0.0, %v852
        %v854 = vpop.f32.mrf.mxu0
        %855 = vdwg.mxu0
        %vm856 = vcmask 64512
        %v857 = vsel %vm856, %v796, -inf
        %858 = vmax.xlane.f32.xlu0 %v857
        %v859 = vpop.xlane.xlu0 %858
        %v860 = vsel %vm856, %v815, -inf
        %861 = vmax.xlane.f32.xlu0 %v860
        %v862 = vpop.xlane.xlu0 %861
        %v863 = vsel %vm856, %v834, -inf
        %864 = vmax.xlane.f32.xlu0 %v863
        %v865 = vpop.xlane.xlu0 %864
        %v866 = vsel %vm856, %v853, -inf
        %867 = vmax.xlane.f32.xlu0 %v866
        %v868 = vpop.xlane.xlu0 %867
        %v869 = vsub.f32 %v796, %v859
        %v870 = vsub.f32 %v815, %v862
        %v871 = vsub.f32 %v834, %v865
        %v872 = vsub.f32 %v853, %v868
        %v873 = vmul.f32 %v869, 1.442695
        %v874 = vpow.pop %v873
        %v875 = vmul.f32 %v870, 1.442695
        %v876 = vpow.pop %v875
        %v877 = vmul.f32 %v871, 1.442695
        %v878 = vpow.pop %v877
        %v879 = vmul.f32 %v872, 1.442695
        %v880 = vpow.pop %v879
        %v881 = vsel %vm856, %v874, 0.0
        %882 = vadd.xlane.f32.xlu0 %v881
        %v883 = vpop.xlane.xlu0 %882
        %v884 = vsel %vm856, %v876, 0.0
        %885 = vadd.xlane.f32.xlu0 %v884
        %v886 = vpop.xlane.xlu0 %885
        %v887 = vsel %vm856, %v878, 0.0
        %888 = vadd.xlane.f32.xlu0 %v887
        %v889 = vpop.xlane.xlu0 %888
        %v890 = vsel %vm856, %v880, 0.0
        %891 = vadd.xlane.f32.xlu0 %v890
        %v892 = vpop.xlane.xlu0 %891
        %v893 = vrcp.pop %v883
        %v894 = vrcp.pop %v886
        %v895 = vrcp.pop %v889
        %v896 = vrcp.pop %v892
        %v897 = vmul.f32 %v874, %v893
        %v898 = vmul.f32 %v876, %v894
        %v899 = vmul.f32 %v878, %v895
        %v900 = vmul.f32 %v880, %v896
        %v901 = vpack.c.bf16 %v897, %v897
        %v902 = vpack.c.bf16 %v898, %v898
        %v903 = vpack.c.bf16 %v899, %v899
        %v904 = vpack.c.bf16 %v900, %v900
        %v905 = vld [vmem:[#allocation4] sm:$0xf]
        %v906 = vld [vmem:[#allocation4 + $0x4] sm:$0xf]
        %v907 = vld [vmem:[#allocation4 + $0x8] sm:$0xf]
        %v908 = vld [vmem:[#allocation4 + $0xc] sm:$0xf]
        %v910 = vsel %vm856, %v901, 0
        %vm912 = vcmask 1043456
        %v914 = vsel %vm912, %v905, 0
        %916 = vmatpush.bf16.msra.mxu0 0
        %917 = vmatpush.bf16.msra.mxu0 0
        %918 = vmatpush.bf16.msra.mxu0 0
        %919 = vmatpush.bf16.msra.mxu0 0
        %920 = vmatpush.bf16.msra.mxu0 0
        %921 = vmatpush.bf16.msra.mxu0 0
        %922 = vmatpush.bf16.msra.mxu0 0
        %923 = vmatpush.bf16.msra.mxu0 %v914
        %924 = vmatmul.bf16.gmra.mxu0 %v910
        %v925 = vpop.f32.mrf.mxu0
        %v926 = vadd.f32 0.0, %v925
        %v927 = vpop.f32.mrf.mxu0
        %928 = vdwg.mxu0
        %v930 = vsel %vm856, %v902, 0
        %v933 = vsel %vm912, %v906, 0
        %935 = vmatpush.bf16.msra.mxu0 0
        %936 = vmatpush.bf16.msra.mxu0 0
        %937 = vmatpush.bf16.msra.mxu0 0
        %938 = vmatpush.bf16.msra.mxu0 0
        %939 = vmatpush.bf16.msra.mxu0 0
        %940 = vmatpush.bf16.msra.mxu0 0
        %941 = vmatpush.bf16.msra.mxu0 0
        %942 = vmatpush.bf16.msra.mxu0 %v933
        %943 = vmatmul.bf16.gmra.mxu0 %v930
        %v944 = vpop.f32.mrf.mxu0
        %v945 = vadd.f32 0.0, %v944
        %v946 = vpop.f32.mrf.mxu0
        %947 = vdwg.mxu0
        %v949 = vsel %vm856, %v903, 0
        %v952 = vsel %vm912, %v907, 0
        %954 = vmatpush.bf16.msra.mxu0 0
        %955 = vmatpush.bf16.msra.mxu0 0
        %956 = vmatpush.bf16.msra.mxu0 0
        %957 = vmatpush.bf16.msra.mxu0 0
        %958 = vmatpush.bf16.msra.mxu0 0
        %959 = vmatpush.bf16.msra.mxu0 0
        %960 = vmatpush.bf16.msra.mxu0 0
        %961 = vmatpush.bf16.msra.mxu0 %v952
        %962 = vmatmul.bf16.gmra.mxu0 %v949
        %v963 = vpop.f32.mrf.mxu0
        %v964 = vadd.f32 0.0, %v963
        %v965 = vpop.f32.mrf.mxu0
        %966 = vdwg.mxu0
        %v968 = vsel %vm856, %v904, 0
        %v971 = vsel %vm912, %v908, 0
        %973 = vmatpush.bf16.msra.mxu0 0
        %974 = vmatpush.bf16.msra.mxu0 0
        %975 = vmatpush.bf16.msra.mxu0 0
        %976 = vmatpush.bf16.msra.mxu0 0
        %977 = vmatpush.bf16.msra.mxu0 0
        %978 = vmatpush.bf16.msra.mxu0 0
        %979 = vmatpush.bf16.msra.mxu0 0
        %980 = vmatpush.bf16.msra.mxu0 %v971
        %981 = vmatmul.bf16.gmra.mxu0 %v968
        %v982 = vpop.f32.mrf.mxu0
        %v983 = vadd.f32 0.0, %v982
        %v984 = vpop.f32.mrf.mxu0
        %985 = vdwg.mxu0
        %v986 = vpack.c.bf16 %v926, %v926
        %987 = vst.msk [vmem:[#allocation5] sm:$0xf] %vm717, %v986
        %v988 = vpack.c.bf16 %v945, %v945
        %990 = vrot.lane.b32.xlu0 %v988, 32
        %v991 = vpop.permute.xlu0 %990
        %vm993 = vcmask 519424
        %994 = vst.msk [vmem:[#allocation5] sm:$0xf] %vm993, %v991
        %v995 = vpack.c.bf16 %v964, %v964
        %997 = vrot.lane.b32.xlu0 %v995, 64
        %v998 = vpop.permute.xlu0 %997
        %vm1000 = vcmask 781824
        %1001 = vst.msk [vmem:[#allocation5] sm:$0xf] %vm1000, %v998
        %v1002 = vpack.c.bf16 %v983, %v983
        %1004 = vrot.lane.b32.xlu0 %v1002, 96
        %v1005 = vpop.permute.xlu0 %1004
        %vm1007 = vcmask 1044224
        %1008 = vst.msk [vmem:[#allocation5] sm:$0xf] %vm1007, %v1005
        %v1009 = vld [vmem:[#allocation5] sm:$0xf]
        %v1010 = vld [vmem:[#allocation9] sm:$0xf]
        %v1011 = vld [vmem:[#allocation9 + $0x4] sm:$0xf]
        %v1012 = vld [vmem:[#allocation9 + $0x8] sm:$0xf]
        %v1013 = vld [vmem:[#allocation9 + $0xc] sm:$0xf]
        %v1014 = vld [vmem:[#allocation9 + $0x10] sm:$0xf]
        %v1015 = vld [vmem:[#allocation9 + $0x14] sm:$0xf]
        %v1016 = vld [vmem:[#allocation9 + $0x18] sm:$0xf]
        %v1017 = vld [vmem:[#allocation9 + $0x1c] sm:$0xf]
        %v1018 = vld [vmem:[#allocation9 + $0x20] sm:$0xf]
        %v1019 = vld [vmem:[#allocation9 + $0x24] sm:$0xf]
        %v1020 = vld [vmem:[#allocation9 + $0x28] sm:$0xf]
        %v1021 = vld [vmem:[#allocation9 + $0x2c] sm:$0xf]
        %v1022 = vld [vmem:[#allocation9 + $0x30] sm:$0xf]
        %v1023 = vld [vmem:[#allocation9 + $0x34] sm:$0xf]
        %v1024 = vld [vmem:[#allocation9 + $0x38] sm:$0xf]
        %v1025 = vld [vmem:[#allocation9 + $0x3c] sm:$0xf]
        %v1042 = vunpack.c.l.b16 %v1010
        %v1043 = vunpack.c.l.b16 %v1011
        %v1044 = vunpack.c.l.b16 %v1012
        %v1045 = vunpack.c.l.b16 %v1013
        %v1046 = vunpack.c.l.b16 %v1014
        %v1047 = vunpack.c.l.b16 %v1015
        %v1048 = vunpack.c.l.b16 %v1016
        %v1049 = vunpack.c.l.b16 %v1017
        %v1050 = vunpack.c.l.b16 %v1018
        %v1051 = vunpack.c.l.b16 %v1019
        %v1052 = vunpack.c.l.b16 %v1020
        %v1053 = vunpack.c.l.b16 %v1021
        %v1054 = vunpack.c.l.b16 %v1022
        %v1055 = vunpack.c.l.b16 %v1023
        %v1056 = vunpack.c.l.b16 %v1024
        %v1057 = vunpack.c.l.b16 %v1025
        %v1058 = vpack.c.b16 %v1043, %v1042
        %v1059 = vpack.c.b16 %v1045, %v1044
        %v1060 = vpack.c.b16 %v1047, %v1046
        %v1061 = vpack.c.b16 %v1049, %v1048
        %v1062 = vpack.c.b16 %v1051, %v1050
        %v1063 = vpack.c.b16 %v1053, %v1052
        %v1064 = vpack.c.b16 %v1055, %v1054
        %v1065 = vpack.c.b16 %v1057, %v1056
        %1074 = vmatpush.bf16.msra.mxu0 %v1065
        %1075 = vmatpush.bf16.msra.mxu0 %v1064
        %1076 = vmatpush.bf16.msra.mxu0 %v1063
        %1077 = vmatpush.bf16.msra.mxu0 %v1062
        %1078 = vmatpush.bf16.msra.mxu0 %v1061
        %1079 = vmatpush.bf16.msra.mxu0 %v1060
        %1080 = vmatpush.bf16.msra.mxu0 %v1059
        %1081 = vmatpush.bf16.msra.mxu0 %v1058
        %1082 = vmatmul.bf16.gmra.mxu0 %v1009
        %v1083 = vpop.f32.mrf.mxu0
        %v1084 = vadd.f32 0.0, %v1083
        %v1085 = vpop.f32.mrf.mxu0
        %1086 = vdwg.mxu0
        %v1087 = vadd.f32 %v477, %v1084
        %v1088 = vld [vmem:[%s5] sm:$0x1]
        %v1090 = vperm.slane %v1088, 0
        %v1092 = vadd.f32 %v1087, %v1090
        %v1093 = vld [vmem:[%s6] sm:$0x1]
        %v1094 = vld [vmem:[%s7] sm:$0x1]
        %1095 = vadd.xlane.f32.xlu0 %v1092
        %v1096 = vpop.xlane.xlu0 %1095
        %v1097 = vmul.f32 %v1096, %v488
        %v1098 = vsub.f32 %v1092, %v1097
        %v1099 = vmul.f32 %v1098, %v1098
        %1100 = vadd.xlane.f32.xlu0 %v1099
        %v1101 = vpop.xlane.xlu0 %1100
        %v1102 = vmul.f32 %v1101, %v488
        %v1103 = vadd.f32 %v1102, 1e-05
        %v1104 = vrsqrt.pop %v1103
        %v1105 = vmul.f32 %v1104, %v1103
        %v1106 = vmul.f32 %v1105, %v1104
        %v1107 = vmul.f32 0.5, %v1106
        %v1108 = vsub.f32 1.5, %v1107
        %v1109 = vmul.f32 %v1104, %v1108
        %vm1110 = vweird.f32 %v1103
        %vm1111 = vweird.f32 %v1104
        %vm1112 = vmor %vm1110, %vm1111
        %v1113 = vsel %vm1112, %v1104, %v1109
        %v1114 = vmul.f32 %v1098, %v1113
        %v1116 = vperm.slane %v1093, 0
        %v1118 = vmul.f32 %v1114, %v1116
        %v1120 = vperm.slane %v1094, 0
        %v1122 = vadd.f32 %v1118, %v1120
        %v1123 = vpack.c.bf16 %v1122, %v1122
        %v1124 = vld [vmem:[#allocation11] sm:$0xff]
        %v1125 = vld [vmem:[#allocation11 + $0x8] sm:$0xff]
        %v1126 = vld [vmem:[#allocation11 + $0x10] sm:$0xff]
        %v1127 = vld [vmem:[#allocation11 + $0x18] sm:$0xff]
        %v1128 = vld [vmem:[#allocation11 + $0x20] sm:$0xff]
        %v1129 = vld [vmem:[#allocation11 + $0x28] sm:$0xff]
        %v1130 = vld [vmem:[#allocation11 + $0x30] sm:$0xff]
        %v1131 = vld [vmem:[#allocation11 + $0x38] sm:$0xff]
        %v1132 = vld [vmem:[#allocation11 + $0x40] sm:$0xff]
        %v1133 = vld [vmem:[#allocation11 + $0x48] sm:$0xff]
        %v1134 = vld [vmem:[#allocation11 + $0x50] sm:$0xff]
        %v1135 = vld [vmem:[#allocation11 + $0x58] sm:$0xff]
        %v1136 = vld [vmem:[#allocation11 + $0x60] sm:$0xff]
        %v1137 = vld [vmem:[#allocation11 + $0x68] sm:$0xff]
        %v1138 = vld [vmem:[#allocation11 + $0x70] sm:$0xff]
        %v1139 = vld [vmem:[#allocation11 + $0x78] sm:$0xff]
        %v1140 = vld [vmem:[%s9] sm:$0x3]
        %v1142 = vperm.slane %v1140, 0
        %v1143 = vperm.slane %v1140, 1
        %v1162 = vunpack.c.l.b16 %v1124
        %v1163 = vunpack.c.h.b16 %v1124
        %v1164 = vunpack.c.l.b16 %v1125
        %v1165 = vunpack.c.h.b16 %v1125
        %v1166 = vunpack.c.l.b16 %v1126
        %v1167 = vunpack.c.h.b16 %v1126
        %v1168 = vunpack.c.l.b16 %v1127
        %v1169 = vunpack.c.h.b16 %v1127
        %v1170 = vunpack.c.l.b16 %v1128
        %v1171 = vunpack.c.h.b16 %v1128
        %v1172 = vunpack.c.l.b16 %v1129
        %v1173 = vunpack.c.h.b16 %v1129
        %v1174 = vunpack.c.l.b16 %v1130
        %v1175 = vunpack.c.h.b16 %v1130
        %v1176 = vunpack.c.l.b16 %v1131
        %v1177 = vunpack.c.h.b16 %v1131
        %v1178 = vunpack.c.l.b16 %v1132
        %v1179 = vunpack.c.h.b16 %v1132
        %v1180 = vunpack.c.l.b16 %v1133
        %v1181 = vunpack.c.h.b16 %v1133
        %v1182 = vunpack.c.l.b16 %v1134
        %v1183 = vunpack.c.h.b16 %v1134
        %v1184 = vunpack.c.l.b16 %v1135
        %v1185 = vunpack.c.h.b16 %v1135
        %v1186 = vunpack.c.l.b16 %v1136
        %v1187 = vunpack.c.h.b16 %v1136
        %v1188 = vunpack.c.l.b16 %v1137
        %v1189 = vunpack.c.h.b16 %v1137
        %v1190 = vunpack.c.l.b16 %v1138
        %v1191 = vunpack.c.h.b16 %v1138
        %v1192 = vunpack.c.l.b16 %v1139
        %v1193 = vunpack.c.h.b16 %v1139
        %v1194 = vpack.c.b16 %v1164, %v1162
        %v1195 = vpack.c.b16 %v1165, %v1163
        %v1196 = vpack.c.b16 %v1168, %v1166
        %v1197 = vpack.c.b16 %v1169, %v1167
        %v1198 = vpack.c.b16 %v1172, %v1170
        %v1199 = vpack.c.b16 %v1173, %v1171
        %v1200 = vpack.c.b16 %v1176, %v1174
        %v1201 = vpack.c.b16 %v1177, %v1175
        %v1202 = vpack.c.b16 %v1180, %v1178
        %v1203 = vpack.c.b16 %v1181, %v1179
        %v1204 = vpack.c.b16 %v1184, %v1182
        %v1205 = vpack.c.b16 %v1185, %v1183
        %v1206 = vpack.c.b16 %v1188, %v1186
        %v1207 = vpack.c.b16 %v1189, %v1187
        %v1208 = vpack.c.b16 %v1192, %v1190
        %v1209 = vpack.c.b16 %v1193, %v1191
        %1226 = vmatpush.bf16.msra.mxu0 %v1208
        %1227 = vmatpush.bf16.msra.mxu0 %v1206
        %1228 = vmatpush.bf16.msra.mxu0 %v1204
        %1229 = vmatpush.bf16.msra.mxu0 %v1202
        %1230 = vmatpush.bf16.msra.mxu0 %v1200
        %1231 = vmatpush.bf16.msra.mxu0 %v1198
        %1232 = vmatpush.bf16.msra.mxu0 %v1196
        %1233 = vmatpush.bf16.msra.mxu0 %v1194
        %1234 = vmatmul.bf16.gmra.mxu0 %v1123
        %v1235 = vpop.f32.mrf.mxu0
        %v1236 = vadd.f32 %v1142, %v1235
        %v1237 = vpop.f32.mrf.mxu0
        %1238 = vdwg.mxu0
        %1239 = vmatpush.bf16.msra.mxu0 %v1209
        %1240 = vmatpush.bf16.msra.mxu0 %v1207
        %1241 = vmatpush.bf16.msra.mxu0 %v1205
        %1242 = vmatpush.bf16.msra.mxu0 %v1203
        %1243 = vmatpush.bf16.msra.mxu0 %v1201
        %1244 = vmatpush.bf16.msra.mxu0 %v1199
        %1245 = vmatpush.bf16.msra.mxu0 %v1197
        %1246 = vmatpush.bf16.msra.mxu0 %v1195
        %1247 = vmatmul.bf16.gmra.mxu0 %v1123
        %v1248 = vpop.f32.mrf.mxu0
        %v1249 = vadd.f32 %v1143, %v1248
        %v1250 = vpop.f32.mrf.mxu0
        %1251 = vdwg.mxu0
        %v1252 = vmul.f32 %v1236, 0.5
        %v1253 = vmul.f32 %v1249, 0.5
        %v1254 = vmul.f32 %v1236, 0.044715
        %v1255 = vmul.f32 %v1249, 0.044715
        %v1256 = vmul.f32 %v1254, %v1236
        %v1257 = vmul.f32 %v1255, %v1249
        %v1258 = vmul.f32 %v1256, %v1236
        %v1259 = vmul.f32 %v1257, %v1249
        %v1260 = vadd.f32 %v1236, %v1258
        %v1261 = vadd.f32 %v1249, %v1259
        %v1262 = vmul.f32 %v1260, 0.7978846
        %v1263 = vmul.f32 %v1261, 0.7978846
        %v1264 = vtanh.pop %v1262
        %v1265 = vtanh.pop %v1263
        %v1266 = vadd.f32 %v1264, 1.0
        %v1267 = vadd.f32 %v1265, 1.0
        %v1268 = vmul.f32 %v1252, %v1266
        %v1269 = vmul.f32 %v1253, %v1267
        %v1270 = vpack.c.bf16 %v1268, %v1268
        %v1271 = vpack.c.bf16 %v1269, %v1269
        %v1272 = vld [vmem:[#allocation12] sm:$0xf]
        %v1273 = vld [vmem:[#allocation12 + $0x4] sm:$0xf]
        %v1274 = vld [vmem:[#allocation12 + $0x8] sm:$0xf]
        %v1275 = vld [vmem:[#allocation12 + $0xc] sm:$0xf]
        %v1276 = vld [vmem:[#allocation12 + $0x10] sm:$0xf]
        %v1277 = vld [vmem:[#allocation12 + $0x14] sm:$0xf]
        %v1278 = vld [vmem:[#allocation12 + $0x18] sm:$0xf]
        %v1279 = vld [vmem:[#allocation12 + $0x1c] sm:$0xf]
        %v1280 = vld [vmem:[#allocation12 + $0x20] sm:$0xf]
        %v1281 = vld [vmem:[#allocation12 + $0x24] sm:$0xf]
        %v1282 = vld [vmem:[#allocation12 + $0x28] sm:$0xf]
        %v1283 = vld [vmem:[#allocation12 + $0x2c] sm:$0xf]
        %v1284 = vld [vmem:[#allocation12 + $0x30] sm:$0xf]
        %v1285 = vld [vmem:[#allocation12 + $0x34] sm:$0xf]
        %v1286 = vld [vmem:[#allocation12 + $0x38] sm:$0xf]
        %v1287 = vld [vmem:[#allocation12 + $0x3c] sm:$0xf]
        %v1288 = vld [vmem:[#allocation12 + $0x40] sm:$0xf]
        %v1289 = vld [vmem:[#allocation12 + $0x44] sm:$0xf]
        %v1290 = vld [vmem:[#allocation12 + $0x48] sm:$0xf]
        %v1291 = vld [vmem:[#allocation12 + $0x4c] sm:$0xf]
        %v1292 = vld [vmem:[#allocation12 + $0x50] sm:$0xf]
        %v1293 = vld [vmem:[#allocation12 + $0x54] sm:$0xf]
        %v1294 = vld [vmem:[#allocation12 + $0x58] sm:$0xf]
        %v1295 = vld [vmem:[#allocation12 + $0x5c] sm:$0xf]
        %v1296 = vld [vmem:[#allocation12 + $0x60] sm:$0xf]
        %v1297 = vld [vmem:[#allocation12 + $0x64] sm:$0xf]
        %v1298 = vld [vmem:[#allocation12 + $0x68] sm:$0xf]
        %v1299 = vld [vmem:[#allocation12 + $0x6c] sm:$0xf]
        %v1300 = vld [vmem:[#allocation12 + $0x70] sm:$0xf]
        %v1301 = vld [vmem:[#allocation12 + $0x74] sm:$0xf]
        %v1302 = vld [vmem:[#allocation12 + $0x78] sm:$0xf]
        %v1303 = vld [vmem:[#allocation12 + $0x7c] sm:$0xf]
        %v1304 = vld [vmem:[%s11] sm:$0x1]
        %v1306 = vperm.slane %v1304, 0
        %v1340 = vunpack.c.l.b16 %v1272
        %v1341 = vunpack.c.l.b16 %v1273
        %v1342 = vunpack.c.l.b16 %v1274
        %v1343 = vunpack.c.l.b16 %v1275
        %v1344 = vunpack.c.l.b16 %v1276
        %v1345 = vunpack.c.l.b16 %v1277
        %v1346 = vunpack.c.l.b16 %v1278
        %v1347 = vunpack.c.l.b16 %v1279
        %v1348 = vunpack.c.l.b16 %v1280
        %v1349 = vunpack.c.l.b16 %v1281
        %v1350 = vunpack.c.l.b16 %v1282
        %v1351 = vunpack.c.l.b16 %v1283
        %v1352 = vunpack.c.l.b16 %v1284
        %v1353 = vunpack.c.l.b16 %v1285
        %v1354 = vunpack.c.l.b16 %v1286
        %v1355 = vunpack.c.l.b16 %v1287
        %v1356 = vunpack.c.l.b16 %v1288
        %v1357 = vunpack.c.l.b16 %v1289
        %v1358 = vunpack.c.l.b16 %v1290
        %v1359 = vunpack.c.l.b16 %v1291
        %v1360 = vunpack.c.l.b16 %v1292
        %v1361 = vunpack.c.l.b16 %v1293
        %v1362 = vunpack.c.l.b16 %v1294
        %v1363 = vunpack.c.l.b16 %v1295
        %v1364 = vunpack.c.l.b16 %v1296
        %v1365 = vunpack.c.l.b16 %v1297
        %v1366 = vunpack.c.l.b16 %v1298
        %v1367 = vunpack.c.l.b16 %v1299
        %v1368 = vunpack.c.l.b16 %v1300
        %v1369 = vunpack.c.l.b16 %v1301
        %v1370 = vunpack.c.l.b16 %v1302
        %v1371 = vunpack.c.l.b16 %v1303
        %v1372 = vpack.c.b16 %v1341, %v1340
        %v1373 = vpack.c.b16 %v1343, %v1342
        %v1374 = vpack.c.b16 %v1345, %v1344
        %v1375 = vpack.c.b16 %v1347, %v1346
        %v1376 = vpack.c.b16 %v1349, %v1348
        %v1377 = vpack.c.b16 %v1351, %v1350
        %v1378 = vpack.c.b16 %v1353, %v1352
        %v1379 = vpack.c.b16 %v1355, %v1354
        %v1380 = vpack.c.b16 %v1357, %v1356
        %v1381 = vpack.c.b16 %v1359, %v1358
        %v1382 = vpack.c.b16 %v1361, %v1360
        %v1383 = vpack.c.b16 %v1363, %v1362
        %v1384 = vpack.c.b16 %v1365, %v1364
        %v1385 = vpack.c.b16 %v1367, %v1366
        %v1386 = vpack.c.b16 %v1369, %v1368
        %v1387 = vpack.c.b16 %v1371, %v1370
        %1404 = vmatpush.bf16.msra.mxu0 %v1379
        %1405 = vmatpush.bf16.msra.mxu0 %v1378
        %1406 = vmatpush.bf16.msra.mxu0 %v1377
        %1407 = vmatpush.bf16.msra.mxu0 %v1376
        %1408 = vmatpush.bf16.msra.mxu0 %v1375
        %1409 = vmatpush.bf16.msra.mxu0 %v1374
        %1410 = vmatpush.bf16.msra.mxu0 %v1373
        %1411 = vmatpush.bf16.msra.mxu0 %v1372
        %1412 = vmatmul.bf16.gmra.mxu0 %v1270
        %v1413 = vpop.f32.mrf.mxu0
        %v1414 = vadd.f32 %v1306, %v1413
        %v1415 = vpop.f32.mrf.mxu0
        %1416 = vdwg.mxu0
        %1417 = vmatpush.bf16.msra.mxu0 %v1387
        %1418 = vmatpush.bf16.msra.mxu0 %v1386
        %1419 = vmatpush.bf16.msra.mxu0 %v1385
        %1420 = vmatpush.bf16.msra.mxu0 %v1384
        %1421 = vmatpush.bf16.msra.mxu0 %v1383
        %1422 = vmatpush.bf16.msra.mxu0 %v1382
        %1423 = vmatpush.bf16.msra.mxu0 %v1381
        %1424 = vmatpush.bf16.msra.mxu0 %v1380
        %1425 = vmatmul.bf16.gmra.mxu0 %v1271
        %v1426 = vpop.f32.mrf.mxu0
        %v1427 = vadd.f32 %v1414, %v1426
        %v1428 = vpop.f32.mrf.mxu0
        %1429 = vdwg.mxu0
        %v1430 = vadd.f32 %v1092, %v1427
        %1431 = vst [vmem:[%s471] sm:$0xff] %v1430
        %s1432 = sand.u32 %s294, 1
        %s1433 = scalar_lea.sflag [#allocation8], %s1432
        %s1434 = sand.u32 %s294, 1
        %s1435 = smul.addr %s1434, 8
        %s1436 = scalar_lea.vmem [#allocation14], %s1435
        // Predicated region
        $region85: #{transformer_forward.3} parent=67 // pred_check
          %p1437 = pneg %p304
        $region86: #{transformer_forward.3} parent=67 // pred_check_branch
          %1439 = sbr.rel (%p1437) target = $region88
        $region87: #{transformer_forward.3} parent=67 // pred_region
          %1441 = vsyncadd %s1433, 0
          %s1442 = smul.addr %s29, 8
          %s1443 = scalar_lea.hbm %s12, %s1442
          %s1445 = sshll.u32 %s1436, 4
          %s1446 = int_to_ptr.vmem [resolvable:$true] %s1445
          %s1447 = sshll.u32 %s1443, 4
          %s1448 = int_to_ptr.hbm [resolvable:$true] %s1447
          %1450 = dma.vmem_to_hbm [thread:$0]  %s1446, 128, %s1448, %s1433
        $region88: #{transformer_forward.3} parent=67 // pred_fallthru
          _
      $region68: #{transformer_forward.3} parent=5 // pred_fallthru
        _
      %p1451 = scmp.le.s32.totalorder 2, %s24
      // Predicated region
      $region89: #{transformer_forward.3} parent=5 // pred_check
        %p1452 = pneg %p1451
      $region90: #{transformer_forward.3} parent=5 // pred_check_branch
        %1454 = sbr.rel (%p1452) target = $region92
      $region91: #{transformer_forward.3} parent=5 // pred_region
        %s1455 = ssub.s32 %s24, 2
        // Predicated region
        $region93: #{transformer_forward.3} parent=91 // pred_check
          %p1456 = pneg %p310
        $region94: #{transformer_forward.3} parent=91 // pred_check_branch
          %1458 = sbr.rel (%p1456) target = $region96
        $region95: #{transformer_forward.3} parent=91 // pred_region
          %s1459 = sand.u32 %s295, 1
          %s1460 = scalar_lea.sflag [#allocation8], %s1459
          %s1461 = sand.u32 %s295, 1
          %s1462 = smul.addr %s1461, 8
          %s1463 = scalar_lea.vmem [#allocation14], %s1462
          %1465 = dma.done %s1460, 128
        $region96: #{transformer_forward.3} parent=91 // pred_fallthru
          _
      $region92: #{transformer_forward.3} parent=5 // pred_fallthru
        _
    $region6: #{transformer_forward.3} parent=1 // loop_footer
      %s28 = sadd.s32 1, %s24
    $region7: #{transformer_forward.3} parent=1 // loop_footer_branch
      %23 = sbr.rel target = $region3
    $region8: #{transformer_forward.3} parent=1 // loop_exit
      _
    %1466 = vsyncpa [#allocation7], 1
    %s1467 = scalar_lea.sflag [#allocation7], 1
    %1468 = vsyncpa %s1467, 1
    %1469 = vsyncpa [#allocation10], 1
    %1470 = vsyncpa [#allocation13], 1
    %1471 = vsyncpa [#allocation8], 1
    %s1472 = scalar_lea.sflag [#allocation8], 1
    %1473 = vsyncpa %s1472, 1

// kernel: transformer_forward.2
$region0: #{transformer_forward.2}
  #allocation0 [shape = 'u32[]', space=smem, size = 0x4, offset = 0x4, fixed_abs, tag = 'smem constant byte address 0x4 - core index']
  #allocation1 [shape = 'u32[72,128]{1,0:T(1,128)}', space=vmem, size = 0x9000, scoped, tag = 'internal scratch']
  #allocation2 [shape = 'bf16[4,8,32]{2,1,0:T(8,128)(2,1)}', space=vmem, size = 0x2000, scoped, tag = 'scratch operand']
  #allocation3 [shape = 'bf16[4,8,32]{2,1,0:T(8,128)(2,1)}', space=vmem, size = 0x2000, scoped, tag = 'scratch operand']
  #allocation4 [shape = 'bf16[4,8,32]{2,1,0:T(8,128)(2,1)}', space=vmem, size = 0x2000, scoped, tag = 'scratch operand']
  #allocation5 [shape = 'bf16[8,128]{1,0:T(8,128)(2,1)}', space=vmem, size = 0x800, scoped, tag = 'scratch operand']
  %s0 = inlined_call_operand.hbm [shape: f32[2,8,128], index: 0, kind: input, shape index: {}]
  %s1 = inlined_call_operand.hbm [shape: f32[1,128], index: 1, kind: input, shape index: {}]
  %s2 = inlined_call_operand.hbm [shape: f32[1,128], index: 2, kind: input, shape index: {}]
  %s3 = inlined_call_operand.hbm [shape: bf16[128,384], index: 3, kind: input, shape index: {}]
  %s4 = inlined_call_operand.hbm [shape: bf16[128,128], index: 4, kind: input, shape index: {}]
  %s5 = inlined_call_operand.hbm [shape: f32[1,128], index: 5, kind: input, shape index: {}]
  %s6 = inlined_call_operand.vmem [shape: f32[1,128], index: 6, kind: input, shape index: {}]
  %s7 = inlined_call_operand.vmem [shape: f32[1,128], index: 7, kind: input, shape index: {}]
  %s8 = inlined_call_operand.hbm [shape: bf16[128,256], index: 8, kind: input, shape index: {}]
  %s9 = inlined_call_operand.vmem [shape: f32[1,256], index: 9, kind: input, shape index: {}]
  %s10 = inlined_call_operand.hbm [shape: bf16[256,128], index: 10, kind: input, shape index: {}]
  %s11 = inlined_call_operand.vmem [shape: f32[1,128], index: 11, kind: input, shape index: {}]
  %s12 = inlined_call_operand.vmem [shape: f32[2,8,128], index: 12, kind: output, shape index: {}]
  %s13 = sld [smem:[#allocation0]]
  $region113: #{transformer_forward.2} parent=0
    _
  %s15 = ssub.s32 1, %s13
  %s16 = scalar_select 0, %s15, %s13
  $region1: #{transformer_forward.2} parent=0
    #allocation6 [shape = 'u8[8192]{0}', space=vmem, size = 0x2000, scoped, tag = 'input window, operand 0']
    #allocation7 [shape = 's32[2]{0}', space=sflag, size = 0x8, scoped, tag = 'scoped memory for transformer_forward.2']
    #allocation8 [shape = 'u8[512]{0}', space=vmem, size = 0x400, scoped, tag = 'input window, operand 1, single buffered']
    #allocation9 [shape = 's32[1]{0}', space=sflag, size = 0x4, scoped, tag = 'scoped memory for transformer_forward.2']
    #allocation10 [shape = 'u8[512]{0}', space=vmem, size = 0x400, scoped, tag = 'input window, operand 2, single buffered']
    #allocation11 [shape = 'u8[98304]{0}', space=vmem, size = 0x18000, scoped, tag = 'input window, operand 3, single buffered']
    #allocation12 [shape = 's32[1]{0}', space=sflag, size = 0x4, scoped, tag = 'scoped memory for transformer_forward.2']
    #allocation13 [shape = 'u8[32768]{0}', space=vmem, size = 0x8000, scoped, tag = 'input window, operand 4, single buffered']
    #allocation14 [shape = 'u8[512]{0}', space=vmem, size = 0x400, scoped, tag = 'input window, operand 5, single buffered']
    #allocation15 [shape = 's32[1]{0}', space=sflag, size = 0x4, scoped, tag = 'scoped memory for transformer_forward.2']
    #allocation16 [shape = 'u8[65536]{0}', space=vmem, size = 0x10000, scoped, tag = 'input window, operand 8, single buffered']
    #allocation17 [shape = 'u8[65536]{0}', space=vmem, size = 0x10000, scoped, tag = 'input window, operand 10, single buffered']
    #allocation18 [shape = 's32[1]{0}', space=sflag, size = 0x4, scoped, tag = 'scoped memory for transformer_forward.2']
    %17 = vsyncpa [#allocation7], 0
    %s18 = scalar_lea.sflag [#allocation7], 1
    %19 = vsyncpa %s18, 0
    %20 = vsyncpa [#allocation9], 0
    %21 = vsyncpa [#allocation12], 0
    %22 = vsyncpa [#allocation15], 0
    %23 = vsyncpa [#allocation18], 0
    loop: start=0, step=1, limit=4
    $region2: #{transformer_forward.2} parent=1 // loop_pre_header
      _
    $region3: #{transformer_forward.2} parent=1 // loop_header
      %s25 = sphi 0, %s29
      %p26 = scmp.ge.s32.totalorder %s25, 4
      %s35 = sphi 0, %s37
      %s38 = sphi 0, %s35
      %s39 = sphi 0, %s38
      %s55 = sphi 0, %s39
      %s59 = sphi 0, %s59
      %s61 = sphi 0, %s59
      %s62 = sphi 0, %s61
      %s76 = sphi 0, %s62
      %s80 = sphi 0, %s80
      %s82 = sphi 0, %s80
      %s83 = sphi 0, %s82
      %s97 = sphi 0, %s83
      %s101 = sphi 0, %s101
      %s103 = sphi 0, %s101
      %s104 = sphi 0, %s103
      %s118 = sphi 0, %s104
      %s122 = sphi 0, %s122
      %s124 = sphi 0, %s122
      %s125 = sphi 0, %s124
      %s139 = sphi 0, %s125
      %s143 = sphi 0, %s143
      %s145 = sphi 0, %s143
      %s146 = sphi 0, %s145
      %s160 = sphi 0, %s146
      %s164 = sphi 0, %s164
      %s166 = sphi 0, %s164
      %s167 = sphi 0, %s166
      %s181 = sphi 0, %s167
      %s185 = sphi 0, %s185
      %s187 = sphi 0, %s185
      %s188 = sphi 0, %s187
      %s202 = sphi 0, %s188
      %s206 = sphi 0, %s206
      %s208 = sphi 0, %s206
      %s209 = sphi 0, %s208
      %s223 = sphi 0, %s209
      %s227 = sphi 0, %s227
      %s229 = sphi 0, %s227
      %s230 = sphi 0, %s229
      %s244 = sphi 0, %s230
      %s248 = sphi 0, %s248
      %s250 = sphi 0, %s248
      %s251 = sphi 0, %s250
      %s265 = sphi 0, %s251
      %s269 = sphi 0, %s269
      %s271 = sphi 0, %s269
      %s272 = sphi 0, %s271
      %s286 = sphi 0, %s272
      %s292 = sphi 0, %s294
      %s295 = sphi 0, %s292
      %s296 = sphi 0, %s295
      %s312 = sphi 0, %s296
    $region4: #{transformer_forward.2} parent=1 // loop_header_branch
      %28 = sbr.rel (%p26) target = $region8
    $region5: #{transformer_forward.2} parent=1 // loop_body
      %s30 = ssub.s32 %s25, 1
      %s31 = ssub.s32 %s25, 2
      %s32 = sadd.s32 %s25, 1
      %s33 = ssub.s32 %s25, %s32
      %p34 = scmp.eq.s32.totalorder %s33, 0
      %s36 = sadd.s32 %s35, 1
      %s37 = scalar_select %p34, %s35, %s36
      %p40 = pneg %p34
      %p41 = scmp.eq.s32.totalorder %s25, 1
      %p42 = por %p40, %p41
      %p43 = scmp.ne.s32.totalorder %s35, %s38
      %p44 = scmp.eq.s32.totalorder %s25, 0
      %p45 = por %p43, %p44
      %p46 = scmp.ne.s32.totalorder %s35, %s38
      %p47 = scmp.eq.s32.totalorder %s30, 1
      %p48 = por %p46, %p47
      %p49 = scmp.ne.s32.totalorder %s38, %s39
      %p50 = scmp.eq.s32.totalorder %s30, 0
      %p51 = por %p49, %p50
      %p52 = scmp.ne.s32.totalorder %s38, %s39
      %p53 = scmp.eq.s32.totalorder %s31, 1
      %p54 = por %p52, %p53
      %p56 = scmp.ne.s32.totalorder %s39, %s55
      %p57 = scmp.eq.s32.totalorder %s31, 0
      %p58 = por %p56, %p57
      %s60 = sadd.s32 %s59, 1
      %p63 = scmp.eq.s32.totalorder %s25, 1
      %p64 = scmp.ne.s32.totalorder %s59, %s61
      %p65 = scmp.eq.s32.totalorder %s25, 0
      %p66 = por %p64, %p65
      %p67 = scmp.ne.s32.totalorder %s59, %s61
      %p68 = scmp.eq.s32.totalorder %s30, 1
      %p69 = por %p67, %p68
      %p70 = scmp.ne.s32.totalorder %s61, %s62
      %p71 = scmp.eq.s32.totalorder %s30, 0
      %p72 = por %p70, %p71
      %p73 = scmp.ne.s32.totalorder %s61, %s62
      %p74 = scmp.eq.s32.totalorder %s31, 1
      %p75 = por %p73, %p74
      %p77 = scmp.ne.s32.totalorder %s62, %s76
      %p78 = scmp.eq.s32.totalorder %s31, 0
      %p79 = por %p77, %p78
      %s81 = sadd.s32 %s80, 1
      %p84 = scmp.eq.s32.totalorder %s25, 1
      %p85 = scmp.ne.s32.totalorder %s80, %s82
      %p86 = scmp.eq.s32.totalorder %s25, 0
      %p87 = por %p85, %p86
      %p88 = scmp.ne.s32.totalorder %s80, %s82
      %p89 = scmp.eq.s32.totalorder %s30, 1
      %p90 = por %p88, %p89
      %p91 = scmp.ne.s32.totalorder %s82, %s83
      %p92 = scmp.eq.s32.totalorder %s30, 0
      %p93 = por %p91, %p92
      %p94 = scmp.ne.s32.totalorder %s82, %s83
      %p95 = scmp.eq.s32.totalorder %s31, 1
      %p96 = por %p94, %p95
      %p98 = scmp.ne.s32.totalorder %s83, %s97
      %p99 = scmp.eq.s32.totalorder %s31, 0
      %p100 = por %p98, %p99
      %s102 = sadd.s32 %s101, 1
      %p105 = scmp.eq.s32.totalorder %s25, 1
      %p106 = scmp.ne.s32.totalorder %s101, %s103
      %p107 = scmp.eq.s32.totalorder %s25, 0
      %p108 = por %p106, %p107
      %p109 = scmp.ne.s32.totalorder %s101, %s103
      %p110 = scmp.eq.s32.totalorder %s30, 1
      %p111 = por %p109, %p110
      %p112 = scmp.ne.s32.totalorder %s103, %s104
      %p113 = scmp.eq.s32.totalorder %s30, 0
      %p114 = por %p112, %p113
      %p115 = scmp.ne.s32.totalorder %s103, %s104
      %p116 = scmp.eq.s32.totalorder %s31, 1
      %p117 = por %p115, %p116
      %p119 = scmp.ne.s32.totalorder %s104, %s118
      %p120 = scmp.eq.s32.totalorder %s31, 0
      %p121 = por %p119, %p120
      %s123 = sadd.s32 %s122, 1
      %p126 = scmp.eq.s32.totalorder %s25, 1
      %p127 = scmp.ne.s32.totalorder %s122, %s124
      %p128 = scmp.eq.s32.totalorder %s25, 0
      %p129 = por %p127, %p128
      %p130 = scmp.ne.s32.totalorder %s122, %s124
      %p131 = scmp.eq.s32.totalorder %s30, 1
      %p132 = por %p130, %p131
      %p133 = scmp.ne.s32.totalorder %s124, %s125
      %p134 = scmp.eq.s32.totalorder %s30, 0
      %p135 = por %p133, %p134
      %p136 = scmp.ne.s32.totalorder %s124, %s125
      %p137 = scmp.eq.s32.totalorder %s31, 1
      %p138 = por %p136, %p137
      %p140 = scmp.ne.s32.totalorder %s125, %s139
      %p141 = scmp.eq.s32.totalorder %s31, 0
      %p142 = por %p140, %p141
      %s144 = sadd.s32 %s143, 1
      %p147 = scmp.eq.s32.totalorder %s25, 1
      %p148 = scmp.ne.s32.totalorder %s143, %s145
      %p149 = scmp.eq.s32.totalorder %s25, 0
      %p150 = por %p148, %p149
      %p151 = scmp.ne.s32.totalorder %s143, %s145
      %p152 = scmp.eq.s32.totalorder %s30, 1
      %p153 = por %p151, %p152
      %p154 = scmp.ne.s32.totalorder %s145, %s146
      %p155 = scmp.eq.s32.totalorder %s30, 0
      %p156 = por %p154, %p155
      %p157 = scmp.ne.s32.totalorder %s145, %s146
      %p158 = scmp.eq.s32.totalorder %s31, 1
      %p159 = por %p157, %p158
      %p161 = scmp.ne.s32.totalorder %s146, %s160
      %p162 = scmp.eq.s32.totalorder %s31, 0
      %p163 = por %p161, %p162
      %s165 = sadd.s32 %s164, 1
      %p168 = scmp.eq.s32.totalorder %s25, 1
      %p169 = scmp.ne.s32.totalorder %s164, %s166
      %p170 = scmp.eq.s32.totalorder %s25, 0
      %p171 = por %p169, %p170
      %p172 = scmp.ne.s32.totalorder %s164, %s166
      %p173 = scmp.eq.s32.totalorder %s30, 1
      %p174 = por %p172, %p173
      %p175 = scmp.ne.s32.totalorder %s166, %s167
      %p176 = scmp.eq.s32.totalorder %s30, 0
      %p177 = por %p175, %p176
      %p178 = scmp.ne.s32.totalorder %s166, %s167
      %p179 = scmp.eq.s32.totalorder %s31, 1
      %p180 = por %p178, %p179
      %p182 = scmp.ne.s32.totalorder %s167, %s181
      %p183 = scmp.eq.s32.totalorder %s31, 0
      %p184 = por %p182, %p183
      %s186 = sadd.s32 %s185, 1
      %p189 = scmp.eq.s32.totalorder %s25, 1
      %p190 = scmp.ne.s32.totalorder %s185, %s187
      %p191 = scmp.eq.s32.totalorder %s25, 0
      %p192 = por %p190, %p191
      %p193 = scmp.ne.s32.totalorder %s185, %s187
      %p194 = scmp.eq.s32.totalorder %s30, 1
      %p195 = por %p193, %p194
      %p196 = scmp.ne.s32.totalorder %s187, %s188
      %p197 = scmp.eq.s32.totalorder %s30, 0
      %p198 = por %p196, %p197
      %p199 = scmp.ne.s32.totalorder %s187, %s188
      %p200 = scmp.eq.s32.totalorder %s31, 1
      %p201 = por %p199, %p200
      %p203 = scmp.ne.s32.totalorder %s188, %s202
      %p204 = scmp.eq.s32.totalorder %s31, 0
      %p205 = por %p203, %p204
      %s207 = sadd.s32 %s206, 1
      %p210 = scmp.eq.s32.totalorder %s25, 1
      %p211 = scmp.ne.s32.totalorder %s206, %s208
      %p212 = scmp.eq.s32.totalorder %s25, 0
      %p213 = por %p211, %p212
      %p214 = scmp.ne.s32.totalorder %s206, %s208
      %p215 = scmp.eq.s32.totalorder %s30, 1
      %p216 = por %p214, %p215
      %p217 = scmp.ne.s32.totalorder %s208, %s209
      %p218 = scmp.eq.s32.totalorder %s30, 0
      %p219 = por %p217, %p218
      %p220 = scmp.ne.s32.totalorder %s208, %s209
      %p221 = scmp.eq.s32.totalorder %s31, 1
      %p222 = por %p220, %p221
      %p224 = scmp.ne.s32.totalorder %s209, %s223
      %p225 = scmp.eq.s32.totalorder %s31, 0
      %p226 = por %p224, %p225
      %s228 = sadd.s32 %s227, 1
      %p231 = scmp.eq.s32.totalorder %s25, 1
      %p232 = scmp.ne.s32.totalorder %s227, %s229
      %p233 = scmp.eq.s32.totalorder %s25, 0
      %p234 = por %p232, %p233
      %p235 = scmp.ne.s32.totalorder %s227, %s229
      %p236 = scmp.eq.s32.totalorder %s30, 1
      %p237 = por %p235, %p236
      %p238 = scmp.ne.s32.totalorder %s229, %s230
      %p239 = scmp.eq.s32.totalorder %s30, 0
      %p240 = por %p238, %p239
      %p241 = scmp.ne.s32.totalorder %s229, %s230
      %p242 = scmp.eq.s32.totalorder %s31, 1
      %p243 = por %p241, %p242
      %p245 = scmp.ne.s32.totalorder %s230, %s244
      %p246 = scmp.eq.s32.totalorder %s31, 0
      %p247 = por %p245, %p246
      %s249 = sadd.s32 %s248, 1
      %p252 = scmp.eq.s32.totalorder %s25, 1
      %p253 = scmp.ne.s32.totalorder %s248, %s250
      %p254 = scmp.eq.s32.totalorder %s25, 0
      %p255 = por %p253, %p254
      %p256 = scmp.ne.s32.totalorder %s248, %s250
      %p257 = scmp.eq.s32.totalorder %s30, 1
      %p258 = por %p256, %p257
      %p259 = scmp.ne.s32.totalorder %s250, %s251
      %p260 = scmp.eq.s32.totalorder %s30, 0
      %p261 = por %p259, %p260
      %p262 = scmp.ne.s32.totalorder %s250, %s251
      %p263 = scmp.eq.s32.totalorder %s31, 1
      %p264 = por %p262, %p263
      %p266 = scmp.ne.s32.totalorder %s251, %s265
      %p267 = scmp.eq.s32.totalorder %s31, 0
      %p268 = por %p266, %p267
      %s270 = sadd.s32 %s269, 1
      %p273 = scmp.eq.s32.totalorder %s25, 1
      %p274 = scmp.ne.s32.totalorder %s269, %s271
      %p275 = scmp.eq.s32.totalorder %s25, 0
      %p276 = por %p274, %p275
      %p277 = scmp.ne.s32.totalorder %s269, %s271
      %p278 = scmp.eq.s32.totalorder %s30, 1
      %p279 = por %p277, %p278
      %p280 = scmp.ne.s32.totalorder %s271, %s272
      %p281 = scmp.eq.s32.totalorder %s30, 0
      %p282 = por %p280, %p281
      %p283 = scmp.ne.s32.totalorder %s271, %s272
      %p284 = scmp.eq.s32.totalorder %s31, 1
      %p285 = por %p283, %p284
      %p287 = scmp.ne.s32.totalorder %s272, %s286
      %p288 = scmp.eq.s32.totalorder %s31, 0
      %p289 = por %p287, %p288
      %s290 = ssub.s32 %s25, %s32
      %p291 = scmp.eq.s32.totalorder %s290, 0
      %s293 = sadd.s32 %s292, 1
      %s294 = scalar_select %p291, %s292, %s293
      %p297 = pneg %p291
      %p298 = scmp.eq.s32.totalorder %s25, 1
      %p299 = por %p297, %p298
      %p300 = scmp.ne.s32.totalorder %s292, %s295
      %p301 = scmp.eq.s32.totalorder %s25, 0
      %p302 = por %p300, %p301
      %p303 = scmp.ne.s32.totalorder %s292, %s295
      %p304 = scmp.eq.s32.totalorder %s30, 1
      %p305 = por %p303, %p304
      %p306 = scmp.ne.s32.totalorder %s295, %s296
      %p307 = scmp.eq.s32.totalorder %s30, 0
      %p308 = por %p306, %p307
      %p309 = scmp.ne.s32.totalorder %s295, %s296
      %p310 = scmp.eq.s32.totalorder %s31, 1
      %p311 = por %p309, %p310
      %p313 = scmp.ne.s32.totalorder %s296, %s312
      %p314 = scmp.eq.s32.totalorder %s31, 0
      %p315 = por %p313, %p314
      %p316 = scmp.le.s32.totalorder 1, %s25
      %p317 = scmp.lt.s32.totalorder %s25, 3
      %p318 = pnand %p316, %p317
      %p319 = pneg %p318
      // Predicated region
      $region9: #{transformer_forward.2} parent=5 // pred_check
        _
      $region10: #{transformer_forward.2} parent=5 // pred_check_branch
        %321 = sbr.rel (%p318) target = $region12
      $region11: #{transformer_forward.2} parent=5 // pred_region
        %s322 = ssub.s32 %s25, 1
        // Predicated region
        $region13: #{transformer_forward.2} parent=11 // pred_check
          %p323 = pneg %p72
        $region14: #{transformer_forward.2} parent=11 // pred_check_branch
          %325 = sbr.rel (%p323) target = $region16
        $region15: #{transformer_forward.2} parent=11 // pred_region
          %327 = vsyncadd [#allocation9], 0
          %s329 = sshll.u32 %s1, 4
          %s330 = int_to_ptr.hbm [resolvable:$true] %s329
          %s331 = sshll.u32 [#allocation8], 4
          %s332 = int_to_ptr.vmem [resolvable:$true] %s331
          %334 = dma.hbm_to_vmem [thread:$0]  %s330, 16, %s332, [#allocation9]
        $region16: #{transformer_forward.2} parent=11 // pred_fallthru
          _
        // Predicated region
        $region17: #{transformer_forward.2} parent=11 // pred_check
          %p335 = pneg %p93
        $region18: #{transformer_forward.2} parent=11 // pred_check_branch
          %337 = sbr.rel (%p335) target = $region20
        $region19: #{transformer_forward.2} parent=11 // pred_region
          %339 = vsyncadd [#allocation9], 0
          %s341 = sshll.u32 %s2, 4
          %s342 = int_to_ptr.hbm [resolvable:$true] %s341
          %s343 = sshll.u32 [#allocation10], 4
          %s344 = int_to_ptr.vmem [resolvable:$true] %s343
          %346 = dma.hbm_to_vmem [thread:$0]  %s342, 16, %s344, [#allocation9]
        $region20: #{transformer_forward.2} parent=11 // pred_fallthru
          _
        // Predicated region
        $region21: #{transformer_forward.2} parent=11 // pred_check
          %p347 = pneg %p114
        $region22: #{transformer_forward.2} parent=11 // pred_check_branch
          %349 = sbr.rel (%p347) target = $region24
        $region23: #{transformer_forward.2} parent=11 // pred_region
          %351 = vsyncadd [#allocation12], 0
          %s352 = sshll.u32 %s3, 4
          %s353 = int_to_ptr.hbm [resolvable:$true] %s352
          %s354 = sshll.u32 [#allocation11], 4
          %s355 = int_to_ptr.vmem [resolvable:$true] %s354
          %360 = dma.hbm_to_vmem [thread:$0]  %s353, 3072, %s355, [#allocation12], 192, 192, 12
        $region24: #{transformer_forward.2} parent=11 // pred_fallthru
          _
        // Predicated region
        $region25: #{transformer_forward.2} parent=11 // pred_check
          %p361 = pneg %p135
        $region26: #{transformer_forward.2} parent=11 // pred_check_branch
          %363 = sbr.rel (%p361) target = $region28
        $region27: #{transformer_forward.2} parent=11 // pred_region
          %365 = vsyncadd [#allocation12], 0
          %s366 = sshll.u32 %s4, 4
          %s367 = int_to_ptr.hbm [resolvable:$true] %s366
          %s368 = sshll.u32 [#allocation13], 4
          %s369 = int_to_ptr.vmem [resolvable:$true] %s368
          %374 = dma.hbm_to_vmem [thread:$0]  %s367, 1024, %s369, [#allocation12], 64, 64, 4
        $region28: #{transformer_forward.2} parent=11 // pred_fallthru
          _
        // Predicated region
        $region29: #{transformer_forward.2} parent=11 // pred_check
          %p375 = pneg %p156
        $region30: #{transformer_forward.2} parent=11 // pred_check_branch
          %377 = sbr.rel (%p375) target = $region32
        $region31: #{transformer_forward.2} parent=11 // pred_region
          %379 = vsyncadd [#allocation15], 0
          %s381 = sshll.u32 %s5, 4
          %s382 = int_to_ptr.hbm [resolvable:$true] %s381
          %s383 = sshll.u32 [#allocation14], 4
          %s384 = int_to_ptr.vmem [resolvable:$true] %s383
          %386 = dma.hbm_to_vmem [thread:$0]  %s382, 16, %s384, [#allocation15]
        $region32: #{transformer_forward.2} parent=11 // pred_fallthru
          _
        // Predicated region
        $region33: #{transformer_forward.2} parent=11 // pred_check
          %p387 = pneg %p177
        $region34: #{transformer_forward.2} parent=11 // pred_check_branch
          %389 = sbr.rel (%p387) target = $region36
        $region35: #{transformer_forward.2} parent=11 // pred_region
          _
        $region36: #{transformer_forward.2} parent=11 // pred_fallthru
          _
        // Predicated region
        $region37: #{transformer_forward.2} parent=11 // pred_check
          %p390 = pneg %p198
        $region38: #{transformer_forward.2} parent=11 // pred_check_branch
          %392 = sbr.rel (%p390) target = $region40
        $region39: #{transformer_forward.2} parent=11 // pred_region
          _
        $region40: #{transformer_forward.2} parent=11 // pred_fallthru
          _
        // Predicated region
        $region41: #{transformer_forward.2} parent=11 // pred_check
          %p393 = pneg %p219
        $region42: #{transformer_forward.2} parent=11 // pred_check_branch
          %395 = sbr.rel (%p393) target = $region44
        $region43: #{transformer_forward.2} parent=11 // pred_region
          %397 = vsyncadd [#allocation15], 0
          %s398 = sshll.u32 %s8, 4
          %s399 = int_to_ptr.hbm [resolvable:$true] %s398
          %s400 = sshll.u32 [#allocation16], 4
          %s401 = int_to_ptr.vmem [resolvable:$true] %s400
          %406 = dma.hbm_to_vmem [thread:$0]  %s399, 2048, %s401, [#allocation15], 128, 128, 8
        $region44: #{transformer_forward.2} parent=11 // pred_fallthru
          _
        // Predicated region
        $region45: #{transformer_forward.2} parent=11 // pred_check
          %p407 = pneg %p240
        $region46: #{transformer_forward.2} parent=11 // pred_check_branch
          %409 = sbr.rel (%p407) target = $region48
        $region47: #{transformer_forward.2} parent=11 // pred_region
          _
        $region48: #{transformer_forward.2} parent=11 // pred_fallthru
          _
        // Predicated region
        $region49: #{transformer_forward.2} parent=11 // pred_check
          %p410 = pneg %p261
        $region50: #{transformer_forward.2} parent=11 // pred_check_branch
          %412 = sbr.rel (%p410) target = $region52
        $region51: #{transformer_forward.2} parent=11 // pred_region
          %414 = vsyncadd [#allocation18], 0
          %s415 = sshll.u32 %s10, 4
          %s416 = int_to_ptr.hbm [resolvable:$true] %s415
          %s417 = sshll.u32 [#allocation17], 4
          %s418 = int_to_ptr.vmem [resolvable:$true] %s417
          %423 = dma.hbm_to_vmem [thread:$0]  %s416, 2048, %s418, [#allocation18], 64, 64, 4
        $region52: #{transformer_forward.2} parent=11 // pred_fallthru
          _
        // Predicated region
        $region53: #{transformer_forward.2} parent=11 // pred_check
          %p424 = pneg %p282
        $region54: #{transformer_forward.2} parent=11 // pred_check_branch
          %426 = sbr.rel (%p424) target = $region56
        $region55: #{transformer_forward.2} parent=11 // pred_region
          _
        $region56: #{transformer_forward.2} parent=11 // pred_fallthru
          _
      $region12: #{transformer_forward.2} parent=5 // pred_fallthru
        _
      %p427 = scmp.lt.s32.totalorder %s25, 2
      // Predicated region
      $region57: #{transformer_forward.2} parent=5 // pred_check
        %p428 = pneg %p427
      $region58: #{transformer_forward.2} parent=5 // pred_check_branch
        %430 = sbr.rel (%p428) target = $region60
      $region59: #{transformer_forward.2} parent=5 // pred_region
        // Predicated region
        $region61: #{transformer_forward.2} parent=59 // pred_check
          %p431 = pneg %p45
        $region62: #{transformer_forward.2} parent=59 // pred_check_branch
          %433 = sbr.rel (%p431) target = $region64
        $region63: #{transformer_forward.2} parent=59 // pred_region
          %s434 = sand.u32 %s35, 1
          %s435 = scalar_lea.sflag [#allocation7], %s434
          %s436 = sand.u32 %s35, 1
          %s437 = smul.addr %s436, 8
          %s438 = scalar_lea.vmem [#allocation6], %s437
          %440 = vsyncadd %s435, 0
          %s441 = smul.addr %s25, 8
          %s442 = scalar_lea.hbm %s0, %s441
          %s444 = sshll.u32 %s442, 4
          %s445 = int_to_ptr.hbm [resolvable:$true] %s444
          %s446 = sshll.u32 %s438, 4
          %s447 = int_to_ptr.vmem [resolvable:$true] %s446
          %449 = dma.hbm_to_vmem [thread:$0]  %s445, 128, %s447, %s435
        $region64: #{transformer_forward.2} parent=59 // pred_fallthru
          _
      $region60: #{transformer_forward.2} parent=5 // pred_fallthru
        _
      %p450 = scmp.le.s32.totalorder 1, %s25
      %p451 = scmp.lt.s32.totalorder %s25, 3
      %p452 = pnand %p450, %p451
      %p453 = pneg %p452
      // Predicated region
      $region65: #{transformer_forward.2} parent=5 // pred_check
        _
      $region66: #{transformer_forward.2} parent=5 // pred_check_branch
        %455 = sbr.rel (%p452) target = $region68
      $region67: #{transformer_forward.2} parent=5 // pred_region
        %s456 = ssub.s32 %s25, 1
        %s457 = sand.u32 %s38, 1
        %s458 = scalar_lea.sflag [#allocation7], %s457
        %s459 = sand.u32 %s38, 1
        %s460 = smul.addr %s459, 8
        %s461 = scalar_lea.vmem [#allocation6], %s460
        // Predicated region
        $region69: #{transformer_forward.2} parent=67 // pred_check
          %p462 = pneg %p51
        $region70: #{transformer_forward.2} parent=67 // pred_check_branch
          %464 = sbr.rel (%p462) target = $region72
        $region71: #{transformer_forward.2} parent=67 // pred_region
          %466 = dma.done %s458, 128
        $region72: #{transformer_forward.2} parent=67 // pred_fallthru
          _
        // Predicated region
        $region73: #{transformer_forward.2} parent=67 // pred_check
          %p467 = pneg %p72
        $region74: #{transformer_forward.2} parent=67 // pred_check_branch
          %469 = sbr.rel (%p467) target = $region76
        $region75: #{transformer_forward.2} parent=67 // pred_region
          %471 = dma.done [#allocation9], 16
        $region76: #{transformer_forward.2} parent=67 // pred_fallthru
          _
        // Predicated region
        $region77: #{transformer_forward.2} parent=67 // pred_check
          %p472 = pneg %p93
        $region78: #{transformer_forward.2} parent=67 // pred_check_branch
          %474 = sbr.rel (%p472) target = $region80
        $region79: #{transformer_forward.2} parent=67 // pred_region
          %476 = dma.done [#allocation9], 16
        $region80: #{transformer_forward.2} parent=67 // pred_fallthru
          _
        // Predicated region
        $region81: #{transformer_forward.2} parent=67 // pred_check
          %p477 = pneg %p114
        $region82: #{transformer_forward.2} parent=67 // pred_check_branch
          %479 = sbr.rel (%p477) target = $region84
        $region83: #{transformer_forward.2} parent=67 // pred_region
          %481 = dma.done [#allocation12], 3072
        $region84: #{transformer_forward.2} parent=67 // pred_fallthru
          _
        // Predicated region
        $region85: #{transformer_forward.2} parent=67 // pred_check
          %p482 = pneg %p135
        $region86: #{transformer_forward.2} parent=67 // pred_check_branch
          %484 = sbr.rel (%p482) target = $region88
        $region87: #{transformer_forward.2} parent=67 // pred_region
          %486 = dma.done [#allocation12], 1024
        $region88: #{transformer_forward.2} parent=67 // pred_fallthru
          _
        // Predicated region
        $region89: #{transformer_forward.2} parent=67 // pred_check
          %p487 = pneg %p156
        $region90: #{transformer_forward.2} parent=67 // pred_check_branch
          %489 = sbr.rel (%p487) target = $region92
        $region91: #{transformer_forward.2} parent=67 // pred_region
          %491 = dma.done [#allocation15], 16
        $region92: #{transformer_forward.2} parent=67 // pred_fallthru
          _
        // Predicated region
        $region93: #{transformer_forward.2} parent=67 // pred_check
          %p492 = pneg %p219
        $region94: #{transformer_forward.2} parent=67 // pred_check_branch
          %494 = sbr.rel (%p492) target = $region96
        $region95: #{transformer_forward.2} parent=67 // pred_region
          %496 = dma.done [#allocation15], 2048
        $region96: #{transformer_forward.2} parent=67 // pred_fallthru
          _
        // Predicated region
        $region97: #{transformer_forward.2} parent=67 // pred_check
          %p497 = pneg %p261
        $region98: #{transformer_forward.2} parent=67 // pred_check_branch
          %499 = sbr.rel (%p497) target = $region100
        $region99: #{transformer_forward.2} parent=67 // pred_region
          %501 = dma.done [#allocation18], 2048
        $region100: #{transformer_forward.2} parent=67 // pred_fallthru
          _
        %s502 = sand.u32 %s38, 1
        %s503 = scalar_lea.sflag [#allocation7], %s502
        %s504 = sand.u32 %s38, 1
        %s505 = smul.addr %s504, 8
        %s506 = scalar_lea.vmem [#allocation6], %s505
        %p507 = pneg %p51
        %p508 = pneg %p48
        %p509 = pneg %p72
        %p510 = pneg %p69
        %p511 = pneg %p93
        %p512 = pneg %p90
        %p513 = pneg %p114
        %p514 = pneg %p111
        %p515 = pneg %p135
        %p516 = pneg %p132
        %p517 = pneg %p156
        %p518 = pneg %p153
        %p519 = pneg %p177
        %p520 = pneg %p174
        %p521 = pneg %p198
        %p522 = pneg %p195
        %p523 = pneg %p219
        %p524 = pneg %p216
        %p525 = pneg %p240
        %p526 = pneg %p237
        %p527 = pneg %p261
        %p528 = pneg %p258
        %p529 = pneg %p282
        %p530 = pneg %p279
        %p531 = pneg %p308
        %p532 = pneg %p305
        %p533 = scmp.lt.s32.totalorder %s30, 1
        %s534 = scalar_select %p533, %s30, 1
        %s535 = smul.addr %s534, 8
        %s536 = scalar_lea.vmem %s12, %s535
        %p537 = scmp.lt.s32.totalorder %s30, 1
        %s538 = scalar_select %p537, %s30, 1
        %s539 = smul.addr %s538, 8
        %s540 = scalar_lea.vmem %s12, %s539
        %v542 = vld [vmem:[%s461] sm:$0xff]
        %v543 = vld [vmem:[#allocation8] sm:$0x1]
        %v544 = vld [vmem:[#allocation10] sm:$0x1]
        %545 = vadd.xlane.f32.xlu0 %v542
        %v546 = vpop.xlane.xlu0 %545
        %v547 = vrcp.pop 128.0
        %v548 = vmul.f32 128.0, %v547
        %v549 = vsub.f32 1.0, %v548
        %v550 = vmul.f32 %v547, %v549
        %v551 = vadd.f32 %v547, %v550
        %vm552 = vweird.f32 %v547
        %v553 = vsel %vm552, %v547, %v551
        %v554 = vmul.f32 %v546, %v553
        %v555 = vsub.f32 %v542, %v554
        %v556 = vmul.f32 %v555, %v555
        %557 = vadd.xlane.f32.xlu0 %v556
        %v558 = vpop.xlane.xlu0 %557
        %v559 = vmul.f32 %v558, %v553
        %v560 = vadd.f32 %v559, 1e-05
        %v561 = vrsqrt.pop %v560
        %v562 = vmul.f32 %v561, %v560
        %v563 = vmul.f32 %v562, %v561
        %v564 = vmul.f32 0.5, %v563
        %v565 = vsub.f32 1.5, %v564
        %v566 = vmul.f32 %v561, %v565
        %vm567 = vweird.f32 %v560
        %vm568 = vweird.f32 %v561
        %vm569 = vmor %vm567, %vm568
        %v570 = vsel %vm569, %v561, %v566
        %v571 = vmul.f32 %v555, %v570
        %v573 = vperm.slane %v543, 0
        %v575 = vmul.f32 %v571, %v573
        %v577 = vperm.slane %v544, 0
        %v579 = vadd.f32 %v575, %v577
        %v580 = vpack.c.bf16 %v579, %v579
        %v581 = vld [vmem:[#allocation11] sm:$0xff]
        %v582 = vld [vmem:[#allocation11 + $0x8] sm:$0xf]
        %v583 = vld [vmem:[#allocation11 + $0xc] sm:$0xff]
        %v584 = vld [vmem:[#allocation11 + $0x14] sm:$0xf]
        %v585 = vld [vmem:[#allocation11 + $0x18] sm:$0xff]
        %v586 = vld [vmem:[#allocation11 + $0x20] sm:$0xf]
        %v587 = vld [vmem:[#allocation11 + $0x24] sm:$0xff]
        %v588 = vld [vmem:[#allocation11 + $0x2c] sm:$0xf]
        %v589 = vld [vmem:[#allocation11 + $0x30] sm:$0xff]
        %v590 = vld [vmem:[#allocation11 + $0x38] sm:$0xf]
        %v591 = vld [vmem:[#allocation11 + $0x3c] sm:$0xff]
        %v592 = vld [vmem:[#allocation11 + $0x44] sm:$0xf]
        %v593 = vld [vmem:[#allocation11 + $0x48] sm:$0xff]
        %v594 = vld [vmem:[#allocation11 + $0x50] sm:$0xf]
        %v595 = vld [vmem:[#allocation11 + $0x54] sm:$0xff]
        %v596 = vld [vmem:[#allocation11 + $0x5c] sm:$0xf]
        %v597 = vld [vmem:[#allocation11 + $0x60] sm:$0xff]
        %v598 = vld [vmem:[#allocation11 + $0x68] sm:$0xf]
        %v599 = vld [vmem:[#allocation11 + $0x6c] sm:$0xff]
        %v600 = vld [vmem:[#allocation11 + $0x74] sm:$0xf]
        %v601 = vld [vmem:[#allocation11 + $0x78] sm:$0xff]
        %v602 = vld [vmem:[#allocation11 + $0x80] sm:$0xf]
        %v603 = vld [vmem:[#allocation11 + $0x84] sm:$0xff]
        %v604 = vld [vmem:[#allocation11 + $0x8c] sm:$0xf]
        %v605 = vld [vmem:[#allocation11 + $0x90] sm:$0xff]
        %v606 = vld [vmem:[#allocation11 + $0x98] sm:$0xf]
        %v607 = vld [vmem:[#allocation11 + $0x9c] sm:$0xff]
        %v608 = vld [vmem:[#allocation11 + $0xa4] sm:$0xf]
        %v609 = vld [vmem:[#allocation11 + $0xa8] sm:$0xff]
        %v610 = vld [vmem:[#allocation11 + $0xb0] sm:$0xf]
        %v611 = vld [vmem:[#allocation11 + $0xb4] sm:$0xff]
        %v612 = vld [vmem:[#allocation11 + $0xbc] sm:$0xf]
        %v645 = vunpack.c.l.b16 %v581
        %v646 = vunpack.c.h.b16 %v581
        %v647 = vunpack.c.l.b16 %v582
        %v648 = vunpack.c.l.b16 %v583
        %v649 = vunpack.c.h.b16 %v583
        %v650 = vunpack.c.l.b16 %v584
        %v651 = vunpack.c.l.b16 %v585
        %v652 = vunpack.c.h.b16 %v585
        %v653 = vunpack.c.l.b16 %v586
        %v654 = vunpack.c.l.b16 %v587
        %v655 = vunpack.c.h.b16 %v587
        %v656 = vunpack.c.l.b16 %v588
        %v657 = vunpack.c.l.b16 %v589
        %v658 = vunpack.c.h.b16 %v589
        %v659 = vunpack.c.l.b16 %v590
        %v660 = vunpack.c.l.b16 %v591
        %v661 = vunpack.c.h.b16 %v591
        %v662 = vunpack.c.l.b16 %v592
        %v663 = vunpack.c.l.b16 %v593
        %v664 = vunpack.c.h.b16 %v593
        %v665 = vunpack.c.l.b16 %v594
        %v666 = vunpack.c.l.b16 %v595
        %v667 = vunpack.c.h.b16 %v595
        %v668 = vunpack.c.l.b16 %v596
        %v669 = vunpack.c.l.b16 %v597
        %v670 = vunpack.c.h.b16 %v597
        %v671 = vunpack.c.l.b16 %v598
        %v672 = vunpack.c.l.b16 %v599
        %v673 = vunpack.c.h.b16 %v599
        %v674 = vunpack.c.l.b16 %v600
        %v675 = vunpack.c.l.b16 %v601
        %v676 = vunpack.c.h.b16 %v601
        %v677 = vunpack.c.l.b16 %v602
        %v678 = vunpack.c.l.b16 %v603
        %v679 = vunpack.c.h.b16 %v603
        %v680 = vunpack.c.l.b16 %v604
        %v681 = vunpack.c.l.b16 %v605
        %v682 = vunpack.c.h.b16 %v605
        %v683 = vunpack.c.l.b16 %v606
        %v684 = vunpack.c.l.b16 %v607
        %v685 = vunpack.c.h.b16 %v607
        %v686 = vunpack.c.l.b16 %v608
        %v687 = vunpack.c.l.b16 %v609
        %v688 = vunpack.c.h.b16 %v609
        %v689 = vunpack.c.l.b16 %v610
        %v690 = vunpack.c.l.b16 %v611
        %v691 = vunpack.c.h.b16 %v611
        %v692 = vunpack.c.l.b16 %v612
        %v693 = vpack.c.b16 %v648, %v645
        %v694 = vpack.c.b16 %v649, %v646
        %v695 = vpack.c.b16 %v650, %v647
        %v696 = vpack.c.b16 %v654, %v651
        %v697 = vpack.c.b16 %v655, %v652
        %v698 = vpack.c.b16 %v656, %v653
        %v699 = vpack.c.b16 %v660, %v657
        %v700 = vpack.c.b16 %v661, %v658
        %v701 = vpack.c.b16 %v662, %v659
        %v702 = vpack.c.b16 %v666, %v663
        %v703 = vpack.c.b16 %v667, %v664
        %v704 = vpack.c.b16 %v668, %v665
        %v705 = vpack.c.b16 %v672, %v669
        %v706 = vpack.c.b16 %v673, %v670
        %v707 = vpack.c.b16 %v674, %v671
        %v708 = vpack.c.b16 %v678, %v675
        %v709 = vpack.c.b16 %v679, %v676
        %v710 = vpack.c.b16 %v680, %v677
        %v711 = vpack.c.b16 %v684, %v681
        %v712 = vpack.c.b16 %v685, %v682
        %v713 = vpack.c.b16 %v686, %v683
        %v714 = vpack.c.b16 %v690, %v687
        %v715 = vpack.c.b16 %v691, %v688
        %v716 = vpack.c.b16 %v692, %v689
        %741 = vmatpush.bf16.msra.mxu0 %v714
        %742 = vmatpush.bf16.msra.mxu0 %v711
        %743 = vmatpush.bf16.msra.mxu0 %v708
        %744 = vmatpush.bf16.msra.mxu0 %v705
        %745 = vmatpush.bf16.msra.mxu0 %v702
        %746 = vmatpush.bf16.msra.mxu0 %v699
        %747 = vmatpush.bf16.msra.mxu0 %v696
        %748 = vmatpush.bf16.msra.mxu0 %v693
        %749 = vmatmul.bf16.gmra.mxu0 %v580
        %v750 = vpop.f32.mrf.mxu0
        %v751 = vadd.f32 0.0, %v750
        %v752 = vpop.f32.mrf.mxu0
        %753 = vdwg.mxu0
        %754 = vmatpush.bf16.msra.mxu0 %v715
        %755 = vmatpush.bf16.msra.mxu0 %v712
        %756 = vmatpush.bf16.msra.mxu0 %v709
        %757 = vmatpush.bf16.msra.mxu0 %v706
        %758 = vmatpush.bf16.msra.mxu0 %v703
        %759 = vmatpush.bf16.msra.mxu0 %v700
        %760 = vmatpush.bf16.msra.mxu0 %v697
        %761 = vmatpush.bf16.msra.mxu0 %v694
        %762 = vmatmul.bf16.gmra.mxu0 %v580
        %v763 = vpop.f32.mrf.mxu0
        %v764 = vadd.f32 0.0, %v763
        %v765 = vpop.f32.mrf.mxu0
        %766 = vdwg.mxu0
        %767 = vmatpush.bf16.msra.mxu0 %v716
        %768 = vmatpush.bf16.msra.mxu0 %v713
        %769 = vmatpush.bf16.msra.mxu0 %v710
        %770 = vmatpush.bf16.msra.mxu0 %v707
        %771 = vmatpush.bf16.msra.mxu0 %v704
        %772 = vmatpush.bf16.msra.mxu0 %v701
        %773 = vmatpush.bf16.msra.mxu0 %v698
        %774 = vmatpush.bf16.msra.mxu0 %v695
        %775 = vmatmul.bf16.gmra.mxu0 %v580
        %v776 = vpop.f32.mrf.mxu0
        %v777 = vadd.f32 0.0, %v776
        %v778 = vpop.f32.mrf.mxu0
        %779 = vdwg.mxu0
        %v780 = vmul.f32 %v751, 0.17677669
        %v781 = vpack.c.bf16 %v780, %v780
        %vm782 = vcmask 257024
        %783 = vst.msk [vmem:[#allocation2] sm:$0xf] %vm782, %v781
        %v784 = vpack.c.bf16 %v764, %v764
        %785 = vst.msk [vmem:[#allocation3] sm:$0xf] %vm782, %v784
        %v786 = vpack.c.bf16 %v777, %v777
        %787 = vst.msk [vmem:[#allocation4] sm:$0xf] %vm782, %v786
        %789 = vrot.lane.b32.xlu0 %v781, 96
        %v790 = vpop.permute.xlu0 %789
        %s792 = scalar_lea.vmem [#allocation2], 4
        %793 = vst.msk [vmem:[%s792] sm:$0xf] %vm782, %v790
        %795 = vrot.lane.b32.xlu0 %v784, 96
        %v796 = vpop.permute.xlu0 %795
        %s798 = scalar_lea.vmem [#allocation3], 4
        %799 = vst.msk [vmem:[%s798] sm:$0xf] %vm782, %v796
        %801 = vrot.lane.b32.xlu0 %v786, 96
        %v802 = vpop.permute.xlu0 %801
        %s804 = scalar_lea.vmem [#allocation4], 4
        %805 = vst.msk [vmem:[%s804] sm:$0xf] %vm782, %v802
        %806 = vrot.lane.b32.xlu0 %v781, 64
        %v807 = vpop.permute.xlu0 %806
        %s809 = scalar_lea.vmem [#allocation2], 8
        %810 = vst.msk [vmem:[%s809] sm:$0xf] %vm782, %v807
        %811 = vrot.lane.b32.xlu0 %v784, 64
        %v812 = vpop.permute.xlu0 %811
        %s814 = scalar_lea.vmem [#allocation3], 8
        %815 = vst.msk [vmem:[%s814] sm:$0xf] %vm782, %v812
        %816 = vrot.lane.b32.xlu0 %v786, 64
        %v817 = vpop.permute.xlu0 %816
        %s819 = scalar_lea.vmem [#allocation4], 8
        %820 = vst.msk [vmem:[%s819] sm:$0xf] %vm782, %v817
        %821 = vrot.lane.b32.xlu0 %v781, 32
        %v822 = vpop.permute.xlu0 %821
        %s824 = scalar_lea.vmem [#allocation2], 12
        %825 = vst.msk [vmem:[%s824] sm:$0xf] %vm782, %v822
        %826 = vrot.lane.b32.xlu0 %v784, 32
        %v827 = vpop.permute.xlu0 %826
        %s829 = scalar_lea.vmem [#allocation3], 12
        %830 = vst.msk [vmem:[%s829] sm:$0xf] %vm782, %v827
        %831 = vrot.lane.b32.xlu0 %v786, 32
        %v832 = vpop.permute.xlu0 %831
        %s834 = scalar_lea.vmem [#allocation4], 12
        %835 = vst.msk [vmem:[%s834] sm:$0xf] %vm782, %v832
        %v836 = vld [vmem:[#allocation2] sm:$0xf]
        %v837 = vld [vmem:[#allocation2 + $0x4] sm:$0xf]
        %v838 = vld [vmem:[#allocation2 + $0x8] sm:$0xf]
        %v839 = vld [vmem:[#allocation2 + $0xc] sm:$0xf]
        %v840 = vld [vmem:[#allocation3] sm:$0xf]
        %v841 = vld [vmem:[#allocation3 + $0x4] sm:$0xf]
        %v842 = vld [vmem:[#allocation3 + $0x8] sm:$0xf]
        %v843 = vld [vmem:[#allocation3 + $0xc] sm:$0xf]
        %vm844 = vcmask 261120
        %v846 = vsel %vm844, %v836, 0
        %v849 = vsel %vm844, %v840, 0
        %851 = vmatpush.bf16.xpose.msra.mxu0 0
        %852 = vmatpush.bf16.xpose.msra.mxu0 0
        %853 = vmatpush.bf16.xpose.msra.mxu0 0
        %854 = vmatpush.bf16.xpose.msra.mxu0 0
        %855 = vmatpush.bf16.xpose.msra.mxu0 0
        %856 = vmatpush.bf16.xpose.msra.mxu0 0
        %857 = vmatpush.bf16.xpose.msra.mxu0 0
        %858 = vmatpush.bf16.xpose.msra.mxu0 %v849
        %859 = vmatmul.bf16.gmra.mxu0 %v846
        %v860 = vpop.f32.mrf.mxu0
        %v861 = vadd.f32 0.0, %v860
        %v862 = vpop.f32.mrf.mxu0
        %863 = vdwg.mxu0
        %v865 = vsel %vm844, %v837, 0
        %v868 = vsel %vm844, %v841, 0
        %870 = vmatpush.bf16.xpose.msra.mxu0 0
        %871 = vmatpush.bf16.xpose.msra.mxu0 0
        %872 = vmatpush.bf16.xpose.msra.mxu0 0
        %873 = vmatpush.bf16.xpose.msra.mxu0 0
        %874 = vmatpush.bf16.xpose.msra.mxu0 0
        %875 = vmatpush.bf16.xpose.msra.mxu0 0
        %876 = vmatpush.bf16.xpose.msra.mxu0 0
        %877 = vmatpush.bf16.xpose.msra.mxu0 %v868
        %878 = vmatmul.bf16.gmra.mxu0 %v865
        %v879 = vpop.f32.mrf.mxu0
        %v880 = vadd.f32 0.0, %v879
        %v881 = vpop.f32.mrf.mxu0
        %882 = vdwg.mxu0
        %v884 = vsel %vm844, %v838, 0
        %v887 = vsel %vm844, %v842, 0
        %889 = vmatpush.bf16.xpose.msra.mxu0 0
        %890 = vmatpush.bf16.xpose.msra.mxu0 0
        %891 = vmatpush.bf16.xpose.msra.mxu0 0
        %892 = vmatpush.bf16.xpose.msra.mxu0 0
        %893 = vmatpush.bf16.xpose.msra.mxu0 0
        %894 = vmatpush.bf16.xpose.msra.mxu0 0
        %895 = vmatpush.bf16.xpose.msra.mxu0 0
        %896 = vmatpush.bf16.xpose.msra.mxu0 %v887
        %897 = vmatmul.bf16.gmra.mxu0 %v884
        %v898 = vpop.f32.mrf.mxu0
        %v899 = vadd.f32 0.0, %v898
        %v900 = vpop.f32.mrf.mxu0
        %901 = vdwg.mxu0
        %v903 = vsel %vm844, %v839, 0
        %v906 = vsel %vm844, %v843, 0
        %908 = vmatpush.bf16.xpose.msra.mxu0 0
        %909 = vmatpush.bf16.xpose.msra.mxu0 0
        %910 = vmatpush.bf16.xpose.msra.mxu0 0
        %911 = vmatpush.bf16.xpose.msra.mxu0 0
        %912 = vmatpush.bf16.xpose.msra.mxu0 0
        %913 = vmatpush.bf16.xpose.msra.mxu0 0
        %914 = vmatpush.bf16.xpose.msra.mxu0 0
        %915 = vmatpush.bf16.xpose.msra.mxu0 %v906
        %916 = vmatmul.bf16.gmra.mxu0 %v903
        %v917 = vpop.f32.mrf.mxu0
        %v918 = vadd.f32 0.0, %v917
        %v919 = vpop.f32.mrf.mxu0
        %920 = vdwg.mxu0
        %vm921 = vcmask 64512
        %v922 = vsel %vm921, %v861, -inf
        %923 = vmax.xlane.f32.xlu0 %v922
        %v924 = vpop.xlane.xlu0 %923
        %v925 = vsel %vm921, %v880, -inf
        %926 = vmax.xlane.f32.xlu0 %v925
        %v927 = vpop.xlane.xlu0 %926
        %v928 = vsel %vm921, %v899, -inf
        %929 = vmax.xlane.f32.xlu0 %v928
        %v930 = vpop.xlane.xlu0 %929
        %v931 = vsel %vm921, %v918, -inf
        %932 = vmax.xlane.f32.xlu0 %v931
        %v933 = vpop.xlane.xlu0 %932
        %v934 = vsub.f32 %v861, %v924
        %v935 = vsub.f32 %v880, %v927
        %v936 = vsub.f32 %v899, %v930
        %v937 = vsub.f32 %v918, %v933
        %v938 = vmul.f32 %v934, 1.442695
        %v939 = vpow.pop %v938
        %v940 = vmul.f32 %v935, 1.442695
        %v941 = vpow.pop %v940
        %v942 = vmul.f32 %v936, 1.442695
        %v943 = vpow.pop %v942
        %v944 = vmul.f32 %v937, 1.442695
        %v945 = vpow.pop %v944
        %v946 = vsel %vm921, %v939, 0.0
        %947 = vadd.xlane.f32.xlu0 %v946
        %v948 = vpop.xlane.xlu0 %947
        %v949 = vsel %vm921, %v941, 0.0
        %950 = vadd.xlane.f32.xlu0 %v949
        %v951 = vpop.xlane.xlu0 %950
        %v952 = vsel %vm921, %v943, 0.0
        %953 = vadd.xlane.f32.xlu0 %v952
        %v954 = vpop.xlane.xlu0 %953
        %v955 = vsel %vm921, %v945, 0.0
        %956 = vadd.xlane.f32.xlu0 %v955
        %v957 = vpop.xlane.xlu0 %956
        %v958 = vrcp.pop %v948
        %v959 = vrcp.pop %v951
        %v960 = vrcp.pop %v954
        %v961 = vrcp.pop %v957
        %v962 = vmul.f32 %v939, %v958
        %v963 = vmul.f32 %v941, %v959
        %v964 = vmul.f32 %v943, %v960
        %v965 = vmul.f32 %v945, %v961
        %v966 = vpack.c.bf16 %v962, %v962
        %v967 = vpack.c.bf16 %v963, %v963
        %v968 = vpack.c.bf16 %v964, %v964
        %v969 = vpack.c.bf16 %v965, %v965
        %v970 = vld [vmem:[#allocation4] sm:$0xf]
        %v971 = vld [vmem:[#allocation4 + $0x4] sm:$0xf]
        %v972 = vld [vmem:[#allocation4 + $0x8] sm:$0xf]
        %v973 = vld [vmem:[#allocation4 + $0xc] sm:$0xf]
        %v975 = vsel %vm921, %v966, 0
        %vm977 = vcmask 1043456
        %v979 = vsel %vm977, %v970, 0
        %981 = vmatpush.bf16.msra.mxu0 0
        %982 = vmatpush.bf16.msra.mxu0 0
        %983 = vmatpush.bf16.msra.mxu0 0
        %984 = vmatpush.bf16.msra.mxu0 0
        %985 = vmatpush.bf16.msra.mxu0 0
        %986 = vmatpush.bf16.msra.mxu0 0
        %987 = vmatpush.bf16.msra.mxu0 0
        %988 = vmatpush.bf16.msra.mxu0 %v979
        %989 = vmatmul.bf16.gmra.mxu0 %v975
        %v990 = vpop.f32.mrf.mxu0
        %v991 = vadd.f32 0.0, %v990
        %v992 = vpop.f32.mrf.mxu0
        %993 = vdwg.mxu0
        %v995 = vsel %vm921, %v967, 0
        %v998 = vsel %vm977, %v971, 0
        %1000 = vmatpush.bf16.msra.mxu0 0
        %1001 = vmatpush.bf16.msra.mxu0 0
        %1002 = vmatpush.bf16.msra.mxu0 0
        %1003 = vmatpush.bf16.msra.mxu0 0
        %1004 = vmatpush.bf16.msra.mxu0 0
        %1005 = vmatpush.bf16.msra.mxu0 0
        %1006 = vmatpush.bf16.msra.mxu0 0
        %1007 = vmatpush.bf16.msra.mxu0 %v998
        %1008 = vmatmul.bf16.gmra.mxu0 %v995
        %v1009 = vpop.f32.mrf.mxu0
        %v1010 = vadd.f32 0.0, %v1009
        %v1011 = vpop.f32.mrf.mxu0
        %1012 = vdwg.mxu0
        %v1014 = vsel %vm921, %v968, 0
        %v1017 = vsel %vm977, %v972, 0
        %1019 = vmatpush.bf16.msra.mxu0 0
        %1020 = vmatpush.bf16.msra.mxu0 0
        %1021 = vmatpush.bf16.msra.mxu0 0
        %1022 = vmatpush.bf16.msra.mxu0 0
        %1023 = vmatpush.bf16.msra.mxu0 0
        %1024 = vmatpush.bf16.msra.mxu0 0
        %1025 = vmatpush.bf16.msra.mxu0 0
        %1026 = vmatpush.bf16.msra.mxu0 %v1017
        %1027 = vmatmul.bf16.gmra.mxu0 %v1014
        %v1028 = vpop.f32.mrf.mxu0
        %v1029 = vadd.f32 0.0, %v1028
        %v1030 = vpop.f32.mrf.mxu0
        %1031 = vdwg.mxu0
        %v1033 = vsel %vm921, %v969, 0
        %v1036 = vsel %vm977, %v973, 0
        %1038 = vmatpush.bf16.msra.mxu0 0
        %1039 = vmatpush.bf16.msra.mxu0 0
        %1040 = vmatpush.bf16.msra.mxu0 0
        %1041 = vmatpush.bf16.msra.mxu0 0
        %1042 = vmatpush.bf16.msra.mxu0 0
        %1043 = vmatpush.bf16.msra.mxu0 0
        %1044 = vmatpush.bf16.msra.mxu0 0
        %1045 = vmatpush.bf16.msra.mxu0 %v1036
        %1046 = vmatmul.bf16.gmra.mxu0 %v1033
        %v1047 = vpop.f32.mrf.mxu0
        %v1048 = vadd.f32 0.0, %v1047
        %v1049 = vpop.f32.mrf.mxu0
        %1050 = vdwg.mxu0
        %v1051 = vpack.c.bf16 %v991, %v991
        %1052 = vst.msk [vmem:[#allocation5] sm:$0xf] %vm782, %v1051
        %v1053 = vpack.c.bf16 %v1010, %v1010
        %1055 = vrot.lane.b32.xlu0 %v1053, 32
        %v1056 = vpop.permute.xlu0 %1055
        %vm1058 = vcmask 519424
        %1059 = vst.msk [vmem:[#allocation5] sm:$0xf] %vm1058, %v1056
        %v1060 = vpack.c.bf16 %v1029, %v1029
        %1062 = vrot.lane.b32.xlu0 %v1060, 64
        %v1063 = vpop.permute.xlu0 %1062
        %vm1065 = vcmask 781824
        %1066 = vst.msk [vmem:[#allocation5] sm:$0xf] %vm1065, %v1063
        %v1067 = vpack.c.bf16 %v1048, %v1048
        %1069 = vrot.lane.b32.xlu0 %v1067, 96
        %v1070 = vpop.permute.xlu0 %1069
        %vm1072 = vcmask 1044224
        %1073 = vst.msk [vmem:[#allocation5] sm:$0xf] %vm1072, %v1070
        %v1074 = vld [vmem:[#allocation5] sm:$0xf]
        %v1075 = vld [vmem:[#allocation13] sm:$0xf]
        %v1076 = vld [vmem:[#allocation13 + $0x4] sm:$0xf]
        %v1077 = vld [vmem:[#allocation13 + $0x8] sm:$0xf]
        %v1078 = vld [vmem:[#allocation13 + $0xc] sm:$0xf]
        %v1079 = vld [vmem:[#allocation13 + $0x10] sm:$0xf]
        %v1080 = vld [vmem:[#allocation13 + $0x14] sm:$0xf]
        %v1081 = vld [vmem:[#allocation13 + $0x18] sm:$0xf]
        %v1082 = vld [vmem:[#allocation13 + $0x1c] sm:$0xf]
        %v1083 = vld [vmem:[#allocation13 + $0x20] sm:$0xf]
        %v1084 = vld [vmem:[#allocation13 + $0x24] sm:$0xf]
        %v1085 = vld [vmem:[#allocation13 + $0x28] sm:$0xf]
        %v1086 = vld [vmem:[#allocation13 + $0x2c] sm:$0xf]
        %v1087 = vld [vmem:[#allocation13 + $0x30] sm:$0xf]
        %v1088 = vld [vmem:[#allocation13 + $0x34] sm:$0xf]
        %v1089 = vld [vmem:[#allocation13 + $0x38] sm:$0xf]
        %v1090 = vld [vmem:[#allocation13 + $0x3c] sm:$0xf]
        %v1107 = vunpack.c.l.b16 %v1075
        %v1108 = vunpack.c.l.b16 %v1076
        %v1109 = vunpack.c.l.b16 %v1077
        %v1110 = vunpack.c.l.b16 %v1078
        %v1111 = vunpack.c.l.b16 %v1079
        %v1112 = vunpack.c.l.b16 %v1080
        %v1113 = vunpack.c.l.b16 %v1081
        %v1114 = vunpack.c.l.b16 %v1082
        %v1115 = vunpack.c.l.b16 %v1083
        %v1116 = vunpack.c.l.b16 %v1084
        %v1117 = vunpack.c.l.b16 %v1085
        %v1118 = vunpack.c.l.b16 %v1086
        %v1119 = vunpack.c.l.b16 %v1087
        %v1120 = vunpack.c.l.b16 %v1088
        %v1121 = vunpack.c.l.b16 %v1089
        %v1122 = vunpack.c.l.b16 %v1090
        %v1123 = vpack.c.b16 %v1108, %v1107
        %v1124 = vpack.c.b16 %v1110, %v1109
        %v1125 = vpack.c.b16 %v1112, %v1111
        %v1126 = vpack.c.b16 %v1114, %v1113
        %v1127 = vpack.c.b16 %v1116, %v1115
        %v1128 = vpack.c.b16 %v1118, %v1117
        %v1129 = vpack.c.b16 %v1120, %v1119
        %v1130 = vpack.c.b16 %v1122, %v1121
        %1139 = vmatpush.bf16.msra.mxu0 %v1130
        %1140 = vmatpush.bf16.msra.mxu0 %v1129
        %1141 = vmatpush.bf16.msra.mxu0 %v1128
        %1142 = vmatpush.bf16.msra.mxu0 %v1127
        %1143 = vmatpush.bf16.msra.mxu0 %v1126
        %1144 = vmatpush.bf16.msra.mxu0 %v1125
        %1145 = vmatpush.bf16.msra.mxu0 %v1124
        %1146 = vmatpush.bf16.msra.mxu0 %v1123
        %1147 = vmatmul.bf16.gmra.mxu0 %v1074
        %v1148 = vpop.f32.mrf.mxu0
        %v1149 = vadd.f32 0.0, %v1148
        %v1150 = vpop.f32.mrf.mxu0
        %1151 = vdwg.mxu0
        %v1152 = vadd.f32 %v542, %v1149
        %v1153 = vld [vmem:[#allocation14] sm:$0x1]
        %v1155 = vperm.slane %v1153, 0
        %v1157 = vadd.f32 %v1152, %v1155
        %v1158 = vld [vmem:[%s6] sm:$0x1]
        %v1159 = vld [vmem:[%s7] sm:$0x1]
        %1160 = vadd.xlane.f32.xlu0 %v1157
        %v1161 = vpop.xlane.xlu0 %1160
        %v1162 = vmul.f32 %v1161, %v553
        %v1163 = vsub.f32 %v1157, %v1162
        %v1164 = vmul.f32 %v1163, %v1163
        %1165 = vadd.xlane.f32.xlu0 %v1164
        %v1166 = vpop.xlane.xlu0 %1165
        %v1167 = vmul.f32 %v1166, %v553
        %v1168 = vadd.f32 %v1167, 1e-05
        %v1169 = vrsqrt.pop %v1168
        %v1170 = vmul.f32 %v1169, %v1168
        %v1171 = vmul.f32 %v1170, %v1169
        %v1172 = vmul.f32 0.5, %v1171
        %v1173 = vsub.f32 1.5, %v1172
        %v1174 = vmul.f32 %v1169, %v1173
        %vm1175 = vweird.f32 %v1168
        %vm1176 = vweird.f32 %v1169
        %vm1177 = vmor %vm1175, %vm1176
        %v1178 = vsel %vm1177, %v1169, %v1174
        %v1179 = vmul.f32 %v1163, %v1178
        %v1181 = vperm.slane %v1158, 0
        %v1183 = vmul.f32 %v1179, %v1181
        %v1185 = vperm.slane %v1159, 0
        %v1187 = vadd.f32 %v1183, %v1185
        %v1188 = vpack.c.bf16 %v1187, %v1187
        %v1189 = vld [vmem:[#allocation16] sm:$0xff]
        %v1190 = vld [vmem:[#allocation16 + $0x8] sm:$0xff]
        %v1191 = vld [vmem:[#allocation16 + $0x10] sm:$0xff]
        %v1192 = vld [vmem:[#allocation16 + $0x18] sm:$0xff]
        %v1193 = vld [vmem:[#allocation16 + $0x20] sm:$0xff]
        %v1194 = vld [vmem:[#allocation16 + $0x28] sm:$0xff]
        %v1195 = vld [vmem:[#allocation16 + $0x30] sm:$0xff]
        %v1196 = vld [vmem:[#allocation16 + $0x38] sm:$0xff]
        %v1197 = vld [vmem:[#allocation16 + $0x40] sm:$0xff]
        %v1198 = vld [vmem:[#allocation16 + $0x48] sm:$0xff]
        %v1199 = vld [vmem:[#allocation16 + $0x50] sm:$0xff]
        %v1200 = vld [vmem:[#allocation16 + $0x58] sm:$0xff]
        %v1201 = vld [vmem:[#allocation16 + $0x60] sm:$0xff]
        %v1202 = vld [vmem:[#allocation16 + $0x68] sm:$0xff]
        %v1203 = vld [vmem:[#allocation16 + $0x70] sm:$0xff]
        %v1204 = vld [vmem:[#allocation16 + $0x78] sm:$0xff]
        %v1205 = vld [vmem:[%s9] sm:$0x3]
        %v1207 = vperm.slane %v1205, 0
        %v1208 = vperm.slane %v1205, 1
        %v1227 = vunpack.c.l.b16 %v1189
        %v1228 = vunpack.c.h.b16 %v1189
        %v1229 = vunpack.c.l.b16 %v1190
        %v1230 = vunpack.c.h.b16 %v1190
        %v1231 = vunpack.c.l.b16 %v1191
        %v1232 = vunpack.c.h.b16 %v1191
        %v1233 = vunpack.c.l.b16 %v1192
        %v1234 = vunpack.c.h.b16 %v1192
        %v1235 = vunpack.c.l.b16 %v1193
        %v1236 = vunpack.c.h.b16 %v1193
        %v1237 = vunpack.c.l.b16 %v1194
        %v1238 = vunpack.c.h.b16 %v1194
        %v1239 = vunpack.c.l.b16 %v1195
        %v1240 = vunpack.c.h.b16 %v1195
        %v1241 = vunpack.c.l.b16 %v1196
        %v1242 = vunpack.c.h.b16 %v1196
        %v1243 = vunpack.c.l.b16 %v1197
        %v1244 = vunpack.c.h.b16 %v1197
        %v1245 = vunpack.c.l.b16 %v1198
        %v1246 = vunpack.c.h.b16 %v1198
        %v1247 = vunpack.c.l.b16 %v1199
        %v1248 = vunpack.c.h.b16 %v1199
        %v1249 = vunpack.c.l.b16 %v1200
        %v1250 = vunpack.c.h.b16 %v1200
        %v1251 = vunpack.c.l.b16 %v1201
        %v1252 = vunpack.c.h.b16 %v1201
        %v1253 = vunpack.c.l.b16 %v1202
        %v1254 = vunpack.c.h.b16 %v1202
        %v1255 = vunpack.c.l.b16 %v1203
        %v1256 = vunpack.c.h.b16 %v1203
        %v1257 = vunpack.c.l.b16 %v1204
        %v1258 = vunpack.c.h.b16 %v1204
        %v1259 = vpack.c.b16 %v1229, %v1227
        %v1260 = vpack.c.b16 %v1230, %v1228
        %v1261 = vpack.c.b16 %v1233, %v1231
        %v1262 = vpack.c.b16 %v1234, %v1232
        %v1263 = vpack.c.b16 %v1237, %v1235
        %v1264 = vpack.c.b16 %v1238, %v1236
        %v1265 = vpack.c.b16 %v1241, %v1239
        %v1266 = vpack.c.b16 %v1242, %v1240
        %v1267 = vpack.c.b16 %v1245, %v1243
        %v1268 = vpack.c.b16 %v1246, %v1244
        %v1269 = vpack.c.b16 %v1249, %v1247
        %v1270 = vpack.c.b16 %v1250, %v1248
        %v1271 = vpack.c.b16 %v1253, %v1251
        %v1272 = vpack.c.b16 %v1254, %v1252
        %v1273 = vpack.c.b16 %v1257, %v1255
        %v1274 = vpack.c.b16 %v1258, %v1256
        %1291 = vmatpush.bf16.msra.mxu0 %v1273
        %1292 = vmatpush.bf16.msra.mxu0 %v1271
        %1293 = vmatpush.bf16.msra.mxu0 %v1269
        %1294 = vmatpush.bf16.msra.mxu0 %v1267
        %1295 = vmatpush.bf16.msra.mxu0 %v1265
        %1296 = vmatpush.bf16.msra.mxu0 %v1263
        %1297 = vmatpush.bf16.msra.mxu0 %v1261
        %1298 = vmatpush.bf16.msra.mxu0 %v1259
        %1299 = vmatmul.bf16.gmra.mxu0 %v1188
        %v1300 = vpop.f32.mrf.mxu0
        %v1301 = vadd.f32 %v1207, %v1300
        %v1302 = vpop.f32.mrf.mxu0
        %1303 = vdwg.mxu0
        %1304 = vmatpush.bf16.msra.mxu0 %v1274
        %1305 = vmatpush.bf16.msra.mxu0 %v1272
        %1306 = vmatpush.bf16.msra.mxu0 %v1270
        %1307 = vmatpush.bf16.msra.mxu0 %v1268
        %1308 = vmatpush.bf16.msra.mxu0 %v1266
        %1309 = vmatpush.bf16.msra.mxu0 %v1264
        %1310 = vmatpush.bf16.msra.mxu0 %v1262
        %1311 = vmatpush.bf16.msra.mxu0 %v1260
        %1312 = vmatmul.bf16.gmra.mxu0 %v1188
        %v1313 = vpop.f32.mrf.mxu0
        %v1314 = vadd.f32 %v1208, %v1313
        %v1315 = vpop.f32.mrf.mxu0
        %1316 = vdwg.mxu0
        %v1317 = vmul.f32 %v1301, 0.5
        %v1318 = vmul.f32 %v1314, 0.5
        %v1319 = vmul.f32 %v1301, 0.044715
        %v1320 = vmul.f32 %v1314, 0.044715
        %v1321 = vmul.f32 %v1319, %v1301
        %v1322 = vmul.f32 %v1320, %v1314
        %v1323 = vmul.f32 %v1321, %v1301
        %v1324 = vmul.f32 %v1322, %v1314
        %v1325 = vadd.f32 %v1301, %v1323
        %v1326 = vadd.f32 %v1314, %v1324
        %v1327 = vmul.f32 %v1325, 0.7978846
        %v1328 = vmul.f32 %v1326, 0.7978846
        %v1329 = vtanh.pop %v1327
        %v1330 = vtanh.pop %v1328
        %v1331 = vadd.f32 %v1329, 1.0
        %v1332 = vadd.f32 %v1330, 1.0
        %v1333 = vmul.f32 %v1317, %v1331
        %v1334 = vmul.f32 %v1318, %v1332
        %v1335 = vpack.c.bf16 %v1333, %v1333
        %v1336 = vpack.c.bf16 %v1334, %v1334
        %v1337 = vld [vmem:[#allocation17] sm:$0xf]
        %v1338 = vld [vmem:[#allocation17 + $0x4] sm:$0xf]
        %v1339 = vld [vmem:[#allocation17 + $0x8] sm:$0xf]
        %v1340 = vld [vmem:[#allocation17 + $0xc] sm:$0xf]
        %v1341 = vld [vmem:[#allocation17 + $0x10] sm:$0xf]
        %v1342 = vld [vmem:[#allocation17 + $0x14] sm:$0xf]
        %v1343 = vld [vmem:[#allocation17 + $0x18] sm:$0xf]
        %v1344 = vld [vmem:[#allocation17 + $0x1c] sm:$0xf]
        %v1345 = vld [vmem:[#allocation17 + $0x20] sm:$0xf]
        %v1346 = vld [vmem:[#allocation17 + $0x24] sm:$0xf]
        %v1347 = vld [vmem:[#allocation17 + $0x28] sm:$0xf]
        %v1348 = vld [vmem:[#allocation17 + $0x2c] sm:$0xf]
        %v1349 = vld [vmem:[#allocation17 + $0x30] sm:$0xf]
        %v1350 = vld [vmem:[#allocation17 + $0x34] sm:$0xf]
        %v1351 = vld [vmem:[#allocation17 + $0x38] sm:$0xf]
        %v1352 = vld [vmem:[#allocation17 + $0x3c] sm:$0xf]
        %v1353 = vld [vmem:[#allocation17 + $0x40] sm:$0xf]
        %v1354 = vld [vmem:[#allocation17 + $0x44] sm:$0xf]
        %v1355 = vld [vmem:[#allocation17 + $0x48] sm:$0xf]
        %v1356 = vld [vmem:[#allocation17 + $0x4c] sm:$0xf]
        %v1357 = vld [vmem:[#allocation17 + $0x50] sm:$0xf]
        %v1358 = vld [vmem:[#allocation17 + $0x54] sm:$0xf]
        %v1359 = vld [vmem:[#allocation17 + $0x58] sm:$0xf]
        %v1360 = vld [vmem:[#allocation17 + $0x5c] sm:$0xf]
        %v1361 = vld [vmem:[#allocation17 + $0x60] sm:$0xf]
        %v1362 = vld [vmem:[#allocation17 + $0x64] sm:$0xf]
        %v1363 = vld [vmem:[#allocation17 + $0x68] sm:$0xf]
        %v1364 = vld [vmem:[#allocation17 + $0x6c] sm:$0xf]
        %v1365 = vld [vmem:[#allocation17 + $0x70] sm:$0xf]
        %v1366 = vld [vmem:[#allocation17 + $0x74] sm:$0xf]
        %v1367 = vld [vmem:[#allocation17 + $0x78] sm:$0xf]
        %v1368 = vld [vmem:[#allocation17 + $0x7c] sm:$0xf]
        %v1369 = vld [vmem:[%s11] sm:$0x1]
        %v1371 = vperm.slane %v1369, 0
        %v1405 = vunpack.c.l.b16 %v1337
        %v1406 = vunpack.c.l.b16 %v1338
        %v1407 = vunpack.c.l.b16 %v1339
        %v1408 = vunpack.c.l.b16 %v1340
        %v1409 = vunpack.c.l.b16 %v1341
        %v1410 = vunpack.c.l.b16 %v1342
        %v1411 = vunpack.c.l.b16 %v1343
        %v1412 = vunpack.c.l.b16 %v1344
        %v1413 = vunpack.c.l.b16 %v1345
        %v1414 = vunpack.c.l.b16 %v1346
        %v1415 = vunpack.c.l.b16 %v1347
        %v1416 = vunpack.c.l.b16 %v1348
        %v1417 = vunpack.c.l.b16 %v1349
        %v1418 = vunpack.c.l.b16 %v1350
        %v1419 = vunpack.c.l.b16 %v1351
        %v1420 = vunpack.c.l.b16 %v1352
        %v1421 = vunpack.c.l.b16 %v1353
        %v1422 = vunpack.c.l.b16 %v1354
        %v1423 = vunpack.c.l.b16 %v1355
        %v1424 = vunpack.c.l.b16 %v1356
        %v1425 = vunpack.c.l.b16 %v1357
        %v1426 = vunpack.c.l.b16 %v1358
        %v1427 = vunpack.c.l.b16 %v1359
        %v1428 = vunpack.c.l.b16 %v1360
        %v1429 = vunpack.c.l.b16 %v1361
        %v1430 = vunpack.c.l.b16 %v1362
        %v1431 = vunpack.c.l.b16 %v1363
        %v1432 = vunpack.c.l.b16 %v1364
        %v1433 = vunpack.c.l.b16 %v1365
        %v1434 = vunpack.c.l.b16 %v1366
        %v1435 = vunpack.c.l.b16 %v1367
        %v1436 = vunpack.c.l.b16 %v1368
        %v1437 = vpack.c.b16 %v1406, %v1405
        %v1438 = vpack.c.b16 %v1408, %v1407
        %v1439 = vpack.c.b16 %v1410, %v1409
        %v1440 = vpack.c.b16 %v1412, %v1411
        %v1441 = vpack.c.b16 %v1414, %v1413
        %v1442 = vpack.c.b16 %v1416, %v1415
        %v1443 = vpack.c.b16 %v1418, %v1417
        %v1444 = vpack.c.b16 %v1420, %v1419
        %v1445 = vpack.c.b16 %v1422, %v1421
        %v1446 = vpack.c.b16 %v1424, %v1423
        %v1447 = vpack.c.b16 %v1426, %v1425
        %v1448 = vpack.c.b16 %v1428, %v1427
        %v1449 = vpack.c.b16 %v1430, %v1429
        %v1450 = vpack.c.b16 %v1432, %v1431
        %v1451 = vpack.c.b16 %v1434, %v1433
        %v1452 = vpack.c.b16 %v1436, %v1435
        %1469 = vmatpush.bf16.msra.mxu0 %v1444
        %1470 = vmatpush.bf16.msra.mxu0 %v1443
        %1471 = vmatpush.bf16.msra.mxu0 %v1442
        %1472 = vmatpush.bf16.msra.mxu0 %v1441
        %1473 = vmatpush.bf16.msra.mxu0 %v1440
        %1474 = vmatpush.bf16.msra.mxu0 %v1439
        %1475 = vmatpush.bf16.msra.mxu0 %v1438
        %1476 = vmatpush.bf16.msra.mxu0 %v1437
        %1477 = vmatmul.bf16.gmra.mxu0 %v1335
        %v1478 = vpop.f32.mrf.mxu0
        %v1479 = vadd.f32 %v1371, %v1478
        %v1480 = vpop.f32.mrf.mxu0
        %1481 = vdwg.mxu0
        %1482 = vmatpush.bf16.msra.mxu0 %v1452
        %1483 = vmatpush.bf16.msra.mxu0 %v1451
        %1484 = vmatpush.bf16.msra.mxu0 %v1450
        %1485 = vmatpush.bf16.msra.mxu0 %v1449
        %1486 = vmatpush.bf16.msra.mxu0 %v1448
        %1487 = vmatpush.bf16.msra.mxu0 %v1447
        %1488 = vmatpush.bf16.msra.mxu0 %v1446
        %1489 = vmatpush.bf16.msra.mxu0 %v1445
        %1490 = vmatmul.bf16.gmra.mxu0 %v1336
        %v1491 = vpop.f32.mrf.mxu0
        %v1492 = vadd.f32 %v1479, %v1491
        %v1493 = vpop.f32.mrf.mxu0
        %1494 = vdwg.mxu0
        %v1495 = vadd.f32 %v1157, %v1492
        %1496 = vst [vmem:[%s540] sm:$0xff] %v1495
        %p1497 = scmp.lt.s32.totalorder %s30, 1
        %s1498 = scalar_select %p1497, %s30, 1
        %s1499 = smul.addr %s1498, 8
        %s1500 = scalar_lea.vmem %s12, %s1499
        // Predicated region
        $region101: #{transformer_forward.2} parent=67 // pred_check
          %p1501 = pneg %p305
        $region102: #{transformer_forward.2} parent=67 // pred_check_branch
          %1503 = sbr.rel (%p1501) target = $region104
        $region103: #{transformer_forward.2} parent=67 // pred_region
          _
        $region104: #{transformer_forward.2} parent=67 // pred_fallthru
          _
      $region68: #{transformer_forward.2} parent=5 // pred_fallthru
        _
      %p1504 = scmp.le.s32.totalorder 2, %s25
      // Predicated region
      $region105: #{transformer_forward.2} parent=5 // pred_check
        %p1505 = pneg %p1504
      $region106: #{transformer_forward.2} parent=5 // pred_check_branch
        %1507 = sbr.rel (%p1505) target = $region108
      $region107: #{transformer_forward.2} parent=5 // pred_region
        %s1508 = ssub.s32 %s25, 2
        // Predicated region
        $region109: #{transformer_forward.2} parent=107 // pred_check
          %p1509 = pneg %p311
        $region110: #{transformer_forward.2} parent=107 // pred_check_branch
          %1511 = sbr.rel (%p1509) target = $region112
        $region111: #{transformer_forward.2} parent=107 // pred_region
          %p1512 = scmp.lt.s32.totalorder %s31, 1
          %s1513 = scalar_select %p1512, %s31, 1
          %s1514 = smul.addr %s1513, 8
          %s1515 = scalar_lea.vmem %s12, %s1514
        $region112: #{transformer_forward.2} parent=107 // pred_fallthru
          _
      $region108: #{transformer_forward.2} parent=5 // pred_fallthru
        _
    $region6: #{transformer_forward.2} parent=1 // loop_footer
      %s29 = sadd.s32 1, %s25
    $region7: #{transformer_forward.2} parent=1 // loop_footer_branch
      %24 = sbr.rel target = $region3
    $region8: #{transformer_forward.2} parent=1 // loop_exit
      _
    %1516 = vsyncpa [#allocation7], 1
    %s1517 = scalar_lea.sflag [#allocation7], 1
    %1518 = vsyncpa %s1517, 1
    %1519 = vsyncpa [#allocation9], 1
    %1520 = vsyncpa [#allocation12], 1
    %1521 = vsyncpa [#allocation15], 1
    %1522 = vsyncpa [#allocation18], 1

</llo_original>
